<compile_context>
chip_gen: v7x
topology: tpu7x:2x2x1
jax: 0.10.0
libtpu: 0.0.40
codegen_flags: <defaults>
</compile_context>

<pallas_src>
import math

import jax
import jax.numpy as jnp
from jax.experimental import pallas as pl
from jax.experimental.pallas import tpu as pltpu


# ---------------------------------------------------------------------------
# Layer-structure construction (mirrors AutoEncoder.__init__ / forward order)
# ---------------------------------------------------------------------------
def build_layer_specs(inchannels, ae_hidden, ae_latent):
    """Returns list of (out_ch, in_ch, use_tanh) in application order."""
    assert ae_latent > 0
    # TODO(synk): latent_chan == 0 path (learned `center` parameter) is not a
    # conv chain; only the latent_chan > 0 auto-encoder path is implemented.
    specs = []
    ch = inchannels
    enc_in = []
    for h in ae_hidden:                       # encode convs (+Tanh)
        specs.append((h, ch, True))
        enc_in.append(ch)
        ch = h
    specs.append((ae_latent, ch, True))       # latent conv (+Tanh)
    specs.append((ch, ae_latent, len(ae_hidden) > 0))  # latent deconv
    # decode convs, applied in reversed construction order; dcv at i=0 has no Tanh
    for i in reversed(range(len(ae_hidden))):
        specs.append((enc_in[i], ae_hidden[i], i != 0))
    assert specs[-1][0] == inchannels         # reconstruction matches input ch
    return specs


# ---------------------------------------------------------------------------
# Pallas kernel
# ---------------------------------------------------------------------------
def make_cssr_kernel(layer_specs, layer_offsets, num_class, inchannels,
                     use_l1, reduction, clip_len):
    def kernel(x_ref, w_ref, o_ref):
        # x_ref: (1, C, TR, 128)  VMEM   f32
        # w_ref: (n_weights,)     SMEM   f32  (all layers, all classes, flat)
        # o_ref: (1, num_class, TR, 128) VMEM f32
        x_rows = [x_ref[0, i] for i in range(inchannels)]      # each (TR, 128)

        for c in range(num_class):                             # classes folded in
            h = x_rows
            for (out_c, in_c, act), base in zip(layer_specs, layer_offsets):
                cbase = base + c * out_c * in_c
                new_h = []
                for o in range(out_c):                         # VPU channel mix
                    rbase = cbase + o * in_c
                    acc = w_ref[rbase] * h[0]
                    for i in range(1, in_c):
                        acc = acc + w_ref[rbase + i] * h[i]
                    new_h.append(jnp.tanh(acc) if act else acc)
                h = new_h

            # channel-norm reconstruction error -> (TR, 128) lane-dense slab
            if use_l1:
                err = jnp.abs(h[0] - x_rows[0])
                for i in range(1, inchannels):
                    err = err + jnp.abs(h[i] - x_rows[i])
            else:
                d = h[0] - x_rows[0]
                err = d * d
                for i in range(1, inchannels):
                    d = h[i] - x_rows[i]
                    err = err + d * d
            err = err * reduction
            if clip_len > 0:
                err = jnp.clip(err, -float(clip_len), float(clip_len))
            o_ref[0, c] = err

    return kernel


# ---------------------------------------------------------------------------
# Wrapper
# ---------------------------------------------------------------------------
def cssr_classifier_forward(x_nchw, weights, layer_specs, use_l1, reduction,
                            clip_len, max_tile_rows=16):
    assert max_tile_rows % 8 == 0
    B, C, H, W = x_nchw.shape
    HW = H * W
    num_class = weights[0].shape[0]

    # Pixel tiling: rows of 128 lanes, up to max_tile_rows sublane-rows/tile.
    R = -(-HW // 128)
    if R <= max_tile_rows:
        TR, R_pad = R, R                     # single full block (no 8-div req.)
    else:
        TR = max_tile_rows                   # multiple of 8
        R_pad = -(-R // TR) * TR
    padded_HW = R_pad * 128

    # NCHW -> (B, C, HW) -> padded -> (B, C, R_pad, 128).  No transposes.
    x3 = x_nchw.reshape(B, C, HW).astype(jnp.float32)
    if padded_HW != HW:
        x3 = jnp.pad(x3, ((0, 0), (0, 0), (0, padded_HW - HW)))
    x4 = x3.reshape(B, C, R_pad, 128)

    # Flatten all per-layer (num_class, out, in) weight stacks into one small
    # SMEM-resident scalar table.
    w_flat = jnp.concatenate([w.reshape(-1).astype(jnp.float32) for w in weights])
    layer_offsets = []
    off = 0
    for w in weights:
        layer_offsets.append(off)
        off += int(w.size)

    kernel = make_cssr_kernel(layer_specs, tuple(layer_offsets), num_class, C,
                              use_l1, float(reduction), clip_len)

    x_spec = pl.BlockSpec((1, C, TR, 128), lambda b, p: (b, 0, p, 0))
    w_spec = pl.BlockSpec(memory_space=pltpu.MemorySpace.SMEM)
    out_spec = pl.BlockSpec((1, num_class, TR, 128), lambda b, p: (b, 0, p, 0))

    out4 = pl.pallas_call(
        kernel,
        out_shape=jax.ShapeDtypeStruct((B, num_class, R_pad, 128), jnp.float32),
        grid_spec=pltpu.PrefetchScalarGridSpec(
            num_scalar_prefetch=0,
            grid=(B, R_pad // TR),
            in_specs=[x_spec, w_spec],
            out_specs=out_spec,
        ),
        compiler_params=pltpu.CompilerParams(
            dimension_semantics=("parallel", "parallel")),
    )(x4, w_flat)

    out = out4.reshape(B, num_class, padded_HW)
    if padded_HW != HW:
        out = out[:, :, :HW]
    return out.reshape(B, num_class, H, W)


# ---------------------------------------------------------------------------
# Pure-JAX reference (semantics of the PyTorch module)
# ---------------------------------------------------------------------------
def cssr_reference(x_nchw, weights, layer_specs, use_l1, reduction, clip_len):
    num_class = weights[0].shape[0]
    outs = []
    for c in range(num_class):
        h = x_nchw
        for (out_c, in_c, act), w_l in zip(layer_specs, weights):
            w = w_l[c]                        # (out, in)  == Conv2d(1x1) weight
            h = jnp.einsum('oi,bihw->bohw', w, h)
            if act:
                h = jnp.tanh(h)
        d = h - x_nchw
        if use_l1:
            err = jnp.sum(jnp.abs(d), axis=1, keepdims=True)
        else:
            err = jnp.sum(d * d, axis=1, keepdims=True)
        err = err * reduction
        if clip_len > 0:
            err = jnp.clip(err, -float(clip_len), float(clip_len))
        outs.append(err)
    return jnp.concatenate(outs, axis=1)


# ---------------------------------------------------------------------------
# Main
# ---------------------------------------------------------------------------
if __name__ == "__main__":
    # Config mirroring CSSRClassifier.__init__
    inchannels = 4
    num_class = 4
    config = {
        'ae_hidden': [8],
        'ae_latent': 4,
        'error_measure': 'L2',   # -> useL1 = False
        'model': 'pcssr',        # -> reduction = -1
        'gamma': 1.0,
    }
    use_l1 = config['error_measure'] == 'L1'
    reduction = (-1.0 if config['model'] == 'pcssr' else 1.0) * config['gamma']
    clip_len = 100  # CSSRClassifier.clip_len

    layer_specs = build_layer_specs(inchannels, config['ae_hidden'],
                                    config['ae_latent'])

    # Deterministic parameter init (Conv2d-style uniform, bound = 1/sqrt(fan_in)),
    # stacked across classes: one (num_class, out, in) array per layer.
    key = jax.random.PRNGKey(0)
    weights = []
    for (out_c, in_c, _) in layer_specs:
        key, sub = jax.random.split(key)
        bound = 1.0 / (in_c ** 0.5)
        w = jax.random.uniform(sub, (num_class, out_c, in_c),
                               minval=-bound, maxval=bound,
                               dtype=jnp.float32)
        weights.append(w)

    # Input: batch=2, channels=4, spatial=16x16 (NCHW like the PyTorch module).
    key, sub = jax.random.split(key)
    x = jax.random.normal(sub, (2, inchannels, 16, 16), dtype=jnp.float32)

    logits = cssr_classifier_forward(x, weights, layer_specs, use_l1,
                                     reduction, clip_len)
    logits = jax.block_until_ready(logits)

    ref = cssr_reference(x, weights, layer_specs, use_l1, reduction, clip_len)
    ref = jax.block_until_ready(ref)

    assert logits.shape == (2, num_class, 16, 16), logits.shape
    assert jnp.allclose(logits, ref, rtol=1e-4, atol=1e-4), \
        float(jnp.max(jnp.abs(logits - ref)))

    print("KERNEL_OK")
</pallas_src>

<mosaic_0001>
module attributes {stable_mosaic.version = 11 : i64} {
  func.func @kernel(%arg0: i32, %arg1: i32, %arg2: memref<1x4x2x128xf32, #tpu.memory_space<vmem>>, %arg3: memref<512xf32, #tpu.memory_space<smem>>, %arg4: memref<1x4x2x128xf32, #tpu.memory_space<vmem>>) attributes {dimension_semantics = [#tpu.dimension_semantics<parallel>, #tpu.dimension_semantics<parallel>], iteration_bounds = array<i64: 2, 1>, scalar_prefetch = 0 : i64, scratch_operands = 0 : i64, tpu.core_type = #tpu.core_type<tc>, window_params = [{transform_indices = @transform_0, window_bounds = array<i64: 1, 4, 2, 128>}, {transform_indices = @transform_1, window_bounds = array<i64: 512>}, {transform_indices = @transform_2, window_bounds = array<i64: 1, 4, 2, 128>}]} {
    %c0 = arith.constant 0 : index
    %c0_0 = arith.constant 0 : index
    %c0_1 = arith.constant 0 : index
    %c0_2 = arith.constant 0 : index
    %0 = vector.load %arg2[%c0, %c0_0, %c0_1, %c0_2] : memref<1x4x2x128xf32, #tpu.memory_space<vmem>>, vector<1x1x2x128xf32>
    %1 = vector.shape_cast %0 : vector<1x1x2x128xf32> to vector<2x128xf32>
    %c0_3 = arith.constant 0 : index
    %c1 = arith.constant 1 : index
    %c0_4 = arith.constant 0 : index
    %c0_5 = arith.constant 0 : index
    %2 = vector.load %arg2[%c0_3, %c1, %c0_4, %c0_5] : memref<1x4x2x128xf32, #tpu.memory_space<vmem>>, vector<1x1x2x128xf32>
    %3 = vector.shape_cast %2 : vector<1x1x2x128xf32> to vector<2x128xf32>
    %c0_6 = arith.constant 0 : index
    %c2 = arith.constant 2 : index
    %c0_7 = arith.constant 0 : index
    %c0_8 = arith.constant 0 : index
    %4 = vector.load %arg2[%c0_6, %c2, %c0_7, %c0_8] : memref<1x4x2x128xf32, #tpu.memory_space<vmem>>, vector<1x1x2x128xf32>
    %5 = vector.shape_cast %4 : vector<1x1x2x128xf32> to vector<2x128xf32>
    %c0_9 = arith.constant 0 : index
    %c3 = arith.constant 3 : index
    %c0_10 = arith.constant 0 : index
    %c0_11 = arith.constant 0 : index
    %6 = vector.load %arg2[%c0_9, %c3, %c0_10, %c0_11] : memref<1x4x2x128xf32, #tpu.memory_space<vmem>>, vector<1x1x2x128xf32>
    %7 = vector.shape_cast %6 : vector<1x1x2x128xf32> to vector<2x128xf32>
    %c0_12 = arith.constant 0 : index
    %8 = memref.load %arg3[%c0_12] : memref<512xf32, #tpu.memory_space<smem>>
    %9 = vector.broadcast %8 : f32 to vector<2x128xf32>
    %10 = arith.mulf %9, %1 : vector<2x128xf32>
    %c1_13 = arith.constant 1 : index
    %11 = memref.load %arg3[%c1_13] : memref<512xf32, #tpu.memory_space<smem>>
    %12 = vector.broadcast %11 : f32 to vector<2x128xf32>
    %13 = arith.mulf %12, %3 : vector<2x128xf32>
    %14 = arith.addf %10, %13 : vector<2x128xf32>
    %c2_14 = arith.constant 2 : index
    %15 = memref.load %arg3[%c2_14] : memref<512xf32, #tpu.memory_space<smem>>
    %16 = vector.broadcast %15 : f32 to vector<2x128xf32>
    %17 = arith.mulf %16, %5 : vector<2x128xf32>
    %18 = arith.addf %14, %17 : vector<2x128xf32>
    %c3_15 = arith.constant 3 : index
    %19 = memref.load %arg3[%c3_15] : memref<512xf32, #tpu.memory_space<smem>>
    %20 = vector.broadcast %19 : f32 to vector<2x128xf32>
    %21 = arith.mulf %20, %7 : vector<2x128xf32>
    %22 = arith.addf %18, %21 : vector<2x128xf32>
    %23 = math.tanh %22 : vector<2x128xf32>
    %c4 = arith.constant 4 : index
    %24 = memref.load %arg3[%c4] : memref<512xf32, #tpu.memory_space<smem>>
    %25 = vector.broadcast %24 : f32 to vector<2x128xf32>
    %26 = arith.mulf %25, %1 : vector<2x128xf32>
    %c5 = arith.constant 5 : index
    %27 = memref.load %arg3[%c5] : memref<512xf32, #tpu.memory_space<smem>>
    %28 = vector.broadcast %27 : f32 to vector<2x128xf32>
    %29 = arith.mulf %28, %3 : vector<2x128xf32>
    %30 = arith.addf %26, %29 : vector<2x128xf32>
    %c6 = arith.constant 6 : index
    %31 = memref.load %arg3[%c6] : memref<512xf32, #tpu.memory_space<smem>>
    %32 = vector.broadcast %31 : f32 to vector<2x128xf32>
    %33 = arith.mulf %32, %5 : vector<2x128xf32>
    %34 = arith.addf %30, %33 : vector<2x128xf32>
    %c7 = arith.constant 7 : index
    %35 = memref.load %arg3[%c7] : memref<512xf32, #tpu.memory_space<smem>>
    %36 = vector.broadcast %35 : f32 to vector<2x128xf32>
    %37 = arith.mulf %36, %7 : vector<2x128xf32>
    %38 = arith.addf %34, %37 : vector<2x128xf32>
    %39 = math.tanh %38 : vector<2x128xf32>
    %c8 = arith.constant 8 : index
    %40 = memref.load %arg3[%c8] : memref<512xf32, #tpu.memory_space<smem>>
    %41 = vector.broadcast %40 : f32 to vector<2x128xf32>
    %42 = arith.mulf %41, %1 : vector<2x128xf32>
    %c9 = arith.constant 9 : index
    %43 = memref.load %arg3[%c9] : memref<512xf32, #tpu.memory_space<smem>>
    %44 = vector.broadcast %43 : f32 to vector<2x128xf32>
    %45 = arith.mulf %44, %3 : vector<2x128xf32>
    %46 = arith.addf %42, %45 : vector<2x128xf32>
    %c10 = arith.constant 10 : index
    %47 = memref.load %arg3[%c10] : memref<512xf32, #tpu.memory_space<smem>>
    %48 = vector.broadcast %47 : f32 to vector<2x128xf32>
    %49 = arith.mulf %48, %5 : vector<2x128xf32>
    %50 = arith.addf %46, %49 : vector<2x128xf32>
    %c11 = arith.constant 11 : index
    %51 = memref.load %arg3[%c11] : memref<512xf32, #tpu.memory_space<smem>>
    %52 = vector.broadcast %51 : f32 to vector<2x128xf32>
    %53 = arith.mulf %52, %7 : vector<2x128xf32>
    %54 = arith.addf %50, %53 : vector<2x128xf32>
    %55 = math.tanh %54 : vector<2x128xf32>
    %c12 = arith.constant 12 : index
    %56 = memref.load %arg3[%c12] : memref<512xf32, #tpu.memory_space<smem>>
    %57 = vector.broadcast %56 : f32 to vector<2x128xf32>
    %58 = arith.mulf %57, %1 : vector<2x128xf32>
    %c13 = arith.constant 13 : index
    %59 = memref.load %arg3[%c13] : memref<512xf32, #tpu.memory_space<smem>>
    %60 = vector.broadcast %59 : f32 to vector<2x128xf32>
    %61 = arith.mulf %60, %3 : vector<2x128xf32>
    %62 = arith.addf %58, %61 : vector<2x128xf32>
    %c14 = arith.constant 14 : index
    %63 = memref.load %arg3[%c14] : memref<512xf32, #tpu.memory_space<smem>>
    %64 = vector.broadcast %63 : f32 to vector<2x128xf32>
    %65 = arith.mulf %64, %5 : vector<2x128xf32>
    %66 = arith.addf %62, %65 : vector<2x128xf32>
    %c15 = arith.constant 15 : index
    %67 = memref.load %arg3[%c15] : memref<512xf32, #tpu.memory_space<smem>>
    %68 = vector.broadcast %67 : f32 to vector<2x128xf32>
    %69 = arith.mulf %68, %7 : vector<2x128xf32>
    %70 = arith.addf %66, %69 : vector<2x128xf32>
    %71 = math.tanh %70 : vector<2x128xf32>
    %c16 = arith.constant 16 : index
    %72 = memref.load %arg3[%c16] : memref<512xf32, #tpu.memory_space<smem>>
    %73 = vector.broadcast %72 : f32 to vector<2x128xf32>
    %74 = arith.mulf %73, %1 : vector<2x128xf32>
    %c17 = arith.constant 17 : index
    %75 = memref.load %arg3[%c17] : memref<512xf32, #tpu.memory_space<smem>>
    %76 = vector.broadcast %75 : f32 to vector<2x128xf32>
    %77 = arith.mulf %76, %3 : vector<2x128xf32>
    %78 = arith.addf %74, %77 : vector<2x128xf32>
    %c18 = arith.constant 18 : index
    %79 = memref.load %arg3[%c18] : memref<512xf32, #tpu.memory_space<smem>>
    %80 = vector.broadcast %79 : f32 to vector<2x128xf32>
    %81 = arith.mulf %80, %5 : vector<2x128xf32>
    %82 = arith.addf %78, %81 : vector<2x128xf32>
    %c19 = arith.constant 19 : index
    %83 = memref.load %arg3[%c19] : memref<512xf32, #tpu.memory_space<smem>>
    %84 = vector.broadcast %83 : f32 to vector<2x128xf32>
    %85 = arith.mulf %84, %7 : vector<2x128xf32>
    %86 = arith.addf %82, %85 : vector<2x128xf32>
    %87 = math.tanh %86 : vector<2x128xf32>
    %c20 = arith.constant 20 : index
    %88 = memref.load %arg3[%c20] : memref<512xf32, #tpu.memory_space<smem>>
    %89 = vector.broadcast %88 : f32 to vector<2x128xf32>
    %90 = arith.mulf %89, %1 : vector<2x128xf32>
    %c21 = arith.constant 21 : index
    %91 = memref.load %arg3[%c21] : memref<512xf32, #tpu.memory_space<smem>>
    %92 = vector.broadcast %91 : f32 to vector<2x128xf32>
    %93 = arith.mulf %92, %3 : vector<2x128xf32>
    %94 = arith.addf %90, %93 : vector<2x128xf32>
    %c22 = arith.constant 22 : index
    %95 = memref.load %arg3[%c22] : memref<512xf32, #tpu.memory_space<smem>>
    %96 = vector.broadcast %95 : f32 to vector<2x128xf32>
    %97 = arith.mulf %96, %5 : vector<2x128xf32>
    %98 = arith.addf %94, %97 : vector<2x128xf32>
    %c23 = arith.constant 23 : index
    %99 = memref.load %arg3[%c23] : memref<512xf32, #tpu.memory_space<smem>>
    %100 = vector.broadcast %99 : f32 to vector<2x128xf32>
    %101 = arith.mulf %100, %7 : vector<2x128xf32>
    %102 = arith.addf %98, %101 : vector<2x128xf32>
    %103 = math.tanh %102 : vector<2x128xf32>
    %c24 = arith.constant 24 : index
    %104 = memref.load %arg3[%c24] : memref<512xf32, #tpu.memory_space<smem>>
    %105 = vector.broadcast %104 : f32 to vector<2x128xf32>
    %106 = arith.mulf %105, %1 : vector<2x128xf32>
    %c25 = arith.constant 25 : index
    %107 = memref.load %arg3[%c25] : memref<512xf32, #tpu.memory_space<smem>>
    %108 = vector.broadcast %107 : f32 to vector<2x128xf32>
    %109 = arith.mulf %108, %3 : vector<2x128xf32>
    %110 = arith.addf %106, %109 : vector<2x128xf32>
    %c26 = arith.constant 26 : index
    %111 = memref.load %arg3[%c26] : memref<512xf32, #tpu.memory_space<smem>>
    %112 = vector.broadcast %111 : f32 to vector<2x128xf32>
    %113 = arith.mulf %112, %5 : vector<2x128xf32>
    %114 = arith.addf %110, %113 : vector<2x128xf32>
    %c27 = arith.constant 27 : index
    %115 = memref.load %arg3[%c27] : memref<512xf32, #tpu.memory_space<smem>>
    %116 = vector.broadcast %115 : f32 to vector<2x128xf32>
    %117 = arith.mulf %116, %7 : vector<2x128xf32>
    %118 = arith.addf %114, %117 : vector<2x128xf32>
    %119 = math.tanh %118 : vector<2x128xf32>
    %c28 = arith.constant 28 : index
    %120 = memref.load %arg3[%c28] : memref<512xf32, #tpu.memory_space<smem>>
    %121 = vector.broadcast %120 : f32 to vector<2x128xf32>
    %122 = arith.mulf %121, %1 : vector<2x128xf32>
    %c29 = arith.constant 29 : index
    %123 = memref.load %arg3[%c29] : memref<512xf32, #tpu.memory_space<smem>>
    %124 = vector.broadcast %123 : f32 to vector<2x128xf32>
    %125 = arith.mulf %124, %3 : vector<2x128xf32>
    %126 = arith.addf %122, %125 : vector<2x128xf32>
    %c30 = arith.constant 30 : index
    %127 = memref.load %arg3[%c30] : memref<512xf32, #tpu.memory_space<smem>>
    %128 = vector.broadcast %127 : f32 to vector<2x128xf32>
    %129 = arith.mulf %128, %5 : vector<2x128xf32>
    %130 = arith.addf %126, %129 : vector<2x128xf32>
    %c31 = arith.constant 31 : index
    %131 = memref.load %arg3[%c31] : memref<512xf32, #tpu.memory_space<smem>>
    %132 = vector.broadcast %131 : f32 to vector<2x128xf32>
    %133 = arith.mulf %132, %7 : vector<2x128xf32>
    %134 = arith.addf %130, %133 : vector<2x128xf32>
    %135 = math.tanh %134 : vector<2x128xf32>
    %c128 = arith.constant 128 : index
    %136 = memref.load %arg3[%c128] : memref<512xf32, #tpu.memory_space<smem>>
    %137 = vector.broadcast %136 : f32 to vector<2x128xf32>
    %138 = arith.mulf %137, %23 : vector<2x128xf32>
    %c129 = arith.constant 129 : index
    %139 = memref.load %arg3[%c129] : memref<512xf32, #tpu.memory_space<smem>>
    %140 = vector.broadcast %139 : f32 to vector<2x128xf32>
    %141 = arith.mulf %140, %39 : vector<2x128xf32>
    %142 = arith.addf %138, %141 : vector<2x128xf32>
    %c130 = arith.constant 130 : index
    %143 = memref.load %arg3[%c130] : memref<512xf32, #tpu.memory_space<smem>>
    %144 = vector.broadcast %143 : f32 to vector<2x128xf32>
    %145 = arith.mulf %144, %55 : vector<2x128xf32>
    %146 = arith.addf %142, %145 : vector<2x128xf32>
    %c131 = arith.constant 131 : index
    %147 = memref.load %arg3[%c131] : memref<512xf32, #tpu.memory_space<smem>>
    %148 = vector.broadcast %147 : f32 to vector<2x128xf32>
    %149 = arith.mulf %148, %71 : vector<2x128xf32>
    %150 = arith.addf %146, %149 : vector<2x128xf32>
    %c132 = arith.constant 132 : index
    %151 = memref.load %arg3[%c132] : memref<512xf32, #tpu.memory_space<smem>>
    %152 = vector.broadcast %151 : f32 to vector<2x128xf32>
    %153 = arith.mulf %152, %87 : vector<2x128xf32>
    %154 = arith.addf %150, %153 : vector<2x128xf32>
    %c133 = arith.constant 133 : index
    %155 = memref.load %arg3[%c133] : memref<512xf32, #tpu.memory_space<smem>>
    %156 = vector.broadcast %155 : f32 to vector<2x128xf32>
    %157 = arith.mulf %156, %103 : vector<2x128xf32>
    %158 = arith.addf %154, %157 : vector<2x128xf32>
    %c134 = arith.constant 134 : index
    %159 = memref.load %arg3[%c134] : memref<512xf32, #tpu.memory_space<smem>>
    %160 = vector.broadcast %159 : f32 to vector<2x128xf32>
    %161 = arith.mulf %160, %119 : vector<2x128xf32>
    %162 = arith.addf %158, %161 : vector<2x128xf32>
    %c135 = arith.constant 135 : index
    %163 = memref.load %arg3[%c135] : memref<512xf32, #tpu.memory_space<smem>>
    %164 = vector.broadcast %163 : f32 to vector<2x128xf32>
    %165 = arith.mulf %164, %135 : vector<2x128xf32>
    %166 = arith.addf %162, %165 : vector<2x128xf32>
    %167 = math.tanh %166 : vector<2x128xf32>
    %c136 = arith.constant 136 : index
    %168 = memref.load %arg3[%c136] : memref<512xf32, #tpu.memory_space<smem>>
    %169 = vector.broadcast %168 : f32 to vector<2x128xf32>
    %170 = arith.mulf %169, %23 : vector<2x128xf32>
    %c137 = arith.constant 137 : index
    %171 = memref.load %arg3[%c137] : memref<512xf32, #tpu.memory_space<smem>>
    %172 = vector.broadcast %171 : f32 to vector<2x128xf32>
    %173 = arith.mulf %172, %39 : vector<2x128xf32>
    %174 = arith.addf %170, %173 : vector<2x128xf32>
    %c138 = arith.constant 138 : index
    %175 = memref.load %arg3[%c138] : memref<512xf32, #tpu.memory_space<smem>>
    %176 = vector.broadcast %175 : f32 to vector<2x128xf32>
    %177 = arith.mulf %176, %55 : vector<2x128xf32>
    %178 = arith.addf %174, %177 : vector<2x128xf32>
    %c139 = arith.constant 139 : index
    %179 = memref.load %arg3[%c139] : memref<512xf32, #tpu.memory_space<smem>>
    %180 = vector.broadcast %179 : f32 to vector<2x128xf32>
    %181 = arith.mulf %180, %71 : vector<2x128xf32>
    %182 = arith.addf %178, %181 : vector<2x128xf32>
    %c140 = arith.constant 140 : index
    %183 = memref.load %arg3[%c140] : memref<512xf32, #tpu.memory_space<smem>>
    %184 = vector.broadcast %183 : f32 to vector<2x128xf32>
    %185 = arith.mulf %184, %87 : vector<2x128xf32>
    %186 = arith.addf %182, %185 : vector<2x128xf32>
    %c141 = arith.constant 141 : index
    %187 = memref.load %arg3[%c141] : memref<512xf32, #tpu.memory_space<smem>>
    %188 = vector.broadcast %187 : f32 to vector<2x128xf32>
    %189 = arith.mulf %188, %103 : vector<2x128xf32>
    %190 = arith.addf %186, %189 : vector<2x128xf32>
    %c142 = arith.constant 142 : index
    %191 = memref.load %arg3[%c142] : memref<512xf32, #tpu.memory_space<smem>>
    %192 = vector.broadcast %191 : f32 to vector<2x128xf32>
    %193 = arith.mulf %192, %119 : vector<2x128xf32>
    %194 = arith.addf %190, %193 : vector<2x128xf32>
    %c143 = arith.constant 143 : index
    %195 = memref.load %arg3[%c143] : memref<512xf32, #tpu.memory_space<smem>>
    %196 = vector.broadcast %195 : f32 to vector<2x128xf32>
    %197 = arith.mulf %196, %135 : vector<2x128xf32>
    %198 = arith.addf %194, %197 : vector<2x128xf32>
    %199 = math.tanh %198 : vector<2x128xf32>
    %c144 = arith.constant 144 : index
    %200 = memref.load %arg3[%c144] : memref<512xf32, #tpu.memory_space<smem>>
    %201 = vector.broadcast %200 : f32 to vector<2x128xf32>
    %202 = arith.mulf %201, %23 : vector<2x128xf32>
    %c145 = arith.constant 145 : index
    %203 = memref.load %arg3[%c145] : memref<512xf32, #tpu.memory_space<smem>>
    %204 = vector.broadcast %203 : f32 to vector<2x128xf32>
    %205 = arith.mulf %204, %39 : vector<2x128xf32>
    %206 = arith.addf %202, %205 : vector<2x128xf32>
    %c146 = arith.constant 146 : index
    %207 = memref.load %arg3[%c146] : memref<512xf32, #tpu.memory_space<smem>>
    %208 = vector.broadcast %207 : f32 to vector<2x128xf32>
    %209 = arith.mulf %208, %55 : vector<2x128xf32>
    %210 = arith.addf %206, %209 : vector<2x128xf32>
    %c147 = arith.constant 147 : index
    %211 = memref.load %arg3[%c147] : memref<512xf32, #tpu.memory_space<smem>>
    %212 = vector.broadcast %211 : f32 to vector<2x128xf32>
    %213 = arith.mulf %212, %71 : vector<2x128xf32>
    %214 = arith.addf %210, %213 : vector<2x128xf32>
    %c148 = arith.constant 148 : index
    %215 = memref.load %arg3[%c148] : memref<512xf32, #tpu.memory_space<smem>>
    %216 = vector.broadcast %215 : f32 to vector<2x128xf32>
    %217 = arith.mulf %216, %87 : vector<2x128xf32>
    %218 = arith.addf %214, %217 : vector<2x128xf32>
    %c149 = arith.constant 149 : index
    %219 = memref.load %arg3[%c149] : memref<512xf32, #tpu.memory_space<smem>>
    %220 = vector.broadcast %219 : f32 to vector<2x128xf32>
    %221 = arith.mulf %220, %103 : vector<2x128xf32>
    %222 = arith.addf %218, %221 : vector<2x128xf32>
    %c150 = arith.constant 150 : index
    %223 = memref.load %arg3[%c150] : memref<512xf32, #tpu.memory_space<smem>>
    %224 = vector.broadcast %223 : f32 to vector<2x128xf32>
    %225 = arith.mulf %224, %119 : vector<2x128xf32>
    %226 = arith.addf %222, %225 : vector<2x128xf32>
    %c151 = arith.constant 151 : index
    %227 = memref.load %arg3[%c151] : memref<512xf32, #tpu.memory_space<smem>>
    %228 = vector.broadcast %227 : f32 to vector<2x128xf32>
    %229 = arith.mulf %228, %135 : vector<2x128xf32>
    %230 = arith.addf %226, %229 : vector<2x128xf32>
    %231 = math.tanh %230 : vector<2x128xf32>
    %c152 = arith.constant 152 : index
    %232 = memref.load %arg3[%c152] : memref<512xf32, #tpu.memory_space<smem>>
    %233 = vector.broadcast %232 : f32 to vector<2x128xf32>
    %234 = arith.mulf %233, %23 : vector<2x128xf32>
    %c153 = arith.constant 153 : index
    %235 = memref.load %arg3[%c153] : memref<512xf32, #tpu.memory_space<smem>>
    %236 = vector.broadcast %235 : f32 to vector<2x128xf32>
    %237 = arith.mulf %236, %39 : vector<2x128xf32>
    %238 = arith.addf %234, %237 : vector<2x128xf32>
    %c154 = arith.constant 154 : index
    %239 = memref.load %arg3[%c154] : memref<512xf32, #tpu.memory_space<smem>>
    %240 = vector.broadcast %239 : f32 to vector<2x128xf32>
    %241 = arith.mulf %240, %55 : vector<2x128xf32>
    %242 = arith.addf %238, %241 : vector<2x128xf32>
    %c155 = arith.constant 155 : index
    %243 = memref.load %arg3[%c155] : memref<512xf32, #tpu.memory_space<smem>>
    %244 = vector.broadcast %243 : f32 to vector<2x128xf32>
    %245 = arith.mulf %244, %71 : vector<2x128xf32>
    %246 = arith.addf %242, %245 : vector<2x128xf32>
    %c156 = arith.constant 156 : index
    %247 = memref.load %arg3[%c156] : memref<512xf32, #tpu.memory_space<smem>>
    %248 = vector.broadcast %247 : f32 to vector<2x128xf32>
    %249 = arith.mulf %248, %87 : vector<2x128xf32>
    %250 = arith.addf %246, %249 : vector<2x128xf32>
    %c157 = arith.constant 157 : index
    %251 = memref.load %arg3[%c157] : memref<512xf32, #tpu.memory_space<smem>>
    %252 = vector.broadcast %251 : f32 to vector<2x128xf32>
    %253 = arith.mulf %252, %103 : vector<2x128xf32>
    %254 = arith.addf %250, %253 : vector<2x128xf32>
    %c158 = arith.constant 158 : index
    %255 = memref.load %arg3[%c158] : memref<512xf32, #tpu.memory_space<smem>>
    %256 = vector.broadcast %255 : f32 to vector<2x128xf32>
    %257 = arith.mulf %256, %119 : vector<2x128xf32>
    %258 = arith.addf %254, %257 : vector<2x128xf32>
    %c159 = arith.constant 159 : index
    %259 = memref.load %arg3[%c159] : memref<512xf32, #tpu.memory_space<smem>>
    %260 = vector.broadcast %259 : f32 to vector<2x128xf32>
    %261 = arith.mulf %260, %135 : vector<2x128xf32>
    %262 = arith.addf %258, %261 : vector<2x128xf32>
    %263 = math.tanh %262 : vector<2x128xf32>
    %c256 = arith.constant 256 : index
    %264 = memref.load %arg3[%c256] : memref<512xf32, #tpu.memory_space<smem>>
    %265 = vector.broadcast %264 : f32 to vector<2x128xf32>
    %266 = arith.mulf %265, %167 : vector<2x128xf32>
    %c257 = arith.constant 257 : index
    %267 = memref.load %arg3[%c257] : memref<512xf32, #tpu.memory_space<smem>>
    %268 = vector.broadcast %267 : f32 to vector<2x128xf32>
    %269 = arith.mulf %268, %199 : vector<2x128xf32>
    %270 = arith.addf %266, %269 : vector<2x128xf32>
    %c258 = arith.constant 258 : index
    %271 = memref.load %arg3[%c258] : memref<512xf32, #tpu.memory_space<smem>>
    %272 = vector.broadcast %271 : f32 to vector<2x128xf32>
    %273 = arith.mulf %272, %231 : vector<2x128xf32>
    %274 = arith.addf %270, %273 : vector<2x128xf32>
    %c259 = arith.constant 259 : index
    %275 = memref.load %arg3[%c259] : memref<512xf32, #tpu.memory_space<smem>>
    %276 = vector.broadcast %275 : f32 to vector<2x128xf32>
    %277 = arith.mulf %276, %263 : vector<2x128xf32>
    %278 = arith.addf %274, %277 : vector<2x128xf32>
    %279 = math.tanh %278 : vector<2x128xf32>
    %c260 = arith.constant 260 : index
    %280 = memref.load %arg3[%c260] : memref<512xf32, #tpu.memory_space<smem>>
    %281 = vector.broadcast %280 : f32 to vector<2x128xf32>
    %282 = arith.mulf %281, %167 : vector<2x128xf32>
    %c261 = arith.constant 261 : index
    %283 = memref.load %arg3[%c261] : memref<512xf32, #tpu.memory_space<smem>>
    %284 = vector.broadcast %283 : f32 to vector<2x128xf32>
    %285 = arith.mulf %284, %199 : vector<2x128xf32>
    %286 = arith.addf %282, %285 : vector<2x128xf32>
    %c262 = arith.constant 262 : index
    %287 = memref.load %arg3[%c262] : memref<512xf32, #tpu.memory_space<smem>>
    %288 = vector.broadcast %287 : f32 to vector<2x128xf32>
    %289 = arith.mulf %288, %231 : vector<2x128xf32>
    %290 = arith.addf %286, %289 : vector<2x128xf32>
    %c263 = arith.constant 263 : index
    %291 = memref.load %arg3[%c263] : memref<512xf32, #tpu.memory_space<smem>>
    %292 = vector.broadcast %291 : f32 to vector<2x128xf32>
    %293 = arith.mulf %292, %263 : vector<2x128xf32>
    %294 = arith.addf %290, %293 : vector<2x128xf32>
    %295 = math.tanh %294 : vector<2x128xf32>
    %c264 = arith.constant 264 : index
    %296 = memref.load %arg3[%c264] : memref<512xf32, #tpu.memory_space<smem>>
    %297 = vector.broadcast %296 : f32 to vector<2x128xf32>
    %298 = arith.mulf %297, %167 : vector<2x128xf32>
    %c265 = arith.constant 265 : index
    %299 = memref.load %arg3[%c265] : memref<512xf32, #tpu.memory_space<smem>>
    %300 = vector.broadcast %299 : f32 to vector<2x128xf32>
    %301 = arith.mulf %300, %199 : vector<2x128xf32>
    %302 = arith.addf %298, %301 : vector<2x128xf32>
    %c266 = arith.constant 266 : index
    %303 = memref.load %arg3[%c266] : memref<512xf32, #tpu.memory_space<smem>>
    %304 = vector.broadcast %303 : f32 to vector<2x128xf32>
    %305 = arith.mulf %304, %231 : vector<2x128xf32>
    %306 = arith.addf %302, %305 : vector<2x128xf32>
    %c267 = arith.constant 267 : index
    %307 = memref.load %arg3[%c267] : memref<512xf32, #tpu.memory_space<smem>>
    %308 = vector.broadcast %307 : f32 to vector<2x128xf32>
    %309 = arith.mulf %308, %263 : vector<2x128xf32>
    %310 = arith.addf %306, %309 : vector<2x128xf32>
    %311 = math.tanh %310 : vector<2x128xf32>
    %c268 = arith.constant 268 : index
    %312 = memref.load %arg3[%c268] : memref<512xf32, #tpu.memory_space<smem>>
    %313 = vector.broadcast %312 : f32 to vector<2x128xf32>
    %314 = arith.mulf %313, %167 : vector<2x128xf32>
    %c269 = arith.constant 269 : index
    %315 = memref.load %arg3[%c269] : memref<512xf32, #tpu.memory_space<smem>>
    %316 = vector.broadcast %315 : f32 to vector<2x128xf32>
    %317 = arith.mulf %316, %199 : vector<2x128xf32>
    %318 = arith.addf %314, %317 : vector<2x128xf32>
    %c270 = arith.constant 270 : index
    %319 = memref.load %arg3[%c270] : memref<512xf32, #tpu.memory_space<smem>>
    %320 = vector.broadcast %319 : f32 to vector<2x128xf32>
    %321 = arith.mulf %320, %231 : vector<2x128xf32>
    %322 = arith.addf %318, %321 : vector<2x128xf32>
    %c271 = arith.constant 271 : index
    %323 = memref.load %arg3[%c271] : memref<512xf32, #tpu.memory_space<smem>>
    %324 = vector.broadcast %323 : f32 to vector<2x128xf32>
    %325 = arith.mulf %324, %263 : vector<2x128xf32>
    %326 = arith.addf %322, %325 : vector<2x128xf32>
    %327 = math.tanh %326 : vector<2x128xf32>
    %c272 = arith.constant 272 : index
    %328 = memref.load %arg3[%c272] : memref<512xf32, #tpu.memory_space<smem>>
    %329 = vector.broadcast %328 : f32 to vector<2x128xf32>
    %330 = arith.mulf %329, %167 : vector<2x128xf32>
    %c273 = arith.constant 273 : index
    %331 = memref.load %arg3[%c273] : memref<512xf32, #tpu.memory_space<smem>>
    %332 = vector.broadcast %331 : f32 to vector<2x128xf32>
    %333 = arith.mulf %332, %199 : vector<2x128xf32>
    %334 = arith.addf %330, %333 : vector<2x128xf32>
    %c274 = arith.constant 274 : index
    %335 = memref.load %arg3[%c274] : memref<512xf32, #tpu.memory_space<smem>>
    %336 = vector.broadcast %335 : f32 to vector<2x128xf32>
    %337 = arith.mulf %336, %231 : vector<2x128xf32>
    %338 = arith.addf %334, %337 : vector<2x128xf32>
    %c275 = arith.constant 275 : index
    %339 = memref.load %arg3[%c275] : memref<512xf32, #tpu.memory_space<smem>>
    %340 = vector.broadcast %339 : f32 to vector<2x128xf32>
    %341 = arith.mulf %340, %263 : vector<2x128xf32>
    %342 = arith.addf %338, %341 : vector<2x128xf32>
    %343 = math.tanh %342 : vector<2x128xf32>
    %c276 = arith.constant 276 : index
    %344 = memref.load %arg3[%c276] : memref<512xf32, #tpu.memory_space<smem>>
    %345 = vector.broadcast %344 : f32 to vector<2x128xf32>
    %346 = arith.mulf %345, %167 : vector<2x128xf32>
    %c277 = arith.constant 277 : index
    %347 = memref.load %arg3[%c277] : memref<512xf32, #tpu.memory_space<smem>>
    %348 = vector.broadcast %347 : f32 to vector<2x128xf32>
    %349 = arith.mulf %348, %199 : vector<2x128xf32>
    %350 = arith.addf %346, %349 : vector<2x128xf32>
    %c278 = arith.constant 278 : index
    %351 = memref.load %arg3[%c278] : memref<512xf32, #tpu.memory_space<smem>>
    %352 = vector.broadcast %351 : f32 to vector<2x128xf32>
    %353 = arith.mulf %352, %231 : vector<2x128xf32>
    %354 = arith.addf %350, %353 : vector<2x128xf32>
    %c279 = arith.constant 279 : index
    %355 = memref.load %arg3[%c279] : memref<512xf32, #tpu.memory_space<smem>>
    %356 = vector.broadcast %355 : f32 to vector<2x128xf32>
    %357 = arith.mulf %356, %263 : vector<2x128xf32>
    %358 = arith.addf %354, %357 : vector<2x128xf32>
    %359 = math.tanh %358 : vector<2x128xf32>
    %c280 = arith.constant 280 : index
    %360 = memref.load %arg3[%c280] : memref<512xf32, #tpu.memory_space<smem>>
    %361 = vector.broadcast %360 : f32 to vector<2x128xf32>
    %362 = arith.mulf %361, %167 : vector<2x128xf32>
    %c281 = arith.constant 281 : index
    %363 = memref.load %arg3[%c281] : memref<512xf32, #tpu.memory_space<smem>>
    %364 = vector.broadcast %363 : f32 to vector<2x128xf32>
    %365 = arith.mulf %364, %199 : vector<2x128xf32>
    %366 = arith.addf %362, %365 : vector<2x128xf32>
    %c282 = arith.constant 282 : index
    %367 = memref.load %arg3[%c282] : memref<512xf32, #tpu.memory_space<smem>>
    %368 = vector.broadcast %367 : f32 to vector<2x128xf32>
    %369 = arith.mulf %368, %231 : vector<2x128xf32>
    %370 = arith.addf %366, %369 : vector<2x128xf32>
    %c283 = arith.constant 283 : index
    %371 = memref.load %arg3[%c283] : memref<512xf32, #tpu.memory_space<smem>>
    %372 = vector.broadcast %371 : f32 to vector<2x128xf32>
    %373 = arith.mulf %372, %263 : vector<2x128xf32>
    %374 = arith.addf %370, %373 : vector<2x128xf32>
    %375 = math.tanh %374 : vector<2x128xf32>
    %c284 = arith.constant 284 : index
    %376 = memref.load %arg3[%c284] : memref<512xf32, #tpu.memory_space<smem>>
    %377 = vector.broadcast %376 : f32 to vector<2x128xf32>
    %378 = arith.mulf %377, %167 : vector<2x128xf32>
    %c285 = arith.constant 285 : index
    %379 = memref.load %arg3[%c285] : memref<512xf32, #tpu.memory_space<smem>>
    %380 = vector.broadcast %379 : f32 to vector<2x128xf32>
    %381 = arith.mulf %380, %199 : vector<2x128xf32>
    %382 = arith.addf %378, %381 : vector<2x128xf32>
    %c286 = arith.constant 286 : index
    %383 = memref.load %arg3[%c286] : memref<512xf32, #tpu.memory_space<smem>>
    %384 = vector.broadcast %383 : f32 to vector<2x128xf32>
    %385 = arith.mulf %384, %231 : vector<2x128xf32>
    %386 = arith.addf %382, %385 : vector<2x128xf32>
    %c287 = arith.constant 287 : index
    %387 = memref.load %arg3[%c287] : memref<512xf32, #tpu.memory_space<smem>>
    %388 = vector.broadcast %387 : f32 to vector<2x128xf32>
    %389 = arith.mulf %388, %263 : vector<2x128xf32>
    %390 = arith.addf %386, %389 : vector<2x128xf32>
    %391 = math.tanh %390 : vector<2x128xf32>
    %c384 = arith.constant 384 : index
    %392 = memref.load %arg3[%c384] : memref<512xf32, #tpu.memory_space<smem>>
    %393 = vector.broadcast %392 : f32 to vector<2x128xf32>
    %394 = arith.mulf %393, %279 : vector<2x128xf32>
    %c385 = arith.constant 385 : index
    %395 = memref.load %arg3[%c385] : memref<512xf32, #tpu.memory_space<smem>>
    %396 = vector.broadcast %395 : f32 to vector<2x128xf32>
    %397 = arith.mulf %396, %295 : vector<2x128xf32>
    %398 = arith.addf %394, %397 : vector<2x128xf32>
    %c386 = arith.constant 386 : index
    %399 = memref.load %arg3[%c386] : memref<512xf32, #tpu.memory_space<smem>>
    %400 = vector.broadcast %399 : f32 to vector<2x128xf32>
    %401 = arith.mulf %400, %311 : vector<2x128xf32>
    %402 = arith.addf %398, %401 : vector<2x128xf32>
    %c387 = arith.constant 387 : index
    %403 = memref.load %arg3[%c387] : memref<512xf32, #tpu.memory_space<smem>>
    %404 = vector.broadcast %403 : f32 to vector<2x128xf32>
    %405 = arith.mulf %404, %327 : vector<2x128xf32>
    %406 = arith.addf %402, %405 : vector<2x128xf32>
    %c388 = arith.constant 388 : index
    %407 = memref.load %arg3[%c388] : memref<512xf32, #tpu.memory_space<smem>>
    %408 = vector.broadcast %407 : f32 to vector<2x128xf32>
    %409 = arith.mulf %408, %343 : vector<2x128xf32>
    %410 = arith.addf %406, %409 : vector<2x128xf32>
    %c389 = arith.constant 389 : index
    %411 = memref.load %arg3[%c389] : memref<512xf32, #tpu.memory_space<smem>>
    %412 = vector.broadcast %411 : f32 to vector<2x128xf32>
    %413 = arith.mulf %412, %359 : vector<2x128xf32>
    %414 = arith.addf %410, %413 : vector<2x128xf32>
    %c390 = arith.constant 390 : index
    %415 = memref.load %arg3[%c390] : memref<512xf32, #tpu.memory_space<smem>>
    %416 = vector.broadcast %415 : f32 to vector<2x128xf32>
    %417 = arith.mulf %416, %375 : vector<2x128xf32>
    %418 = arith.addf %414, %417 : vector<2x128xf32>
    %c391 = arith.constant 391 : index
    %419 = memref.load %arg3[%c391] : memref<512xf32, #tpu.memory_space<smem>>
    %420 = vector.broadcast %419 : f32 to vector<2x128xf32>
    %421 = arith.mulf %420, %391 : vector<2x128xf32>
    %422 = arith.addf %418, %421 : vector<2x128xf32>
    %c392 = arith.constant 392 : index
    %423 = memref.load %arg3[%c392] : memref<512xf32, #tpu.memory_space<smem>>
    %424 = vector.broadcast %423 : f32 to vector<2x128xf32>
    %425 = arith.mulf %424, %279 : vector<2x128xf32>
    %c393 = arith.constant 393 : index
    %426 = memref.load %arg3[%c393] : memref<512xf32, #tpu.memory_space<smem>>
    %427 = vector.broadcast %426 : f32 to vector<2x128xf32>
    %428 = arith.mulf %427, %295 : vector<2x128xf32>
    %429 = arith.addf %425, %428 : vector<2x128xf32>
    %c394 = arith.constant 394 : index
    %430 = memref.load %arg3[%c394] : memref<512xf32, #tpu.memory_space<smem>>
    %431 = vector.broadcast %430 : f32 to vector<2x128xf32>
    %432 = arith.mulf %431, %311 : vector<2x128xf32>
    %433 = arith.addf %429, %432 : vector<2x128xf32>
    %c395 = arith.constant 395 : index
    %434 = memref.load %arg3[%c395] : memref<512xf32, #tpu.memory_space<smem>>
    %435 = vector.broadcast %434 : f32 to vector<2x128xf32>
    %436 = arith.mulf %435, %327 : vector<2x128xf32>
    %437 = arith.addf %433, %436 : vector<2x128xf32>
    %c396 = arith.constant 396 : index
    %438 = memref.load %arg3[%c396] : memref<512xf32, #tpu.memory_space<smem>>
    %439 = vector.broadcast %438 : f32 to vector<2x128xf32>
    %440 = arith.mulf %439, %343 : vector<2x128xf32>
    %441 = arith.addf %437, %440 : vector<2x128xf32>
    %c397 = arith.constant 397 : index
    %442 = memref.load %arg3[%c397] : memref<512xf32, #tpu.memory_space<smem>>
    %443 = vector.broadcast %442 : f32 to vector<2x128xf32>
    %444 = arith.mulf %443, %359 : vector<2x128xf32>
    %445 = arith.addf %441, %444 : vector<2x128xf32>
    %c398 = arith.constant 398 : index
    %446 = memref.load %arg3[%c398] : memref<512xf32, #tpu.memory_space<smem>>
    %447 = vector.broadcast %446 : f32 to vector<2x128xf32>
    %448 = arith.mulf %447, %375 : vector<2x128xf32>
    %449 = arith.addf %445, %448 : vector<2x128xf32>
    %c399 = arith.constant 399 : index
    %450 = memref.load %arg3[%c399] : memref<512xf32, #tpu.memory_space<smem>>
    %451 = vector.broadcast %450 : f32 to vector<2x128xf32>
    %452 = arith.mulf %451, %391 : vector<2x128xf32>
    %453 = arith.addf %449, %452 : vector<2x128xf32>
    %c400 = arith.constant 400 : index
    %454 = memref.load %arg3[%c400] : memref<512xf32, #tpu.memory_space<smem>>
    %455 = vector.broadcast %454 : f32 to vector<2x128xf32>
    %456 = arith.mulf %455, %279 : vector<2x128xf32>
    %c401 = arith.constant 401 : index
    %457 = memref.load %arg3[%c401] : memref<512xf32, #tpu.memory_space<smem>>
    %458 = vector.broadcast %457 : f32 to vector<2x128xf32>
    %459 = arith.mulf %458, %295 : vector<2x128xf32>
    %460 = arith.addf %456, %459 : vector<2x128xf32>
    %c402 = arith.constant 402 : index
    %461 = memref.load %arg3[%c402] : memref<512xf32, #tpu.memory_space<smem>>
    %462 = vector.broadcast %461 : f32 to vector<2x128xf32>
    %463 = arith.mulf %462, %311 : vector<2x128xf32>
    %464 = arith.addf %460, %463 : vector<2x128xf32>
    %c403 = arith.constant 403 : index
    %465 = memref.load %arg3[%c403] : memref<512xf32, #tpu.memory_space<smem>>
    %466 = vector.broadcast %465 : f32 to vector<2x128xf32>
    %467 = arith.mulf %466, %327 : vector<2x128xf32>
    %468 = arith.addf %464, %467 : vector<2x128xf32>
    %c404 = arith.constant 404 : index
    %469 = memref.load %arg3[%c404] : memref<512xf32, #tpu.memory_space<smem>>
    %470 = vector.broadcast %469 : f32 to vector<2x128xf32>
    %471 = arith.mulf %470, %343 : vector<2x128xf32>
    %472 = arith.addf %468, %471 : vector<2x128xf32>
    %c405 = arith.constant 405 : index
    %473 = memref.load %arg3[%c405] : memref<512xf32, #tpu.memory_space<smem>>
    %474 = vector.broadcast %473 : f32 to vector<2x128xf32>
    %475 = arith.mulf %474, %359 : vector<2x128xf32>
    %476 = arith.addf %472, %475 : vector<2x128xf32>
    %c406 = arith.constant 406 : index
    %477 = memref.load %arg3[%c406] : memref<512xf32, #tpu.memory_space<smem>>
    %478 = vector.broadcast %477 : f32 to vector<2x128xf32>
    %479 = arith.mulf %478, %375 : vector<2x128xf32>
    %480 = arith.addf %476, %479 : vector<2x128xf32>
    %c407 = arith.constant 407 : index
    %481 = memref.load %arg3[%c407] : memref<512xf32, #tpu.memory_space<smem>>
    %482 = vector.broadcast %481 : f32 to vector<2x128xf32>
    %483 = arith.mulf %482, %391 : vector<2x128xf32>
    %484 = arith.addf %480, %483 : vector<2x128xf32>
    %c408 = arith.constant 408 : index
    %485 = memref.load %arg3[%c408] : memref<512xf32, #tpu.memory_space<smem>>
    %486 = vector.broadcast %485 : f32 to vector<2x128xf32>
    %487 = arith.mulf %486, %279 : vector<2x128xf32>
    %c409 = arith.constant 409 : index
    %488 = memref.load %arg3[%c409] : memref<512xf32, #tpu.memory_space<smem>>
    %489 = vector.broadcast %488 : f32 to vector<2x128xf32>
    %490 = arith.mulf %489, %295 : vector<2x128xf32>
    %491 = arith.addf %487, %490 : vector<2x128xf32>
    %c410 = arith.constant 410 : index
    %492 = memref.load %arg3[%c410] : memref<512xf32, #tpu.memory_space<smem>>
    %493 = vector.broadcast %492 : f32 to vector<2x128xf32>
    %494 = arith.mulf %493, %311 : vector<2x128xf32>
    %495 = arith.addf %491, %494 : vector<2x128xf32>
    %c411 = arith.constant 411 : index
    %496 = memref.load %arg3[%c411] : memref<512xf32, #tpu.memory_space<smem>>
    %497 = vector.broadcast %496 : f32 to vector<2x128xf32>
    %498 = arith.mulf %497, %327 : vector<2x128xf32>
    %499 = arith.addf %495, %498 : vector<2x128xf32>
    %c412 = arith.constant 412 : index
    %500 = memref.load %arg3[%c412] : memref<512xf32, #tpu.memory_space<smem>>
    %501 = vector.broadcast %500 : f32 to vector<2x128xf32>
    %502 = arith.mulf %501, %343 : vector<2x128xf32>
    %503 = arith.addf %499, %502 : vector<2x128xf32>
    %c413 = arith.constant 413 : index
    %504 = memref.load %arg3[%c413] : memref<512xf32, #tpu.memory_space<smem>>
    %505 = vector.broadcast %504 : f32 to vector<2x128xf32>
    %506 = arith.mulf %505, %359 : vector<2x128xf32>
    %507 = arith.addf %503, %506 : vector<2x128xf32>
    %c414 = arith.constant 414 : index
    %508 = memref.load %arg3[%c414] : memref<512xf32, #tpu.memory_space<smem>>
    %509 = vector.broadcast %508 : f32 to vector<2x128xf32>
    %510 = arith.mulf %509, %375 : vector<2x128xf32>
    %511 = arith.addf %507, %510 : vector<2x128xf32>
    %c415 = arith.constant 415 : index
    %512 = memref.load %arg3[%c415] : memref<512xf32, #tpu.memory_space<smem>>
    %513 = vector.broadcast %512 : f32 to vector<2x128xf32>
    %514 = arith.mulf %513, %391 : vector<2x128xf32>
    %515 = arith.addf %511, %514 : vector<2x128xf32>
    %516 = arith.subf %422, %1 : vector<2x128xf32>
    %517 = arith.mulf %516, %516 : vector<2x128xf32>
    %518 = arith.subf %453, %3 : vector<2x128xf32>
    %519 = arith.mulf %518, %518 : vector<2x128xf32>
    %520 = arith.addf %517, %519 : vector<2x128xf32>
    %521 = arith.subf %484, %5 : vector<2x128xf32>
    %522 = arith.mulf %521, %521 : vector<2x128xf32>
    %523 = arith.addf %520, %522 : vector<2x128xf32>
    %524 = arith.subf %515, %7 : vector<2x128xf32>
    %525 = arith.mulf %524, %524 : vector<2x128xf32>
    %526 = arith.addf %523, %525 : vector<2x128xf32>
    %cst = arith.constant -1.000000e+00 : f32
    %527 = vector.broadcast %cst : f32 to vector<2x128xf32>
    %528 = arith.mulf %526, %527 : vector<2x128xf32>
    %cst_16 = arith.constant -1.000000e+02 : f32
    %cst_17 = arith.constant 1.000000e+02 : f32
    %529 = vector.broadcast %cst_16 : f32 to vector<2x128xf32>
    %530 = arith.maximumf %529, %528 : vector<2x128xf32>
    %531 = vector.broadcast %cst_17 : f32 to vector<2x128xf32>
    %532 = arith.minimumf %531, %530 : vector<2x128xf32>
    %c0_18 = arith.constant 0 : index
    %c0_19 = arith.constant 0 : index
    %c0_20 = arith.constant 0 : index
    %c0_21 = arith.constant 0 : index
    %533 = vector.load %arg4[%c0_18, %c0_19, %c0_20, %c0_21] : memref<1x4x2x128xf32, #tpu.memory_space<vmem>>, vector<1x1x2x128xf32>
    %534 = vector.shape_cast %533 : vector<1x1x2x128xf32> to vector<2x128xf32>
    %535 = vector.shape_cast %532 : vector<2x128xf32> to vector<1x1x2x128xf32>
    tpu.vector_store %arg4[%c0_18, %c0_19, %c0_20, %c0_21], %535 {strides = array<i32>} : memref<1x4x2x128xf32, #tpu.memory_space<vmem>>, vector<1x1x2x128xf32>,
    %c32 = arith.constant 32 : index
    %536 = memref.load %arg3[%c32] : memref<512xf32, #tpu.memory_space<smem>>
    %537 = vector.broadcast %536 : f32 to vector<2x128xf32>
    %538 = arith.mulf %537, %1 : vector<2x128xf32>
    %c33 = arith.constant 33 : index
    %539 = memref.load %arg3[%c33] : memref<512xf32, #tpu.memory_space<smem>>
    %540 = vector.broadcast %539 : f32 to vector<2x128xf32>
    %541 = arith.mulf %540, %3 : vector<2x128xf32>
    %542 = arith.addf %538, %541 : vector<2x128xf32>
    %c34 = arith.constant 34 : index
    %543 = memref.load %arg3[%c34] : memref<512xf32, #tpu.memory_space<smem>>
    %544 = vector.broadcast %543 : f32 to vector<2x128xf32>
    %545 = arith.mulf %544, %5 : vector<2x128xf32>
    %546 = arith.addf %542, %545 : vector<2x128xf32>
    %c35 = arith.constant 35 : index
    %547 = memref.load %arg3[%c35] : memref<512xf32, #tpu.memory_space<smem>>
    %548 = vector.broadcast %547 : f32 to vector<2x128xf32>
    %549 = arith.mulf %548, %7 : vector<2x128xf32>
    %550 = arith.addf %546, %549 : vector<2x128xf32>
    %551 = math.tanh %550 : vector<2x128xf32>
    %c36 = arith.constant 36 : index
    %552 = memref.load %arg3[%c36] : memref<512xf32, #tpu.memory_space<smem>>
    %553 = vector.broadcast %552 : f32 to vector<2x128xf32>
    %554 = arith.mulf %553, %1 : vector<2x128xf32>
    %c37 = arith.constant 37 : index
    %555 = memref.load %arg3[%c37] : memref<512xf32, #tpu.memory_space<smem>>
    %556 = vector.broadcast %555 : f32 to vector<2x128xf32>
    %557 = arith.mulf %556, %3 : vector<2x128xf32>
    %558 = arith.addf %554, %557 : vector<2x128xf32>
    %c38 = arith.constant 38 : index
    %559 = memref.load %arg3[%c38] : memref<512xf32, #tpu.memory_space<smem>>
    %560 = vector.broadcast %559 : f32 to vector<2x128xf32>
    %561 = arith.mulf %560, %5 : vector<2x128xf32>
    %562 = arith.addf %558, %561 : vector<2x128xf32>
    %c39 = arith.constant 39 : index
    %563 = memref.load %arg3[%c39] : memref<512xf32, #tpu.memory_space<smem>>
    %564 = vector.broadcast %563 : f32 to vector<2x128xf32>
    %565 = arith.mulf %564, %7 : vector<2x128xf32>
    %566 = arith.addf %562, %565 : vector<2x128xf32>
    %567 = math.tanh %566 : vector<2x128xf32>
    %c40 = arith.constant 40 : index
    %568 = memref.load %arg3[%c40] : memref<512xf32, #tpu.memory_space<smem>>
    %569 = vector.broadcast %568 : f32 to vector<2x128xf32>
    %570 = arith.mulf %569, %1 : vector<2x128xf32>
    %c41 = arith.constant 41 : index
    %571 = memref.load %arg3[%c41] : memref<512xf32, #tpu.memory_space<smem>>
    %572 = vector.broadcast %571 : f32 to vector<2x128xf32>
    %573 = arith.mulf %572, %3 : vector<2x128xf32>
    %574 = arith.addf %570, %573 : vector<2x128xf32>
    %c42 = arith.constant 42 : index
    %575 = memref.load %arg3[%c42] : memref<512xf32, #tpu.memory_space<smem>>
    %576 = vector.broadcast %575 : f32 to vector<2x128xf32>
    %577 = arith.mulf %576, %5 : vector<2x128xf32>
    %578 = arith.addf %574, %577 : vector<2x128xf32>
    %c43 = arith.constant 43 : index
    %579 = memref.load %arg3[%c43] : memref<512xf32, #tpu.memory_space<smem>>
    %580 = vector.broadcast %579 : f32 to vector<2x128xf32>
    %581 = arith.mulf %580, %7 : vector<2x128xf32>
    %582 = arith.addf %578, %581 : vector<2x128xf32>
    %583 = math.tanh %582 : vector<2x128xf32>
    %c44 = arith.constant 44 : index
    %584 = memref.load %arg3[%c44] : memref<512xf32, #tpu.memory_space<smem>>
    %585 = vector.broadcast %584 : f32 to vector<2x128xf32>
    %586 = arith.mulf %585, %1 : vector<2x128xf32>
    %c45 = arith.constant 45 : index
    %587 = memref.load %arg3[%c45] : memref<512xf32, #tpu.memory_space<smem>>
    %588 = vector.broadcast %587 : f32 to vector<2x128xf32>
    %589 = arith.mulf %588, %3 : vector<2x128xf32>
    %590 = arith.addf %586, %589 : vector<2x128xf32>
    %c46 = arith.constant 46 : index
    %591 = memref.load %arg3[%c46] : memref<512xf32, #tpu.memory_space<smem>>
    %592 = vector.broadcast %591 : f32 to vector<2x128xf32>
    %593 = arith.mulf %592, %5 : vector<2x128xf32>
    %594 = arith.addf %590, %593 : vector<2x128xf32>
    %c47 = arith.constant 47 : index
    %595 = memref.load %arg3[%c47] : memref<512xf32, #tpu.memory_space<smem>>
    %596 = vector.broadcast %595 : f32 to vector<2x128xf32>
    %597 = arith.mulf %596, %7 : vector<2x128xf32>
    %598 = arith.addf %594, %597 : vector<2x128xf32>
    %599 = math.tanh %598 : vector<2x128xf32>
    %c48 = arith.constant 48 : index
    %600 = memref.load %arg3[%c48] : memref<512xf32, #tpu.memory_space<smem>>
    %601 = vector.broadcast %600 : f32 to vector<2x128xf32>
    %602 = arith.mulf %601, %1 : vector<2x128xf32>
    %c49 = arith.constant 49 : index
    %603 = memref.load %arg3[%c49] : memref<512xf32, #tpu.memory_space<smem>>
    %604 = vector.broadcast %603 : f32 to vector<2x128xf32>
    %605 = arith.mulf %604, %3 : vector<2x128xf32>
    %606 = arith.addf %602, %605 : vector<2x128xf32>
    %c50 = arith.constant 50 : index
    %607 = memref.load %arg3[%c50] : memref<512xf32, #tpu.memory_space<smem>>
    %608 = vector.broadcast %607 : f32 to vector<2x128xf32>
    %609 = arith.mulf %608, %5 : vector<2x128xf32>
    %610 = arith.addf %606, %609 : vector<2x128xf32>
    %c51 = arith.constant 51 : index
    %611 = memref.load %arg3[%c51] : memref<512xf32, #tpu.memory_space<smem>>
    %612 = vector.broadcast %611 : f32 to vector<2x128xf32>
    %613 = arith.mulf %612, %7 : vector<2x128xf32>
    %614 = arith.addf %610, %613 : vector<2x128xf32>
    %615 = math.tanh %614 : vector<2x128xf32>
    %c52 = arith.constant 52 : index
    %616 = memref.load %arg3[%c52] : memref<512xf32, #tpu.memory_space<smem>>
    %617 = vector.broadcast %616 : f32 to vector<2x128xf32>
    %618 = arith.mulf %617, %1 : vector<2x128xf32>
    %c53 = arith.constant 53 : index
    %619 = memref.load %arg3[%c53] : memref<512xf32, #tpu.memory_space<smem>>
    %620 = vector.broadcast %619 : f32 to vector<2x128xf32>
    %621 = arith.mulf %620, %3 : vector<2x128xf32>
    %622 = arith.addf %618, %621 : vector<2x128xf32>
    %c54 = arith.constant 54 : index
    %623 = memref.load %arg3[%c54] : memref<512xf32, #tpu.memory_space<smem>>
    %624 = vector.broadcast %623 : f32 to vector<2x128xf32>
    %625 = arith.mulf %624, %5 : vector<2x128xf32>
    %626 = arith.addf %622, %625 : vector<2x128xf32>
    %c55 = arith.constant 55 : index
    %627 = memref.load %arg3[%c55] : memref<512xf32, #tpu.memory_space<smem>>
    %628 = vector.broadcast %627 : f32 to vector<2x128xf32>
    %629 = arith.mulf %628, %7 : vector<2x128xf32>
    %630 = arith.addf %626, %629 : vector<2x128xf32>
    %631 = math.tanh %630 : vector<2x128xf32>
    %c56 = arith.constant 56 : index
    %632 = memref.load %arg3[%c56] : memref<512xf32, #tpu.memory_space<smem>>
    %633 = vector.broadcast %632 : f32 to vector<2x128xf32>
    %634 = arith.mulf %633, %1 : vector<2x128xf32>
    %c57 = arith.constant 57 : index
    %635 = memref.load %arg3[%c57] : memref<512xf32, #tpu.memory_space<smem>>
    %636 = vector.broadcast %635 : f32 to vector<2x128xf32>
    %637 = arith.mulf %636, %3 : vector<2x128xf32>
    %638 = arith.addf %634, %637 : vector<2x128xf32>
    %c58 = arith.constant 58 : index
    %639 = memref.load %arg3[%c58] : memref<512xf32, #tpu.memory_space<smem>>
    %640 = vector.broadcast %639 : f32 to vector<2x128xf32>
    %641 = arith.mulf %640, %5 : vector<2x128xf32>
    %642 = arith.addf %638, %641 : vector<2x128xf32>
    %c59 = arith.constant 59 : index
    %643 = memref.load %arg3[%c59] : memref<512xf32, #tpu.memory_space<smem>>
    %644 = vector.broadcast %643 : f32 to vector<2x128xf32>
    %645 = arith.mulf %644, %7 : vector<2x128xf32>
    %646 = arith.addf %642, %645 : vector<2x128xf32>
    %647 = math.tanh %646 : vector<2x128xf32>
    %c60 = arith.constant 60 : index
    %648 = memref.load %arg3[%c60] : memref<512xf32, #tpu.memory_space<smem>>
    %649 = vector.broadcast %648 : f32 to vector<2x128xf32>
    %650 = arith.mulf %649, %1 : vector<2x128xf32>
    %c61 = arith.constant 61 : index
    %651 = memref.load %arg3[%c61] : memref<512xf32, #tpu.memory_space<smem>>
    %652 = vector.broadcast %651 : f32 to vector<2x128xf32>
    %653 = arith.mulf %652, %3 : vector<2x128xf32>
    %654 = arith.addf %650, %653 : vector<2x128xf32>
    %c62 = arith.constant 62 : index
    %655 = memref.load %arg3[%c62] : memref<512xf32, #tpu.memory_space<smem>>
    %656 = vector.broadcast %655 : f32 to vector<2x128xf32>
    %657 = arith.mulf %656, %5 : vector<2x128xf32>
    %658 = arith.addf %654, %657 : vector<2x128xf32>
    %c63 = arith.constant 63 : index
    %659 = memref.load %arg3[%c63] : memref<512xf32, #tpu.memory_space<smem>>
    %660 = vector.broadcast %659 : f32 to vector<2x128xf32>
    %661 = arith.mulf %660, %7 : vector<2x128xf32>
    %662 = arith.addf %658, %661 : vector<2x128xf32>
    %663 = math.tanh %662 : vector<2x128xf32>
    %c160 = arith.constant 160 : index
    %664 = memref.load %arg3[%c160] : memref<512xf32, #tpu.memory_space<smem>>
    %665 = vector.broadcast %664 : f32 to vector<2x128xf32>
    %666 = arith.mulf %665, %551 : vector<2x128xf32>
    %c161 = arith.constant 161 : index
    %667 = memref.load %arg3[%c161] : memref<512xf32, #tpu.memory_space<smem>>
    %668 = vector.broadcast %667 : f32 to vector<2x128xf32>
    %669 = arith.mulf %668, %567 : vector<2x128xf32>
    %670 = arith.addf %666, %669 : vector<2x128xf32>
    %c162 = arith.constant 162 : index
    %671 = memref.load %arg3[%c162] : memref<512xf32, #tpu.memory_space<smem>>
    %672 = vector.broadcast %671 : f32 to vector<2x128xf32>
    %673 = arith.mulf %672, %583 : vector<2x128xf32>
    %674 = arith.addf %670, %673 : vector<2x128xf32>
    %c163 = arith.constant 163 : index
    %675 = memref.load %arg3[%c163] : memref<512xf32, #tpu.memory_space<smem>>
    %676 = vector.broadcast %675 : f32 to vector<2x128xf32>
    %677 = arith.mulf %676, %599 : vector<2x128xf32>
    %678 = arith.addf %674, %677 : vector<2x128xf32>
    %c164 = arith.constant 164 : index
    %679 = memref.load %arg3[%c164] : memref<512xf32, #tpu.memory_space<smem>>
    %680 = vector.broadcast %679 : f32 to vector<2x128xf32>
    %681 = arith.mulf %680, %615 : vector<2x128xf32>
    %682 = arith.addf %678, %681 : vector<2x128xf32>
    %c165 = arith.constant 165 : index
    %683 = memref.load %arg3[%c165] : memref<512xf32, #tpu.memory_space<smem>>
    %684 = vector.broadcast %683 : f32 to vector<2x128xf32>
    %685 = arith.mulf %684, %631 : vector<2x128xf32>
    %686 = arith.addf %682, %685 : vector<2x128xf32>
    %c166 = arith.constant 166 : index
    %687 = memref.load %arg3[%c166] : memref<512xf32, #tpu.memory_space<smem>>
    %688 = vector.broadcast %687 : f32 to vector<2x128xf32>
    %689 = arith.mulf %688, %647 : vector<2x128xf32>
    %690 = arith.addf %686, %689 : vector<2x128xf32>
    %c167 = arith.constant 167 : index
    %691 = memref.load %arg3[%c167] : memref<512xf32, #tpu.memory_space<smem>>
    %692 = vector.broadcast %691 : f32 to vector<2x128xf32>
    %693 = arith.mulf %692, %663 : vector<2x128xf32>
    %694 = arith.addf %690, %693 : vector<2x128xf32>
    %695 = math.tanh %694 : vector<2x128xf32>
    %c168 = arith.constant 168 : index
    %696 = memref.load %arg3[%c168] : memref<512xf32, #tpu.memory_space<smem>>
    %697 = vector.broadcast %696 : f32 to vector<2x128xf32>
    %698 = arith.mulf %697, %551 : vector<2x128xf32>
    %c169 = arith.constant 169 : index
    %699 = memref.load %arg3[%c169] : memref<512xf32, #tpu.memory_space<smem>>
    %700 = vector.broadcast %699 : f32 to vector<2x128xf32>
    %701 = arith.mulf %700, %567 : vector<2x128xf32>
    %702 = arith.addf %698, %701 : vector<2x128xf32>
    %c170 = arith.constant 170 : index
    %703 = memref.load %arg3[%c170] : memref<512xf32, #tpu.memory_space<smem>>
    %704 = vector.broadcast %703 : f32 to vector<2x128xf32>
    %705 = arith.mulf %704, %583 : vector<2x128xf32>
    %706 = arith.addf %702, %705 : vector<2x128xf32>
    %c171 = arith.constant 171 : index
    %707 = memref.load %arg3[%c171] : memref<512xf32, #tpu.memory_space<smem>>
    %708 = vector.broadcast %707 : f32 to vector<2x128xf32>
    %709 = arith.mulf %708, %599 : vector<2x128xf32>
    %710 = arith.addf %706, %709 : vector<2x128xf32>
    %c172 = arith.constant 172 : index
    %711 = memref.load %arg3[%c172] : memref<512xf32, #tpu.memory_space<smem>>
    %712 = vector.broadcast %711 : f32 to vector<2x128xf32>
    %713 = arith.mulf %712, %615 : vector<2x128xf32>
    %714 = arith.addf %710, %713 : vector<2x128xf32>
    %c173 = arith.constant 173 : index
    %715 = memref.load %arg3[%c173] : memref<512xf32, #tpu.memory_space<smem>>
    %716 = vector.broadcast %715 : f32 to vector<2x128xf32>
    %717 = arith.mulf %716, %631 : vector<2x128xf32>
    %718 = arith.addf %714, %717 : vector<2x128xf32>
    %c174 = arith.constant 174 : index
    %719 = memref.load %arg3[%c174] : memref<512xf32, #tpu.memory_space<smem>>
    %720 = vector.broadcast %719 : f32 to vector<2x128xf32>
    %721 = arith.mulf %720, %647 : vector<2x128xf32>
    %722 = arith.addf %718, %721 : vector<2x128xf32>
    %c175 = arith.constant 175 : index
    %723 = memref.load %arg3[%c175] : memref<512xf32, #tpu.memory_space<smem>>
    %724 = vector.broadcast %723 : f32 to vector<2x128xf32>
    %725 = arith.mulf %724, %663 : vector<2x128xf32>
    %726 = arith.addf %722, %725 : vector<2x128xf32>
    %727 = math.tanh %726 : vector<2x128xf32>
    %c176 = arith.constant 176 : index
    %728 = memref.load %arg3[%c176] : memref<512xf32, #tpu.memory_space<smem>>
    %729 = vector.broadcast %728 : f32 to vector<2x128xf32>
    %730 = arith.mulf %729, %551 : vector<2x128xf32>
    %c177 = arith.constant 177 : index
    %731 = memref.load %arg3[%c177] : memref<512xf32, #tpu.memory_space<smem>>
    %732 = vector.broadcast %731 : f32 to vector<2x128xf32>
    %733 = arith.mulf %732, %567 : vector<2x128xf32>
    %734 = arith.addf %730, %733 : vector<2x128xf32>
    %c178 = arith.constant 178 : index
    %735 = memref.load %arg3[%c178] : memref<512xf32, #tpu.memory_space<smem>>
    %736 = vector.broadcast %735 : f32 to vector<2x128xf32>
    %737 = arith.mulf %736, %583 : vector<2x128xf32>
    %738 = arith.addf %734, %737 : vector<2x128xf32>
    %c179 = arith.constant 179 : index
    %739 = memref.load %arg3[%c179] : memref<512xf32, #tpu.memory_space<smem>>
    %740 = vector.broadcast %739 : f32 to vector<2x128xf32>
    %741 = arith.mulf %740, %599 : vector<2x128xf32>
    %742 = arith.addf %738, %741 : vector<2x128xf32>
    %c180 = arith.constant 180 : index
    %743 = memref.load %arg3[%c180] : memref<512xf32, #tpu.memory_space<smem>>
    %744 = vector.broadcast %743 : f32 to vector<2x128xf32>
    %745 = arith.mulf %744, %615 : vector<2x128xf32>
    %746 = arith.addf %742, %745 : vector<2x128xf32>
    %c181 = arith.constant 181 : index
    %747 = memref.load %arg3[%c181] : memref<512xf32, #tpu.memory_space<smem>>
    %748 = vector.broadcast %747 : f32 to vector<2x128xf32>
    %749 = arith.mulf %748, %631 : vector<2x128xf32>
    %750 = arith.addf %746, %749 : vector<2x128xf32>
    %c182 = arith.constant 182 : index
    %751 = memref.load %arg3[%c182] : memref<512xf32, #tpu.memory_space<smem>>
    %752 = vector.broadcast %751 : f32 to vector<2x128xf32>
    %753 = arith.mulf %752, %647 : vector<2x128xf32>
    %754 = arith.addf %750, %753 : vector<2x128xf32>
    %c183 = arith.constant 183 : index
    %755 = memref.load %arg3[%c183] : memref<512xf32, #tpu.memory_space<smem>>
    %756 = vector.broadcast %755 : f32 to vector<2x128xf32>
    %757 = arith.mulf %756, %663 : vector<2x128xf32>
    %758 = arith.addf %754, %757 : vector<2x128xf32>
    %759 = math.tanh %758 : vector<2x128xf32>
    %c184 = arith.constant 184 : index
    %760 = memref.load %arg3[%c184] : memref<512xf32, #tpu.memory_space<smem>>
    %761 = vector.broadcast %760 : f32 to vector<2x128xf32>
    %762 = arith.mulf %761, %551 : vector<2x128xf32>
    %c185 = arith.constant 185 : index
    %763 = memref.load %arg3[%c185] : memref<512xf32, #tpu.memory_space<smem>>
    %764 = vector.broadcast %763 : f32 to vector<2x128xf32>
    %765 = arith.mulf %764, %567 : vector<2x128xf32>
    %766 = arith.addf %762, %765 : vector<2x128xf32>
    %c186 = arith.constant 186 : index
    %767 = memref.load %arg3[%c186] : memref<512xf32, #tpu.memory_space<smem>>
    %768 = vector.broadcast %767 : f32 to vector<2x128xf32>
    %769 = arith.mulf %768, %583 : vector<2x128xf32>
    %770 = arith.addf %766, %769 : vector<2x128xf32>
    %c187 = arith.constant 187 : index
    %771 = memref.load %arg3[%c187] : memref<512xf32, #tpu.memory_space<smem>>
    %772 = vector.broadcast %771 : f32 to vector<2x128xf32>
    %773 = arith.mulf %772, %599 : vector<2x128xf32>
    %774 = arith.addf %770, %773 : vector<2x128xf32>
    %c188 = arith.constant 188 : index
    %775 = memref.load %arg3[%c188] : memref<512xf32, #tpu.memory_space<smem>>
    %776 = vector.broadcast %775 : f32 to vector<2x128xf32>
    %777 = arith.mulf %776, %615 : vector<2x128xf32>
    %778 = arith.addf %774, %777 : vector<2x128xf32>
    %c189 = arith.constant 189 : index
    %779 = memref.load %arg3[%c189] : memref<512xf32, #tpu.memory_space<smem>>
    %780 = vector.broadcast %779 : f32 to vector<2x128xf32>
    %781 = arith.mulf %780, %631 : vector<2x128xf32>
    %782 = arith.addf %778, %781 : vector<2x128xf32>
    %c190 = arith.constant 190 : index
    %783 = memref.load %arg3[%c190] : memref<512xf32, #tpu.memory_space<smem>>
    %784 = vector.broadcast %783 : f32 to vector<2x128xf32>
    %785 = arith.mulf %784, %647 : vector<2x128xf32>
    %786 = arith.addf %782, %785 : vector<2x128xf32>
    %c191 = arith.constant 191 : index
    %787 = memref.load %arg3[%c191] : memref<512xf32, #tpu.memory_space<smem>>
    %788 = vector.broadcast %787 : f32 to vector<2x128xf32>
    %789 = arith.mulf %788, %663 : vector<2x128xf32>
    %790 = arith.addf %786, %789 : vector<2x128xf32>
    %791 = math.tanh %790 : vector<2x128xf32>
    %c288 = arith.constant 288 : index
    %792 = memref.load %arg3[%c288] : memref<512xf32, #tpu.memory_space<smem>>
    %793 = vector.broadcast %792 : f32 to vector<2x128xf32>
    %794 = arith.mulf %793, %695 : vector<2x128xf32>
    %c289 = arith.constant 289 : index
    %795 = memref.load %arg3[%c289] : memref<512xf32, #tpu.memory_space<smem>>
    %796 = vector.broadcast %795 : f32 to vector<2x128xf32>
    %797 = arith.mulf %796, %727 : vector<2x128xf32>
    %798 = arith.addf %794, %797 : vector<2x128xf32>
    %c290 = arith.constant 290 : index
    %799 = memref.load %arg3[%c290] : memref<512xf32, #tpu.memory_space<smem>>
    %800 = vector.broadcast %799 : f32 to vector<2x128xf32>
    %801 = arith.mulf %800, %759 : vector<2x128xf32>
    %802 = arith.addf %798, %801 : vector<2x128xf32>
    %c291 = arith.constant 291 : index
    %803 = memref.load %arg3[%c291] : memref<512xf32, #tpu.memory_space<smem>>
    %804 = vector.broadcast %803 : f32 to vector<2x128xf32>
    %805 = arith.mulf %804, %791 : vector<2x128xf32>
    %806 = arith.addf %802, %805 : vector<2x128xf32>
    %807 = math.tanh %806 : vector<2x128xf32>
    %c292 = arith.constant 292 : index
    %808 = memref.load %arg3[%c292] : memref<512xf32, #tpu.memory_space<smem>>
    %809 = vector.broadcast %808 : f32 to vector<2x128xf32>
    %810 = arith.mulf %809, %695 : vector<2x128xf32>
    %c293 = arith.constant 293 : index
    %811 = memref.load %arg3[%c293] : memref<512xf32, #tpu.memory_space<smem>>
    %812 = vector.broadcast %811 : f32 to vector<2x128xf32>
    %813 = arith.mulf %812, %727 : vector<2x128xf32>
    %814 = arith.addf %810, %813 : vector<2x128xf32>
    %c294 = arith.constant 294 : index
    %815 = memref.load %arg3[%c294] : memref<512xf32, #tpu.memory_space<smem>>
    %816 = vector.broadcast %815 : f32 to vector<2x128xf32>
    %817 = arith.mulf %816, %759 : vector<2x128xf32>
    %818 = arith.addf %814, %817 : vector<2x128xf32>
    %c295 = arith.constant 295 : index
    %819 = memref.load %arg3[%c295] : memref<512xf32, #tpu.memory_space<smem>>
    %820 = vector.broadcast %819 : f32 to vector<2x128xf32>
    %821 = arith.mulf %820, %791 : vector<2x128xf32>
    %822 = arith.addf %818, %821 : vector<2x128xf32>
    %823 = math.tanh %822 : vector<2x128xf32>
    %c296 = arith.constant 296 : index
    %824 = memref.load %arg3[%c296] : memref<512xf32, #tpu.memory_space<smem>>
    %825 = vector.broadcast %824 : f32 to vector<2x128xf32>
    %826 = arith.mulf %825, %695 : vector<2x128xf32>
    %c297 = arith.constant 297 : index
    %827 = memref.load %arg3[%c297] : memref<512xf32, #tpu.memory_space<smem>>
    %828 = vector.broadcast %827 : f32 to vector<2x128xf32>
    %829 = arith.mulf %828, %727 : vector<2x128xf32>
    %830 = arith.addf %826, %829 : vector<2x128xf32>
    %c298 = arith.constant 298 : index
    %831 = memref.load %arg3[%c298] : memref<512xf32, #tpu.memory_space<smem>>
    %832 = vector.broadcast %831 : f32 to vector<2x128xf32>
    %833 = arith.mulf %832, %759 : vector<2x128xf32>
    %834 = arith.addf %830, %833 : vector<2x128xf32>
    %c299 = arith.constant 299 : index
    %835 = memref.load %arg3[%c299] : memref<512xf32, #tpu.memory_space<smem>>
    %836 = vector.broadcast %835 : f32 to vector<2x128xf32>
    %837 = arith.mulf %836, %791 : vector<2x128xf32>
    %838 = arith.addf %834, %837 : vector<2x128xf32>
    %839 = math.tanh %838 : vector<2x128xf32>
    %c300 = arith.constant 300 : index
    %840 = memref.load %arg3[%c300] : memref<512xf32, #tpu.memory_space<smem>>
    %841 = vector.broadcast %840 : f32 to vector<2x128xf32>
    %842 = arith.mulf %841, %695 : vector<2x128xf32>
    %c301 = arith.constant 301 : index
    %843 = memref.load %arg3[%c301] : memref<512xf32, #tpu.memory_space<smem>>
    %844 = vector.broadcast %843 : f32 to vector<2x128xf32>
    %845 = arith.mulf %844, %727 : vector<2x128xf32>
    %846 = arith.addf %842, %845 : vector<2x128xf32>
    %c302 = arith.constant 302 : index
    %847 = memref.load %arg3[%c302] : memref<512xf32, #tpu.memory_space<smem>>
    %848 = vector.broadcast %847 : f32 to vector<2x128xf32>
    %849 = arith.mulf %848, %759 : vector<2x128xf32>
    %850 = arith.addf %846, %849 : vector<2x128xf32>
    %c303 = arith.constant 303 : index
    %851 = memref.load %arg3[%c303] : memref<512xf32, #tpu.memory_space<smem>>
    %852 = vector.broadcast %851 : f32 to vector<2x128xf32>
    %853 = arith.mulf %852, %791 : vector<2x128xf32>
    %854 = arith.addf %850, %853 : vector<2x128xf32>
    %855 = math.tanh %854 : vector<2x128xf32>
    %c304 = arith.constant 304 : index
    %856 = memref.load %arg3[%c304] : memref<512xf32, #tpu.memory_space<smem>>
    %857 = vector.broadcast %856 : f32 to vector<2x128xf32>
    %858 = arith.mulf %857, %695 : vector<2x128xf32>
    %c305 = arith.constant 305 : index
    %859 = memref.load %arg3[%c305] : memref<512xf32, #tpu.memory_space<smem>>
    %860 = vector.broadcast %859 : f32 to vector<2x128xf32>
    %861 = arith.mulf %860, %727 : vector<2x128xf32>
    %862 = arith.addf %858, %861 : vector<2x128xf32>
    %c306 = arith.constant 306 : index
    %863 = memref.load %arg3[%c306] : memref<512xf32, #tpu.memory_space<smem>>
    %864 = vector.broadcast %863 : f32 to vector<2x128xf32>
    %865 = arith.mulf %864, %759 : vector<2x128xf32>
    %866 = arith.addf %862, %865 : vector<2x128xf32>
    %c307 = arith.constant 307 : index
    %867 = memref.load %arg3[%c307] : memref<512xf32, #tpu.memory_space<smem>>
    %868 = vector.broadcast %867 : f32 to vector<2x128xf32>
    %869 = arith.mulf %868, %791 : vector<2x128xf32>
    %870 = arith.addf %866, %869 : vector<2x128xf32>
    %871 = math.tanh %870 : vector<2x128xf32>
    %c308 = arith.constant 308 : index
    %872 = memref.load %arg3[%c308] : memref<512xf32, #tpu.memory_space<smem>>
    %873 = vector.broadcast %872 : f32 to vector<2x128xf32>
    %874 = arith.mulf %873, %695 : vector<2x128xf32>
    %c309 = arith.constant 309 : index
    %875 = memref.load %arg3[%c309] : memref<512xf32, #tpu.memory_space<smem>>
    %876 = vector.broadcast %875 : f32 to vector<2x128xf32>
    %877 = arith.mulf %876, %727 : vector<2x128xf32>
    %878 = arith.addf %874, %877 : vector<2x128xf32>
    %c310 = arith.constant 310 : index
    %879 = memref.load %arg3[%c310] : memref<512xf32, #tpu.memory_space<smem>>
    %880 = vector.broadcast %879 : f32 to vector<2x128xf32>
    %881 = arith.mulf %880, %759 : vector<2x128xf32>
    %882 = arith.addf %878, %881 : vector<2x128xf32>
    %c311 = arith.constant 311 : index
    %883 = memref.load %arg3[%c311] : memref<512xf32, #tpu.memory_space<smem>>
    %884 = vector.broadcast %883 : f32 to vector<2x128xf32>
    %885 = arith.mulf %884, %791 : vector<2x128xf32>
    %886 = arith.addf %882, %885 : vector<2x128xf32>
    %887 = math.tanh %886 : vector<2x128xf32>
    %c312 = arith.constant 312 : index
    %888 = memref.load %arg3[%c312] : memref<512xf32, #tpu.memory_space<smem>>
    %889 = vector.broadcast %888 : f32 to vector<2x128xf32>
    %890 = arith.mulf %889, %695 : vector<2x128xf32>
    %c313 = arith.constant 313 : index
    %891 = memref.load %arg3[%c313] : memref<512xf32, #tpu.memory_space<smem>>
    %892 = vector.broadcast %891 : f32 to vector<2x128xf32>
    %893 = arith.mulf %892, %727 : vector<2x128xf32>
    %894 = arith.addf %890, %893 : vector<2x128xf32>
    %c314 = arith.constant 314 : index
    %895 = memref.load %arg3[%c314] : memref<512xf32, #tpu.memory_space<smem>>
    %896 = vector.broadcast %895 : f32 to vector<2x128xf32>
    %897 = arith.mulf %896, %759 : vector<2x128xf32>
    %898 = arith.addf %894, %897 : vector<2x128xf32>
    %c315 = arith.constant 315 : index
    %899 = memref.load %arg3[%c315] : memref<512xf32, #tpu.memory_space<smem>>
    %900 = vector.broadcast %899 : f32 to vector<2x128xf32>
    %901 = arith.mulf %900, %791 : vector<2x128xf32>
    %902 = arith.addf %898, %901 : vector<2x128xf32>
    %903 = math.tanh %902 : vector<2x128xf32>
    %c316 = arith.constant 316 : index
    %904 = memref.load %arg3[%c316] : memref<512xf32, #tpu.memory_space<smem>>
    %905 = vector.broadcast %904 : f32 to vector<2x128xf32>
    %906 = arith.mulf %905, %695 : vector<2x128xf32>
    %c317 = arith.constant 317 : index
    %907 = memref.load %arg3[%c317] : memref<512xf32, #tpu.memory_space<smem>>
    %908 = vector.broadcast %907 : f32 to vector<2x128xf32>
    %909 = arith.mulf %908, %727 : vector<2x128xf32>
    %910 = arith.addf %906, %909 : vector<2x128xf32>
    %c318 = arith.constant 318 : index
    %911 = memref.load %arg3[%c318] : memref<512xf32, #tpu.memory_space<smem>>
    %912 = vector.broadcast %911 : f32 to vector<2x128xf32>
    %913 = arith.mulf %912, %759 : vector<2x128xf32>
    %914 = arith.addf %910, %913 : vector<2x128xf32>
    %c319 = arith.constant 319 : index
    %915 = memref.load %arg3[%c319] : memref<512xf32, #tpu.memory_space<smem>>
    %916 = vector.broadcast %915 : f32 to vector<2x128xf32>
    %917 = arith.mulf %916, %791 : vector<2x128xf32>
    %918 = arith.addf %914, %917 : vector<2x128xf32>
    %919 = math.tanh %918 : vector<2x128xf32>
    %c416 = arith.constant 416 : index
    %920 = memref.load %arg3[%c416] : memref<512xf32, #tpu.memory_space<smem>>
    %921 = vector.broadcast %920 : f32 to vector<2x128xf32>
    %922 = arith.mulf %921, %807 : vector<2x128xf32>
    %c417 = arith.constant 417 : index
    %923 = memref.load %arg3[%c417] : memref<512xf32, #tpu.memory_space<smem>>
    %924 = vector.broadcast %923 : f32 to vector<2x128xf32>
    %925 = arith.mulf %924, %823 : vector<2x128xf32>
    %926 = arith.addf %922, %925 : vector<2x128xf32>
    %c418 = arith.constant 418 : index
    %927 = memref.load %arg3[%c418] : memref<512xf32, #tpu.memory_space<smem>>
    %928 = vector.broadcast %927 : f32 to vector<2x128xf32>
    %929 = arith.mulf %928, %839 : vector<2x128xf32>
    %930 = arith.addf %926, %929 : vector<2x128xf32>
    %c419 = arith.constant 419 : index
    %931 = memref.load %arg3[%c419] : memref<512xf32, #tpu.memory_space<smem>>
    %932 = vector.broadcast %931 : f32 to vector<2x128xf32>
    %933 = arith.mulf %932, %855 : vector<2x128xf32>
    %934 = arith.addf %930, %933 : vector<2x128xf32>
    %c420 = arith.constant 420 : index
    %935 = memref.load %arg3[%c420] : memref<512xf32, #tpu.memory_space<smem>>
    %936 = vector.broadcast %935 : f32 to vector<2x128xf32>
    %937 = arith.mulf %936, %871 : vector<2x128xf32>
    %938 = arith.addf %934, %937 : vector<2x128xf32>
    %c421 = arith.constant 421 : index
    %939 = memref.load %arg3[%c421] : memref<512xf32, #tpu.memory_space<smem>>
    %940 = vector.broadcast %939 : f32 to vector<2x128xf32>
    %941 = arith.mulf %940, %887 : vector<2x128xf32>
    %942 = arith.addf %938, %941 : vector<2x128xf32>
    %c422 = arith.constant 422 : index
    %943 = memref.load %arg3[%c422] : memref<512xf32, #tpu.memory_space<smem>>
    %944 = vector.broadcast %943 : f32 to vector<2x128xf32>
    %945 = arith.mulf %944, %903 : vector<2x128xf32>
    %946 = arith.addf %942, %945 : vector<2x128xf32>
    %c423 = arith.constant 423 : index
    %947 = memref.load %arg3[%c423] : memref<512xf32, #tpu.memory_space<smem>>
    %948 = vector.broadcast %947 : f32 to vector<2x128xf32>
    %949 = arith.mulf %948, %919 : vector<2x128xf32>
    %950 = arith.addf %946, %949 : vector<2x128xf32>
    %c424 = arith.constant 424 : index
    %951 = memref.load %arg3[%c424] : memref<512xf32, #tpu.memory_space<smem>>
    %952 = vector.broadcast %951 : f32 to vector<2x128xf32>
    %953 = arith.mulf %952, %807 : vector<2x128xf32>
    %c425 = arith.constant 425 : index
    %954 = memref.load %arg3[%c425] : memref<512xf32, #tpu.memory_space<smem>>
    %955 = vector.broadcast %954 : f32 to vector<2x128xf32>
    %956 = arith.mulf %955, %823 : vector<2x128xf32>
    %957 = arith.addf %953, %956 : vector<2x128xf32>
    %c426 = arith.constant 426 : index
    %958 = memref.load %arg3[%c426] : memref<512xf32, #tpu.memory_space<smem>>
    %959 = vector.broadcast %958 : f32 to vector<2x128xf32>
    %960 = arith.mulf %959, %839 : vector<2x128xf32>
    %961 = arith.addf %957, %960 : vector<2x128xf32>
    %c427 = arith.constant 427 : index
    %962 = memref.load %arg3[%c427] : memref<512xf32, #tpu.memory_space<smem>>
    %963 = vector.broadcast %962 : f32 to vector<2x128xf32>
    %964 = arith.mulf %963, %855 : vector<2x128xf32>
    %965 = arith.addf %961, %964 : vector<2x128xf32>
    %c428 = arith.constant 428 : index
    %966 = memref.load %arg3[%c428] : memref<512xf32, #tpu.memory_space<smem>>
    %967 = vector.broadcast %966 : f32 to vector<2x128xf32>
    %968 = arith.mulf %967, %871 : vector<2x128xf32>
    %969 = arith.addf %965, %968 : vector<2x128xf32>
    %c429 = arith.constant 429 : index
    %970 = memref.load %arg3[%c429] : memref<512xf32, #tpu.memory_space<smem>>
    %971 = vector.broadcast %970 : f32 to vector<2x128xf32>
    %972 = arith.mulf %971, %887 : vector<2x128xf32>
    %973 = arith.addf %969, %972 : vector<2x128xf32>
    %c430 = arith.constant 430 : index
    %974 = memref.load %arg3[%c430] : memref<512xf32, #tpu.memory_space<smem>>
    %975 = vector.broadcast %974 : f32 to vector<2x128xf32>
    %976 = arith.mulf %975, %903 : vector<2x128xf32>
    %977 = arith.addf %973, %976 : vector<2x128xf32>
    %c431 = arith.constant 431 : index
    %978 = memref.load %arg3[%c431] : memref<512xf32, #tpu.memory_space<smem>>
    %979 = vector.broadcast %978 : f32 to vector<2x128xf32>
    %980 = arith.mulf %979, %919 : vector<2x128xf32>
    %981 = arith.addf %977, %980 : vector<2x128xf32>
    %c432 = arith.constant 432 : index
    %982 = memref.load %arg3[%c432] : memref<512xf32, #tpu.memory_space<smem>>
    %983 = vector.broadcast %982 : f32 to vector<2x128xf32>
    %984 = arith.mulf %983, %807 : vector<2x128xf32>
    %c433 = arith.constant 433 : index
    %985 = memref.load %arg3[%c433] : memref<512xf32, #tpu.memory_space<smem>>
    %986 = vector.broadcast %985 : f32 to vector<2x128xf32>
    %987 = arith.mulf %986, %823 : vector<2x128xf32>
    %988 = arith.addf %984, %987 : vector<2x128xf32>
    %c434 = arith.constant 434 : index
    %989 = memref.load %arg3[%c434] : memref<512xf32, #tpu.memory_space<smem>>
    %990 = vector.broadcast %989 : f32 to vector<2x128xf32>
    %991 = arith.mulf %990, %839 : vector<2x128xf32>
    %992 = arith.addf %988, %991 : vector<2x128xf32>
    %c435 = arith.constant 435 : index
    %993 = memref.load %arg3[%c435] : memref<512xf32, #tpu.memory_space<smem>>
    %994 = vector.broadcast %993 : f32 to vector<2x128xf32>
    %995 = arith.mulf %994, %855 : vector<2x128xf32>
    %996 = arith.addf %992, %995 : vector<2x128xf32>
    %c436 = arith.constant 436 : index
    %997 = memref.load %arg3[%c436] : memref<512xf32, #tpu.memory_space<smem>>
    %998 = vector.broadcast %997 : f32 to vector<2x128xf32>
    %999 = arith.mulf %998, %871 : vector<2x128xf32>
    %1000 = arith.addf %996, %999 : vector<2x128xf32>
    %c437 = arith.constant 437 : index
    %1001 = memref.load %arg3[%c437] : memref<512xf32, #tpu.memory_space<smem>>
    %1002 = vector.broadcast %1001 : f32 to vector<2x128xf32>
    %1003 = arith.mulf %1002, %887 : vector<2x128xf32>
    %1004 = arith.addf %1000, %1003 : vector<2x128xf32>
    %c438 = arith.constant 438 : index
    %1005 = memref.load %arg3[%c438] : memref<512xf32, #tpu.memory_space<smem>>
    %1006 = vector.broadcast %1005 : f32 to vector<2x128xf32>
    %1007 = arith.mulf %1006, %903 : vector<2x128xf32>
    %1008 = arith.addf %1004, %1007 : vector<2x128xf32>
    %c439 = arith.constant 439 : index
    %1009 = memref.load %arg3[%c439] : memref<512xf32, #tpu.memory_space<smem>>
    %1010 = vector.broadcast %1009 : f32 to vector<2x128xf32>
    %1011 = arith.mulf %1010, %919 : vector<2x128xf32>
    %1012 = arith.addf %1008, %1011 : vector<2x128xf32>
    %c440 = arith.constant 440 : index
    %1013 = memref.load %arg3[%c440] : memref<512xf32, #tpu.memory_space<smem>>
    %1014 = vector.broadcast %1013 : f32 to vector<2x128xf32>
    %1015 = arith.mulf %1014, %807 : vector<2x128xf32>
    %c441 = arith.constant 441 : index
    %1016 = memref.load %arg3[%c441] : memref<512xf32, #tpu.memory_space<smem>>
    %1017 = vector.broadcast %1016 : f32 to vector<2x128xf32>
    %1018 = arith.mulf %1017, %823 : vector<2x128xf32>
    %1019 = arith.addf %1015, %1018 : vector<2x128xf32>
    %c442 = arith.constant 442 : index
    %1020 = memref.load %arg3[%c442] : memref<512xf32, #tpu.memory_space<smem>>
    %1021 = vector.broadcast %1020 : f32 to vector<2x128xf32>
    %1022 = arith.mulf %1021, %839 : vector<2x128xf32>
    %1023 = arith.addf %1019, %1022 : vector<2x128xf32>
    %c443 = arith.constant 443 : index
    %1024 = memref.load %arg3[%c443] : memref<512xf32, #tpu.memory_space<smem>>
    %1025 = vector.broadcast %1024 : f32 to vector<2x128xf32>
    %1026 = arith.mulf %1025, %855 : vector<2x128xf32>
    %1027 = arith.addf %1023, %1026 : vector<2x128xf32>
    %c444 = arith.constant 444 : index
    %1028 = memref.load %arg3[%c444] : memref<512xf32, #tpu.memory_space<smem>>
    %1029 = vector.broadcast %1028 : f32 to vector<2x128xf32>
    %1030 = arith.mulf %1029, %871 : vector<2x128xf32>
    %1031 = arith.addf %1027, %1030 : vector<2x128xf32>
    %c445 = arith.constant 445 : index
    %1032 = memref.load %arg3[%c445] : memref<512xf32, #tpu.memory_space<smem>>
    %1033 = vector.broadcast %1032 : f32 to vector<2x128xf32>
    %1034 = arith.mulf %1033, %887 : vector<2x128xf32>
    %1035 = arith.addf %1031, %1034 : vector<2x128xf32>
    %c446 = arith.constant 446 : index
    %1036 = memref.load %arg3[%c446] : memref<512xf32, #tpu.memory_space<smem>>
    %1037 = vector.broadcast %1036 : f32 to vector<2x128xf32>
    %1038 = arith.mulf %1037, %903 : vector<2x128xf32>
    %1039 = arith.addf %1035, %1038 : vector<2x128xf32>
    %c447 = arith.constant 447 : index
    %1040 = memref.load %arg3[%c447] : memref<512xf32, #tpu.memory_space<smem>>
    %1041 = vector.broadcast %1040 : f32 to vector<2x128xf32>
    %1042 = arith.mulf %1041, %919 : vector<2x128xf32>
    %1043 = arith.addf %1039, %1042 : vector<2x128xf32>
    %1044 = arith.subf %950, %1 : vector<2x128xf32>
    %1045 = arith.mulf %1044, %1044 : vector<2x128xf32>
    %1046 = arith.subf %981, %3 : vector<2x128xf32>
    %1047 = arith.mulf %1046, %1046 : vector<2x128xf32>
    %1048 = arith.addf %1045, %1047 : vector<2x128xf32>
    %1049 = arith.subf %1012, %5 : vector<2x128xf32>
    %1050 = arith.mulf %1049, %1049 : vector<2x128xf32>
    %1051 = arith.addf %1048, %1050 : vector<2x128xf32>
    %1052 = arith.subf %1043, %7 : vector<2x128xf32>
    %1053 = arith.mulf %1052, %1052 : vector<2x128xf32>
    %1054 = arith.addf %1051, %1053 : vector<2x128xf32>
    %cst_22 = arith.constant -1.000000e+00 : f32
    %1055 = vector.broadcast %cst_22 : f32 to vector<2x128xf32>
    %1056 = arith.mulf %1054, %1055 : vector<2x128xf32>
    %cst_23 = arith.constant -1.000000e+02 : f32
    %cst_24 = arith.constant 1.000000e+02 : f32
    %1057 = vector.broadcast %cst_23 : f32 to vector<2x128xf32>
    %1058 = arith.maximumf %1057, %1056 : vector<2x128xf32>
    %1059 = vector.broadcast %cst_24 : f32 to vector<2x128xf32>
    %1060 = arith.minimumf %1059, %1058 : vector<2x128xf32>
    %c0_25 = arith.constant 0 : index
    %c1_26 = arith.constant 1 : index
    %c0_27 = arith.constant 0 : index
    %c0_28 = arith.constant 0 : index
    %1061 = vector.load %arg4[%c0_25, %c1_26, %c0_27, %c0_28] : memref<1x4x2x128xf32, #tpu.memory_space<vmem>>, vector<1x1x2x128xf32>
    %1062 = vector.shape_cast %1061 : vector<1x1x2x128xf32> to vector<2x128xf32>
    %1063 = vector.shape_cast %1060 : vector<2x128xf32> to vector<1x1x2x128xf32>
    tpu.vector_store %arg4[%c0_25, %c1_26, %c0_27, %c0_28], %1063 {strides = array<i32>} : memref<1x4x2x128xf32, #tpu.memory_space<vmem>>, vector<1x1x2x128xf32>,
    %c64 = arith.constant 64 : index
    %1064 = memref.load %arg3[%c64] : memref<512xf32, #tpu.memory_space<smem>>
    %1065 = vector.broadcast %1064 : f32 to vector<2x128xf32>
    %1066 = arith.mulf %1065, %1 : vector<2x128xf32>
    %c65 = arith.constant 65 : index
    %1067 = memref.load %arg3[%c65] : memref<512xf32, #tpu.memory_space<smem>>
    %1068 = vector.broadcast %1067 : f32 to vector<2x128xf32>
    %1069 = arith.mulf %1068, %3 : vector<2x128xf32>
    %1070 = arith.addf %1066, %1069 : vector<2x128xf32>
    %c66 = arith.constant 66 : index
    %1071 = memref.load %arg3[%c66] : memref<512xf32, #tpu.memory_space<smem>>
    %1072 = vector.broadcast %1071 : f32 to vector<2x128xf32>
    %1073 = arith.mulf %1072, %5 : vector<2x128xf32>
    %1074 = arith.addf %1070, %1073 : vector<2x128xf32>
    %c67 = arith.constant 67 : index
    %1075 = memref.load %arg3[%c67] : memref<512xf32, #tpu.memory_space<smem>>
    %1076 = vector.broadcast %1075 : f32 to vector<2x128xf32>
    %1077 = arith.mulf %1076, %7 : vector<2x128xf32>
    %1078 = arith.addf %1074, %1077 : vector<2x128xf32>
    %1079 = math.tanh %1078 : vector<2x128xf32>
    %c68 = arith.constant 68 : index
    %1080 = memref.load %arg3[%c68] : memref<512xf32, #tpu.memory_space<smem>>
    %1081 = vector.broadcast %1080 : f32 to vector<2x128xf32>
    %1082 = arith.mulf %1081, %1 : vector<2x128xf32>
    %c69 = arith.constant 69 : index
    %1083 = memref.load %arg3[%c69] : memref<512xf32, #tpu.memory_space<smem>>
    %1084 = vector.broadcast %1083 : f32 to vector<2x128xf32>
    %1085 = arith.mulf %1084, %3 : vector<2x128xf32>
    %1086 = arith.addf %1082, %1085 : vector<2x128xf32>
    %c70 = arith.constant 70 : index
    %1087 = memref.load %arg3[%c70] : memref<512xf32, #tpu.memory_space<smem>>
    %1088 = vector.broadcast %1087 : f32 to vector<2x128xf32>
    %1089 = arith.mulf %1088, %5 : vector<2x128xf32>
    %1090 = arith.addf %1086, %1089 : vector<2x128xf32>
    %c71 = arith.constant 71 : index
    %1091 = memref.load %arg3[%c71] : memref<512xf32, #tpu.memory_space<smem>>
    %1092 = vector.broadcast %1091 : f32 to vector<2x128xf32>
    %1093 = arith.mulf %1092, %7 : vector<2x128xf32>
    %1094 = arith.addf %1090, %1093 : vector<2x128xf32>
    %1095 = math.tanh %1094 : vector<2x128xf32>
    %c72 = arith.constant 72 : index
    %1096 = memref.load %arg3[%c72] : memref<512xf32, #tpu.memory_space<smem>>
    %1097 = vector.broadcast %1096 : f32 to vector<2x128xf32>
    %1098 = arith.mulf %1097, %1 : vector<2x128xf32>
    %c73 = arith.constant 73 : index
    %1099 = memref.load %arg3[%c73] : memref<512xf32, #tpu.memory_space<smem>>
    %1100 = vector.broadcast %1099 : f32 to vector<2x128xf32>
    %1101 = arith.mulf %1100, %3 : vector<2x128xf32>
    %1102 = arith.addf %1098, %1101 : vector<2x128xf32>
    %c74 = arith.constant 74 : index
    %1103 = memref.load %arg3[%c74] : memref<512xf32, #tpu.memory_space<smem>>
    %1104 = vector.broadcast %1103 : f32 to vector<2x128xf32>
    %1105 = arith.mulf %1104, %5 : vector<2x128xf32>
    %1106 = arith.addf %1102, %1105 : vector<2x128xf32>
    %c75 = arith.constant 75 : index
    %1107 = memref.load %arg3[%c75] : memref<512xf32, #tpu.memory_space<smem>>
    %1108 = vector.broadcast %1107 : f32 to vector<2x128xf32>
    %1109 = arith.mulf %1108, %7 : vector<2x128xf32>
    %1110 = arith.addf %1106, %1109 : vector<2x128xf32>
    %1111 = math.tanh %1110 : vector<2x128xf32>
    %c76 = arith.constant 76 : index
    %1112 = memref.load %arg3[%c76] : memref<512xf32, #tpu.memory_space<smem>>
    %1113 = vector.broadcast %1112 : f32 to vector<2x128xf32>
    %1114 = arith.mulf %1113, %1 : vector<2x128xf32>
    %c77 = arith.constant 77 : index
    %1115 = memref.load %arg3[%c77] : memref<512xf32, #tpu.memory_space<smem>>
    %1116 = vector.broadcast %1115 : f32 to vector<2x128xf32>
    %1117 = arith.mulf %1116, %3 : vector<2x128xf32>
    %1118 = arith.addf %1114, %1117 : vector<2x128xf32>
    %c78 = arith.constant 78 : index
    %1119 = memref.load %arg3[%c78] : memref<512xf32, #tpu.memory_space<smem>>
    %1120 = vector.broadcast %1119 : f32 to vector<2x128xf32>
    %1121 = arith.mulf %1120, %5 : vector<2x128xf32>
    %1122 = arith.addf %1118, %1121 : vector<2x128xf32>
    %c79 = arith.constant 79 : index
    %1123 = memref.load %arg3[%c79] : memref<512xf32, #tpu.memory_space<smem>>
    %1124 = vector.broadcast %1123 : f32 to vector<2x128xf32>
    %1125 = arith.mulf %1124, %7 : vector<2x128xf32>
    %1126 = arith.addf %1122, %1125 : vector<2x128xf32>
    %1127 = math.tanh %1126 : vector<2x128xf32>
    %c80 = arith.constant 80 : index
    %1128 = memref.load %arg3[%c80] : memref<512xf32, #tpu.memory_space<smem>>
    %1129 = vector.broadcast %1128 : f32 to vector<2x128xf32>
    %1130 = arith.mulf %1129, %1 : vector<2x128xf32>
    %c81 = arith.constant 81 : index
    %1131 = memref.load %arg3[%c81] : memref<512xf32, #tpu.memory_space<smem>>
    %1132 = vector.broadcast %1131 : f32 to vector<2x128xf32>
    %1133 = arith.mulf %1132, %3 : vector<2x128xf32>
    %1134 = arith.addf %1130, %1133 : vector<2x128xf32>
    %c82 = arith.constant 82 : index
    %1135 = memref.load %arg3[%c82] : memref<512xf32, #tpu.memory_space<smem>>
    %1136 = vector.broadcast %1135 : f32 to vector<2x128xf32>
    %1137 = arith.mulf %1136, %5 : vector<2x128xf32>
    %1138 = arith.addf %1134, %1137 : vector<2x128xf32>
    %c83 = arith.constant 83 : index
    %1139 = memref.load %arg3[%c83] : memref<512xf32, #tpu.memory_space<smem>>
    %1140 = vector.broadcast %1139 : f32 to vector<2x128xf32>
    %1141 = arith.mulf %1140, %7 : vector<2x128xf32>
    %1142 = arith.addf %1138, %1141 : vector<2x128xf32>
    %1143 = math.tanh %1142 : vector<2x128xf32>
    %c84 = arith.constant 84 : index
    %1144 = memref.load %arg3[%c84] : memref<512xf32, #tpu.memory_space<smem>>
    %1145 = vector.broadcast %1144 : f32 to vector<2x128xf32>
    %1146 = arith.mulf %1145, %1 : vector<2x128xf32>
    %c85 = arith.constant 85 : index
    %1147 = memref.load %arg3[%c85] : memref<512xf32, #tpu.memory_space<smem>>
    %1148 = vector.broadcast %1147 : f32 to vector<2x128xf32>
    %1149 = arith.mulf %1148, %3 : vector<2x128xf32>
    %1150 = arith.addf %1146, %1149 : vector<2x128xf32>
    %c86 = arith.constant 86 : index
    %1151 = memref.load %arg3[%c86] : memref<512xf32, #tpu.memory_space<smem>>
    %1152 = vector.broadcast %1151 : f32 to vector<2x128xf32>
    %1153 = arith.mulf %1152, %5 : vector<2x128xf32>
    %1154 = arith.addf %1150, %1153 : vector<2x128xf32>
    %c87 = arith.constant 87 : index
    %1155 = memref.load %arg3[%c87] : memref<512xf32, #tpu.memory_space<smem>>
    %1156 = vector.broadcast %1155 : f32 to vector<2x128xf32>
    %1157 = arith.mulf %1156, %7 : vector<2x128xf32>
    %1158 = arith.addf %1154, %1157 : vector<2x128xf32>
    %1159 = math.tanh %1158 : vector<2x128xf32>
    %c88 = arith.constant 88 : index
    %1160 = memref.load %arg3[%c88] : memref<512xf32, #tpu.memory_space<smem>>
    %1161 = vector.broadcast %1160 : f32 to vector<2x128xf32>
    %1162 = arith.mulf %1161, %1 : vector<2x128xf32>
    %c89 = arith.constant 89 : index
    %1163 = memref.load %arg3[%c89] : memref<512xf32, #tpu.memory_space<smem>>
    %1164 = vector.broadcast %1163 : f32 to vector<2x128xf32>
    %1165 = arith.mulf %1164, %3 : vector<2x128xf32>
    %1166 = arith.addf %1162, %1165 : vector<2x128xf32>
    %c90 = arith.constant 90 : index
    %1167 = memref.load %arg3[%c90] : memref<512xf32, #tpu.memory_space<smem>>
    %1168 = vector.broadcast %1167 : f32 to vector<2x128xf32>
    %1169 = arith.mulf %1168, %5 : vector<2x128xf32>
    %1170 = arith.addf %1166, %1169 : vector<2x128xf32>
    %c91 = arith.constant 91 : index
    %1171 = memref.load %arg3[%c91] : memref<512xf32, #tpu.memory_space<smem>>
    %1172 = vector.broadcast %1171 : f32 to vector<2x128xf32>
    %1173 = arith.mulf %1172, %7 : vector<2x128xf32>
    %1174 = arith.addf %1170, %1173 : vector<2x128xf32>
    %1175 = math.tanh %1174 : vector<2x128xf32>
    %c92 = arith.constant 92 : index
    %1176 = memref.load %arg3[%c92] : memref<512xf32, #tpu.memory_space<smem>>
    %1177 = vector.broadcast %1176 : f32 to vector<2x128xf32>
    %1178 = arith.mulf %1177, %1 : vector<2x128xf32>
    %c93 = arith.constant 93 : index
    %1179 = memref.load %arg3[%c93] : memref<512xf32, #tpu.memory_space<smem>>
    %1180 = vector.broadcast %1179 : f32 to vector<2x128xf32>
    %1181 = arith.mulf %1180, %3 : vector<2x128xf32>
    %1182 = arith.addf %1178, %1181 : vector<2x128xf32>
    %c94 = arith.constant 94 : index
    %1183 = memref.load %arg3[%c94] : memref<512xf32, #tpu.memory_space<smem>>
    %1184 = vector.broadcast %1183 : f32 to vector<2x128xf32>
    %1185 = arith.mulf %1184, %5 : vector<2x128xf32>
    %1186 = arith.addf %1182, %1185 : vector<2x128xf32>
    %c95 = arith.constant 95 : index
    %1187 = memref.load %arg3[%c95] : memref<512xf32, #tpu.memory_space<smem>>
    %1188 = vector.broadcast %1187 : f32 to vector<2x128xf32>
    %1189 = arith.mulf %1188, %7 : vector<2x128xf32>
    %1190 = arith.addf %1186, %1189 : vector<2x128xf32>
    %1191 = math.tanh %1190 : vector<2x128xf32>
    %c192 = arith.constant 192 : index
    %1192 = memref.load %arg3[%c192] : memref<512xf32, #tpu.memory_space<smem>>
    %1193 = vector.broadcast %1192 : f32 to vector<2x128xf32>
    %1194 = arith.mulf %1193, %1079 : vector<2x128xf32>
    %c193 = arith.constant 193 : index
    %1195 = memref.load %arg3[%c193] : memref<512xf32, #tpu.memory_space<smem>>
    %1196 = vector.broadcast %1195 : f32 to vector<2x128xf32>
    %1197 = arith.mulf %1196, %1095 : vector<2x128xf32>
    %1198 = arith.addf %1194, %1197 : vector<2x128xf32>
    %c194 = arith.constant 194 : index
    %1199 = memref.load %arg3[%c194] : memref<512xf32, #tpu.memory_space<smem>>
    %1200 = vector.broadcast %1199 : f32 to vector<2x128xf32>
    %1201 = arith.mulf %1200, %1111 : vector<2x128xf32>
    %1202 = arith.addf %1198, %1201 : vector<2x128xf32>
    %c195 = arith.constant 195 : index
    %1203 = memref.load %arg3[%c195] : memref<512xf32, #tpu.memory_space<smem>>
    %1204 = vector.broadcast %1203 : f32 to vector<2x128xf32>
    %1205 = arith.mulf %1204, %1127 : vector<2x128xf32>
    %1206 = arith.addf %1202, %1205 : vector<2x128xf32>
    %c196 = arith.constant 196 : index
    %1207 = memref.load %arg3[%c196] : memref<512xf32, #tpu.memory_space<smem>>
    %1208 = vector.broadcast %1207 : f32 to vector<2x128xf32>
    %1209 = arith.mulf %1208, %1143 : vector<2x128xf32>
    %1210 = arith.addf %1206, %1209 : vector<2x128xf32>
    %c197 = arith.constant 197 : index
    %1211 = memref.load %arg3[%c197] : memref<512xf32, #tpu.memory_space<smem>>
    %1212 = vector.broadcast %1211 : f32 to vector<2x128xf32>
    %1213 = arith.mulf %1212, %1159 : vector<2x128xf32>
    %1214 = arith.addf %1210, %1213 : vector<2x128xf32>
    %c198 = arith.constant 198 : index
    %1215 = memref.load %arg3[%c198] : memref<512xf32, #tpu.memory_space<smem>>
    %1216 = vector.broadcast %1215 : f32 to vector<2x128xf32>
    %1217 = arith.mulf %1216, %1175 : vector<2x128xf32>
    %1218 = arith.addf %1214, %1217 : vector<2x128xf32>
    %c199 = arith.constant 199 : index
    %1219 = memref.load %arg3[%c199] : memref<512xf32, #tpu.memory_space<smem>>
    %1220 = vector.broadcast %1219 : f32 to vector<2x128xf32>
    %1221 = arith.mulf %1220, %1191 : vector<2x128xf32>
    %1222 = arith.addf %1218, %1221 : vector<2x128xf32>
    %1223 = math.tanh %1222 : vector<2x128xf32>
    %c200 = arith.constant 200 : index
    %1224 = memref.load %arg3[%c200] : memref<512xf32, #tpu.memory_space<smem>>
    %1225 = vector.broadcast %1224 : f32 to vector<2x128xf32>
    %1226 = arith.mulf %1225, %1079 : vector<2x128xf32>
    %c201 = arith.constant 201 : index
    %1227 = memref.load %arg3[%c201] : memref<512xf32, #tpu.memory_space<smem>>
    %1228 = vector.broadcast %1227 : f32 to vector<2x128xf32>
    %1229 = arith.mulf %1228, %1095 : vector<2x128xf32>
    %1230 = arith.addf %1226, %1229 : vector<2x128xf32>
    %c202 = arith.constant 202 : index
    %1231 = memref.load %arg3[%c202] : memref<512xf32, #tpu.memory_space<smem>>
    %1232 = vector.broadcast %1231 : f32 to vector<2x128xf32>
    %1233 = arith.mulf %1232, %1111 : vector<2x128xf32>
    %1234 = arith.addf %1230, %1233 : vector<2x128xf32>
    %c203 = arith.constant 203 : index
    %1235 = memref.load %arg3[%c203] : memref<512xf32, #tpu.memory_space<smem>>
    %1236 = vector.broadcast %1235 : f32 to vector<2x128xf32>
    %1237 = arith.mulf %1236, %1127 : vector<2x128xf32>
    %1238 = arith.addf %1234, %1237 : vector<2x128xf32>
    %c204 = arith.constant 204 : index
    %1239 = memref.load %arg3[%c204] : memref<512xf32, #tpu.memory_space<smem>>
    %1240 = vector.broadcast %1239 : f32 to vector<2x128xf32>
    %1241 = arith.mulf %1240, %1143 : vector<2x128xf32>
    %1242 = arith.addf %1238, %1241 : vector<2x128xf32>
    %c205 = arith.constant 205 : index
    %1243 = memref.load %arg3[%c205] : memref<512xf32, #tpu.memory_space<smem>>
    %1244 = vector.broadcast %1243 : f32 to vector<2x128xf32>
    %1245 = arith.mulf %1244, %1159 : vector<2x128xf32>
    %1246 = arith.addf %1242, %1245 : vector<2x128xf32>
    %c206 = arith.constant 206 : index
    %1247 = memref.load %arg3[%c206] : memref<512xf32, #tpu.memory_space<smem>>
    %1248 = vector.broadcast %1247 : f32 to vector<2x128xf32>
    %1249 = arith.mulf %1248, %1175 : vector<2x128xf32>
    %1250 = arith.addf %1246, %1249 : vector<2x128xf32>
    %c207 = arith.constant 207 : index
    %1251 = memref.load %arg3[%c207] : memref<512xf32, #tpu.memory_space<smem>>
    %1252 = vector.broadcast %1251 : f32 to vector<2x128xf32>
    %1253 = arith.mulf %1252, %1191 : vector<2x128xf32>
    %1254 = arith.addf %1250, %1253 : vector<2x128xf32>
    %1255 = math.tanh %1254 : vector<2x128xf32>
    %c208 = arith.constant 208 : index
    %1256 = memref.load %arg3[%c208] : memref<512xf32, #tpu.memory_space<smem>>
    %1257 = vector.broadcast %1256 : f32 to vector<2x128xf32>
    %1258 = arith.mulf %1257, %1079 : vector<2x128xf32>
    %c209 = arith.constant 209 : index
    %1259 = memref.load %arg3[%c209] : memref<512xf32, #tpu.memory_space<smem>>
    %1260 = vector.broadcast %1259 : f32 to vector<2x128xf32>
    %1261 = arith.mulf %1260, %1095 : vector<2x128xf32>
    %1262 = arith.addf %1258, %1261 : vector<2x128xf32>
    %c210 = arith.constant 210 : index
    %1263 = memref.load %arg3[%c210] : memref<512xf32, #tpu.memory_space<smem>>
    %1264 = vector.broadcast %1263 : f32 to vector<2x128xf32>
    %1265 = arith.mulf %1264, %1111 : vector<2x128xf32>
    %1266 = arith.addf %1262, %1265 : vector<2x128xf32>
    %c211 = arith.constant 211 : index
    %1267 = memref.load %arg3[%c211] : memref<512xf32, #tpu.memory_space<smem>>
    %1268 = vector.broadcast %1267 : f32 to vector<2x128xf32>
    %1269 = arith.mulf %1268, %1127 : vector<2x128xf32>
    %1270 = arith.addf %1266, %1269 : vector<2x128xf32>
    %c212 = arith.constant 212 : index
    %1271 = memref.load %arg3[%c212] : memref<512xf32, #tpu.memory_space<smem>>
    %1272 = vector.broadcast %1271 : f32 to vector<2x128xf32>
    %1273 = arith.mulf %1272, %1143 : vector<2x128xf32>
    %1274 = arith.addf %1270, %1273 : vector<2x128xf32>
    %c213 = arith.constant 213 : index
    %1275 = memref.load %arg3[%c213] : memref<512xf32, #tpu.memory_space<smem>>
    %1276 = vector.broadcast %1275 : f32 to vector<2x128xf32>
    %1277 = arith.mulf %1276, %1159 : vector<2x128xf32>
    %1278 = arith.addf %1274, %1277 : vector<2x128xf32>
    %c214 = arith.constant 214 : index
    %1279 = memref.load %arg3[%c214] : memref<512xf32, #tpu.memory_space<smem>>
    %1280 = vector.broadcast %1279 : f32 to vector<2x128xf32>
    %1281 = arith.mulf %1280, %1175 : vector<2x128xf32>
    %1282 = arith.addf %1278, %1281 : vector<2x128xf32>
    %c215 = arith.constant 215 : index
    %1283 = memref.load %arg3[%c215] : memref<512xf32, #tpu.memory_space<smem>>
    %1284 = vector.broadcast %1283 : f32 to vector<2x128xf32>
    %1285 = arith.mulf %1284, %1191 : vector<2x128xf32>
    %1286 = arith.addf %1282, %1285 : vector<2x128xf32>
    %1287 = math.tanh %1286 : vector<2x128xf32>
    %c216 = arith.constant 216 : index
    %1288 = memref.load %arg3[%c216] : memref<512xf32, #tpu.memory_space<smem>>
    %1289 = vector.broadcast %1288 : f32 to vector<2x128xf32>
    %1290 = arith.mulf %1289, %1079 : vector<2x128xf32>
    %c217 = arith.constant 217 : index
    %1291 = memref.load %arg3[%c217] : memref<512xf32, #tpu.memory_space<smem>>
    %1292 = vector.broadcast %1291 : f32 to vector<2x128xf32>
    %1293 = arith.mulf %1292, %1095 : vector<2x128xf32>
    %1294 = arith.addf %1290, %1293 : vector<2x128xf32>
    %c218 = arith.constant 218 : index
    %1295 = memref.load %arg3[%c218] : memref<512xf32, #tpu.memory_space<smem>>
    %1296 = vector.broadcast %1295 : f32 to vector<2x128xf32>
    %1297 = arith.mulf %1296, %1111 : vector<2x128xf32>
    %1298 = arith.addf %1294, %1297 : vector<2x128xf32>
    %c219 = arith.constant 219 : index
    %1299 = memref.load %arg3[%c219] : memref<512xf32, #tpu.memory_space<smem>>
    %1300 = vector.broadcast %1299 : f32 to vector<2x128xf32>
    %1301 = arith.mulf %1300, %1127 : vector<2x128xf32>
    %1302 = arith.addf %1298, %1301 : vector<2x128xf32>
    %c220 = arith.constant 220 : index
    %1303 = memref.load %arg3[%c220] : memref<512xf32, #tpu.memory_space<smem>>
    %1304 = vector.broadcast %1303 : f32 to vector<2x128xf32>
    %1305 = arith.mulf %1304, %1143 : vector<2x128xf32>
    %1306 = arith.addf %1302, %1305 : vector<2x128xf32>
    %c221 = arith.constant 221 : index
    %1307 = memref.load %arg3[%c221] : memref<512xf32, #tpu.memory_space<smem>>
    %1308 = vector.broadcast %1307 : f32 to vector<2x128xf32>
    %1309 = arith.mulf %1308, %1159 : vector<2x128xf32>
    %1310 = arith.addf %1306, %1309 : vector<2x128xf32>
    %c222 = arith.constant 222 : index
    %1311 = memref.load %arg3[%c222] : memref<512xf32, #tpu.memory_space<smem>>
    %1312 = vector.broadcast %1311 : f32 to vector<2x128xf32>
    %1313 = arith.mulf %1312, %1175 : vector<2x128xf32>
    %1314 = arith.addf %1310, %1313 : vector<2x128xf32>
    %c223 = arith.constant 223 : index
    %1315 = memref.load %arg3[%c223] : memref<512xf32, #tpu.memory_space<smem>>
    %1316 = vector.broadcast %1315 : f32 to vector<2x128xf32>
    %1317 = arith.mulf %1316, %1191 : vector<2x128xf32>
    %1318 = arith.addf %1314, %1317 : vector<2x128xf32>
    %1319 = math.tanh %1318 : vector<2x128xf32>
    %c320 = arith.constant 320 : index
    %1320 = memref.load %arg3[%c320] : memref<512xf32, #tpu.memory_space<smem>>
    %1321 = vector.broadcast %1320 : f32 to vector<2x128xf32>
    %1322 = arith.mulf %1321, %1223 : vector<2x128xf32>
    %c321 = arith.constant 321 : index
    %1323 = memref.load %arg3[%c321] : memref<512xf32, #tpu.memory_space<smem>>
    %1324 = vector.broadcast %1323 : f32 to vector<2x128xf32>
    %1325 = arith.mulf %1324, %1255 : vector<2x128xf32>
    %1326 = arith.addf %1322, %1325 : vector<2x128xf32>
    %c322 = arith.constant 322 : index
    %1327 = memref.load %arg3[%c322] : memref<512xf32, #tpu.memory_space<smem>>
    %1328 = vector.broadcast %1327 : f32 to vector<2x128xf32>
    %1329 = arith.mulf %1328, %1287 : vector<2x128xf32>
    %1330 = arith.addf %1326, %1329 : vector<2x128xf32>
    %c323 = arith.constant 323 : index
    %1331 = memref.load %arg3[%c323] : memref<512xf32, #tpu.memory_space<smem>>
    %1332 = vector.broadcast %1331 : f32 to vector<2x128xf32>
    %1333 = arith.mulf %1332, %1319 : vector<2x128xf32>
    %1334 = arith.addf %1330, %1333 : vector<2x128xf32>
    %1335 = math.tanh %1334 : vector<2x128xf32>
    %c324 = arith.constant 324 : index
    %1336 = memref.load %arg3[%c324] : memref<512xf32, #tpu.memory_space<smem>>
    %1337 = vector.broadcast %1336 : f32 to vector<2x128xf32>
    %1338 = arith.mulf %1337, %1223 : vector<2x128xf32>
    %c325 = arith.constant 325 : index
    %1339 = memref.load %arg3[%c325] : memref<512xf32, #tpu.memory_space<smem>>
    %1340 = vector.broadcast %1339 : f32 to vector<2x128xf32>
    %1341 = arith.mulf %1340, %1255 : vector<2x128xf32>
    %1342 = arith.addf %1338, %1341 : vector<2x128xf32>
    %c326 = arith.constant 326 : index
    %1343 = memref.load %arg3[%c326] : memref<512xf32, #tpu.memory_space<smem>>
    %1344 = vector.broadcast %1343 : f32 to vector<2x128xf32>
    %1345 = arith.mulf %1344, %1287 : vector<2x128xf32>
    %1346 = arith.addf %1342, %1345 : vector<2x128xf32>
    %c327 = arith.constant 327 : index
    %1347 = memref.load %arg3[%c327] : memref<512xf32, #tpu.memory_space<smem>>
    %1348 = vector.broadcast %1347 : f32 to vector<2x128xf32>
    %1349 = arith.mulf %1348, %1319 : vector<2x128xf32>
    %1350 = arith.addf %1346, %1349 : vector<2x128xf32>
    %1351 = math.tanh %1350 : vector<2x128xf32>
    %c328 = arith.constant 328 : index
    %1352 = memref.load %arg3[%c328] : memref<512xf32, #tpu.memory_space<smem>>
    %1353 = vector.broadcast %1352 : f32 to vector<2x128xf32>
    %1354 = arith.mulf %1353, %1223 : vector<2x128xf32>
    %c329 = arith.constant 329 : index
    %1355 = memref.load %arg3[%c329] : memref<512xf32, #tpu.memory_space<smem>>
    %1356 = vector.broadcast %1355 : f32 to vector<2x128xf32>
    %1357 = arith.mulf %1356, %1255 : vector<2x128xf32>
    %1358 = arith.addf %1354, %1357 : vector<2x128xf32>
    %c330 = arith.constant 330 : index
    %1359 = memref.load %arg3[%c330] : memref<512xf32, #tpu.memory_space<smem>>
    %1360 = vector.broadcast %1359 : f32 to vector<2x128xf32>
    %1361 = arith.mulf %1360, %1287 : vector<2x128xf32>
    %1362 = arith.addf %1358, %1361 : vector<2x128xf32>
    %c331 = arith.constant 331 : index
    %1363 = memref.load %arg3[%c331] : memref<512xf32, #tpu.memory_space<smem>>
    %1364 = vector.broadcast %1363 : f32 to vector<2x128xf32>
    %1365 = arith.mulf %1364, %1319 : vector<2x128xf32>
    %1366 = arith.addf %1362, %1365 : vector<2x128xf32>
    %1367 = math.tanh %1366 : vector<2x128xf32>
    %c332 = arith.constant 332 : index
    %1368 = memref.load %arg3[%c332] : memref<512xf32, #tpu.memory_space<smem>>
    %1369 = vector.broadcast %1368 : f32 to vector<2x128xf32>
    %1370 = arith.mulf %1369, %1223 : vector<2x128xf32>
    %c333 = arith.constant 333 : index
    %1371 = memref.load %arg3[%c333] : memref<512xf32, #tpu.memory_space<smem>>
    %1372 = vector.broadcast %1371 : f32 to vector<2x128xf32>
    %1373 = arith.mulf %1372, %1255 : vector<2x128xf32>
    %1374 = arith.addf %1370, %1373 : vector<2x128xf32>
    %c334 = arith.constant 334 : index
    %1375 = memref.load %arg3[%c334] : memref<512xf32, #tpu.memory_space<smem>>
    %1376 = vector.broadcast %1375 : f32 to vector<2x128xf32>
    %1377 = arith.mulf %1376, %1287 : vector<2x128xf32>
    %1378 = arith.addf %1374, %1377 : vector<2x128xf32>
    %c335 = arith.constant 335 : index
    %1379 = memref.load %arg3[%c335] : memref<512xf32, #tpu.memory_space<smem>>
    %1380 = vector.broadcast %1379 : f32 to vector<2x128xf32>
    %1381 = arith.mulf %1380, %1319 : vector<2x128xf32>
    %1382 = arith.addf %1378, %1381 : vector<2x128xf32>
    %1383 = math.tanh %1382 : vector<2x128xf32>
    %c336 = arith.constant 336 : index
    %1384 = memref.load %arg3[%c336] : memref<512xf32, #tpu.memory_space<smem>>
    %1385 = vector.broadcast %1384 : f32 to vector<2x128xf32>
    %1386 = arith.mulf %1385, %1223 : vector<2x128xf32>
    %c337 = arith.constant 337 : index
    %1387 = memref.load %arg3[%c337] : memref<512xf32, #tpu.memory_space<smem>>
    %1388 = vector.broadcast %1387 : f32 to vector<2x128xf32>
    %1389 = arith.mulf %1388, %1255 : vector<2x128xf32>
    %1390 = arith.addf %1386, %1389 : vector<2x128xf32>
    %c338 = arith.constant 338 : index
    %1391 = memref.load %arg3[%c338] : memref<512xf32, #tpu.memory_space<smem>>
    %1392 = vector.broadcast %1391 : f32 to vector<2x128xf32>
    %1393 = arith.mulf %1392, %1287 : vector<2x128xf32>
    %1394 = arith.addf %1390, %1393 : vector<2x128xf32>
    %c339 = arith.constant 339 : index
    %1395 = memref.load %arg3[%c339] : memref<512xf32, #tpu.memory_space<smem>>
    %1396 = vector.broadcast %1395 : f32 to vector<2x128xf32>
    %1397 = arith.mulf %1396, %1319 : vector<2x128xf32>
    %1398 = arith.addf %1394, %1397 : vector<2x128xf32>
    %1399 = math.tanh %1398 : vector<2x128xf32>
    %c340 = arith.constant 340 : index
    %1400 = memref.load %arg3[%c340] : memref<512xf32, #tpu.memory_space<smem>>
    %1401 = vector.broadcast %1400 : f32 to vector<2x128xf32>
    %1402 = arith.mulf %1401, %1223 : vector<2x128xf32>
    %c341 = arith.constant 341 : index
    %1403 = memref.load %arg3[%c341] : memref<512xf32, #tpu.memory_space<smem>>
    %1404 = vector.broadcast %1403 : f32 to vector<2x128xf32>
    %1405 = arith.mulf %1404, %1255 : vector<2x128xf32>
    %1406 = arith.addf %1402, %1405 : vector<2x128xf32>
    %c342 = arith.constant 342 : index
    %1407 = memref.load %arg3[%c342] : memref<512xf32, #tpu.memory_space<smem>>
    %1408 = vector.broadcast %1407 : f32 to vector<2x128xf32>
    %1409 = arith.mulf %1408, %1287 : vector<2x128xf32>
    %1410 = arith.addf %1406, %1409 : vector<2x128xf32>
    %c343 = arith.constant 343 : index
    %1411 = memref.load %arg3[%c343] : memref<512xf32, #tpu.memory_space<smem>>
    %1412 = vector.broadcast %1411 : f32 to vector<2x128xf32>
    %1413 = arith.mulf %1412, %1319 : vector<2x128xf32>
    %1414 = arith.addf %1410, %1413 : vector<2x128xf32>
    %1415 = math.tanh %1414 : vector<2x128xf32>
    %c344 = arith.constant 344 : index
    %1416 = memref.load %arg3[%c344] : memref<512xf32, #tpu.memory_space<smem>>
    %1417 = vector.broadcast %1416 : f32 to vector<2x128xf32>
    %1418 = arith.mulf %1417, %1223 : vector<2x128xf32>
    %c345 = arith.constant 345 : index
    %1419 = memref.load %arg3[%c345] : memref<512xf32, #tpu.memory_space<smem>>
    %1420 = vector.broadcast %1419 : f32 to vector<2x128xf32>
    %1421 = arith.mulf %1420, %1255 : vector<2x128xf32>
    %1422 = arith.addf %1418, %1421 : vector<2x128xf32>
    %c346 = arith.constant 346 : index
    %1423 = memref.load %arg3[%c346] : memref<512xf32, #tpu.memory_space<smem>>
    %1424 = vector.broadcast %1423 : f32 to vector<2x128xf32>
    %1425 = arith.mulf %1424, %1287 : vector<2x128xf32>
    %1426 = arith.addf %1422, %1425 : vector<2x128xf32>
    %c347 = arith.constant 347 : index
    %1427 = memref.load %arg3[%c347] : memref<512xf32, #tpu.memory_space<smem>>
    %1428 = vector.broadcast %1427 : f32 to vector<2x128xf32>
    %1429 = arith.mulf %1428, %1319 : vector<2x128xf32>
    %1430 = arith.addf %1426, %1429 : vector<2x128xf32>
    %1431 = math.tanh %1430 : vector<2x128xf32>
    %c348 = arith.constant 348 : index
    %1432 = memref.load %arg3[%c348] : memref<512xf32, #tpu.memory_space<smem>>
    %1433 = vector.broadcast %1432 : f32 to vector<2x128xf32>
    %1434 = arith.mulf %1433, %1223 : vector<2x128xf32>
    %c349 = arith.constant 349 : index
    %1435 = memref.load %arg3[%c349] : memref<512xf32, #tpu.memory_space<smem>>
    %1436 = vector.broadcast %1435 : f32 to vector<2x128xf32>
    %1437 = arith.mulf %1436, %1255 : vector<2x128xf32>
    %1438 = arith.addf %1434, %1437 : vector<2x128xf32>
    %c350 = arith.constant 350 : index
    %1439 = memref.load %arg3[%c350] : memref<512xf32, #tpu.memory_space<smem>>
    %1440 = vector.broadcast %1439 : f32 to vector<2x128xf32>
    %1441 = arith.mulf %1440, %1287 : vector<2x128xf32>
    %1442 = arith.addf %1438, %1441 : vector<2x128xf32>
    %c351 = arith.constant 351 : index
    %1443 = memref.load %arg3[%c351] : memref<512xf32, #tpu.memory_space<smem>>
    %1444 = vector.broadcast %1443 : f32 to vector<2x128xf32>
    %1445 = arith.mulf %1444, %1319 : vector<2x128xf32>
    %1446 = arith.addf %1442, %1445 : vector<2x128xf32>
    %1447 = math.tanh %1446 : vector<2x128xf32>
    %c448 = arith.constant 448 : index
    %1448 = memref.load %arg3[%c448] : memref<512xf32, #tpu.memory_space<smem>>
    %1449 = vector.broadcast %1448 : f32 to vector<2x128xf32>
    %1450 = arith.mulf %1449, %1335 : vector<2x128xf32>
    %c449 = arith.constant 449 : index
    %1451 = memref.load %arg3[%c449] : memref<512xf32, #tpu.memory_space<smem>>
    %1452 = vector.broadcast %1451 : f32 to vector<2x128xf32>
    %1453 = arith.mulf %1452, %1351 : vector<2x128xf32>
    %1454 = arith.addf %1450, %1453 : vector<2x128xf32>
    %c450 = arith.constant 450 : index
    %1455 = memref.load %arg3[%c450] : memref<512xf32, #tpu.memory_space<smem>>
    %1456 = vector.broadcast %1455 : f32 to vector<2x128xf32>
    %1457 = arith.mulf %1456, %1367 : vector<2x128xf32>
    %1458 = arith.addf %1454, %1457 : vector<2x128xf32>
    %c451 = arith.constant 451 : index
    %1459 = memref.load %arg3[%c451] : memref<512xf32, #tpu.memory_space<smem>>
    %1460 = vector.broadcast %1459 : f32 to vector<2x128xf32>
    %1461 = arith.mulf %1460, %1383 : vector<2x128xf32>
    %1462 = arith.addf %1458, %1461 : vector<2x128xf32>
    %c452 = arith.constant 452 : index
    %1463 = memref.load %arg3[%c452] : memref<512xf32, #tpu.memory_space<smem>>
    %1464 = vector.broadcast %1463 : f32 to vector<2x128xf32>
    %1465 = arith.mulf %1464, %1399 : vector<2x128xf32>
    %1466 = arith.addf %1462, %1465 : vector<2x128xf32>
    %c453 = arith.constant 453 : index
    %1467 = memref.load %arg3[%c453] : memref<512xf32, #tpu.memory_space<smem>>
    %1468 = vector.broadcast %1467 : f32 to vector<2x128xf32>
    %1469 = arith.mulf %1468, %1415 : vector<2x128xf32>
    %1470 = arith.addf %1466, %1469 : vector<2x128xf32>
    %c454 = arith.constant 454 : index
    %1471 = memref.load %arg3[%c454] : memref<512xf32, #tpu.memory_space<smem>>
    %1472 = vector.broadcast %1471 : f32 to vector<2x128xf32>
    %1473 = arith.mulf %1472, %1431 : vector<2x128xf32>
    %1474 = arith.addf %1470, %1473 : vector<2x128xf32>
    %c455 = arith.constant 455 : index
    %1475 = memref.load %arg3[%c455] : memref<512xf32, #tpu.memory_space<smem>>
    %1476 = vector.broadcast %1475 : f32 to vector<2x128xf32>
    %1477 = arith.mulf %1476, %1447 : vector<2x128xf32>
    %1478 = arith.addf %1474, %1477 : vector<2x128xf32>
    %c456 = arith.constant 456 : index
    %1479 = memref.load %arg3[%c456] : memref<512xf32, #tpu.memory_space<smem>>
    %1480 = vector.broadcast %1479 : f32 to vector<2x128xf32>
    %1481 = arith.mulf %1480, %1335 : vector<2x128xf32>
    %c457 = arith.constant 457 : index
    %1482 = memref.load %arg3[%c457] : memref<512xf32, #tpu.memory_space<smem>>
    %1483 = vector.broadcast %1482 : f32 to vector<2x128xf32>
    %1484 = arith.mulf %1483, %1351 : vector<2x128xf32>
    %1485 = arith.addf %1481, %1484 : vector<2x128xf32>
    %c458 = arith.constant 458 : index
    %1486 = memref.load %arg3[%c458] : memref<512xf32, #tpu.memory_space<smem>>
    %1487 = vector.broadcast %1486 : f32 to vector<2x128xf32>
    %1488 = arith.mulf %1487, %1367 : vector<2x128xf32>
    %1489 = arith.addf %1485, %1488 : vector<2x128xf32>
    %c459 = arith.constant 459 : index
    %1490 = memref.load %arg3[%c459] : memref<512xf32, #tpu.memory_space<smem>>
    %1491 = vector.broadcast %1490 : f32 to vector<2x128xf32>
    %1492 = arith.mulf %1491, %1383 : vector<2x128xf32>
    %1493 = arith.addf %1489, %1492 : vector<2x128xf32>
    %c460 = arith.constant 460 : index
    %1494 = memref.load %arg3[%c460] : memref<512xf32, #tpu.memory_space<smem>>
    %1495 = vector.broadcast %1494 : f32 to vector<2x128xf32>
    %1496 = arith.mulf %1495, %1399 : vector<2x128xf32>
    %1497 = arith.addf %1493, %1496 : vector<2x128xf32>
    %c461 = arith.constant 461 : index
    %1498 = memref.load %arg3[%c461] : memref<512xf32, #tpu.memory_space<smem>>
    %1499 = vector.broadcast %1498 : f32 to vector<2x128xf32>
    %1500 = arith.mulf %1499, %1415 : vector<2x128xf32>
    %1501 = arith.addf %1497, %1500 : vector<2x128xf32>
    %c462 = arith.constant 462 : index
    %1502 = memref.load %arg3[%c462] : memref<512xf32, #tpu.memory_space<smem>>
    %1503 = vector.broadcast %1502 : f32 to vector<2x128xf32>
    %1504 = arith.mulf %1503, %1431 : vector<2x128xf32>
    %1505 = arith.addf %1501, %1504 : vector<2x128xf32>
    %c463 = arith.constant 463 : index
    %1506 = memref.load %arg3[%c463] : memref<512xf32, #tpu.memory_space<smem>>
    %1507 = vector.broadcast %1506 : f32 to vector<2x128xf32>
    %1508 = arith.mulf %1507, %1447 : vector<2x128xf32>
    %1509 = arith.addf %1505, %1508 : vector<2x128xf32>
    %c464 = arith.constant 464 : index
    %1510 = memref.load %arg3[%c464] : memref<512xf32, #tpu.memory_space<smem>>
    %1511 = vector.broadcast %1510 : f32 to vector<2x128xf32>
    %1512 = arith.mulf %1511, %1335 : vector<2x128xf32>
    %c465 = arith.constant 465 : index
    %1513 = memref.load %arg3[%c465] : memref<512xf32, #tpu.memory_space<smem>>
    %1514 = vector.broadcast %1513 : f32 to vector<2x128xf32>
    %1515 = arith.mulf %1514, %1351 : vector<2x128xf32>
    %1516 = arith.addf %1512, %1515 : vector<2x128xf32>
    %c466 = arith.constant 466 : index
    %1517 = memref.load %arg3[%c466] : memref<512xf32, #tpu.memory_space<smem>>
    %1518 = vector.broadcast %1517 : f32 to vector<2x128xf32>
    %1519 = arith.mulf %1518, %1367 : vector<2x128xf32>
    %1520 = arith.addf %1516, %1519 : vector<2x128xf32>
    %c467 = arith.constant 467 : index
    %1521 = memref.load %arg3[%c467] : memref<512xf32, #tpu.memory_space<smem>>
    %1522 = vector.broadcast %1521 : f32 to vector<2x128xf32>
    %1523 = arith.mulf %1522, %1383 : vector<2x128xf32>
    %1524 = arith.addf %1520, %1523 : vector<2x128xf32>
    %c468 = arith.constant 468 : index
    %1525 = memref.load %arg3[%c468] : memref<512xf32, #tpu.memory_space<smem>>
    %1526 = vector.broadcast %1525 : f32 to vector<2x128xf32>
    %1527 = arith.mulf %1526, %1399 : vector<2x128xf32>
    %1528 = arith.addf %1524, %1527 : vector<2x128xf32>
    %c469 = arith.constant 469 : index
    %1529 = memref.load %arg3[%c469] : memref<512xf32, #tpu.memory_space<smem>>
    %1530 = vector.broadcast %1529 : f32 to vector<2x128xf32>
    %1531 = arith.mulf %1530, %1415 : vector<2x128xf32>
    %1532 = arith.addf %1528, %1531 : vector<2x128xf32>
    %c470 = arith.constant 470 : index
    %1533 = memref.load %arg3[%c470] : memref<512xf32, #tpu.memory_space<smem>>
    %1534 = vector.broadcast %1533 : f32 to vector<2x128xf32>
    %1535 = arith.mulf %1534, %1431 : vector<2x128xf32>
    %1536 = arith.addf %1532, %1535 : vector<2x128xf32>
    %c471 = arith.constant 471 : index
    %1537 = memref.load %arg3[%c471] : memref<512xf32, #tpu.memory_space<smem>>
    %1538 = vector.broadcast %1537 : f32 to vector<2x128xf32>
    %1539 = arith.mulf %1538, %1447 : vector<2x128xf32>
    %1540 = arith.addf %1536, %1539 : vector<2x128xf32>
    %c472 = arith.constant 472 : index
    %1541 = memref.load %arg3[%c472] : memref<512xf32, #tpu.memory_space<smem>>
    %1542 = vector.broadcast %1541 : f32 to vector<2x128xf32>
    %1543 = arith.mulf %1542, %1335 : vector<2x128xf32>
    %c473 = arith.constant 473 : index
    %1544 = memref.load %arg3[%c473] : memref<512xf32, #tpu.memory_space<smem>>
    %1545 = vector.broadcast %1544 : f32 to vector<2x128xf32>
    %1546 = arith.mulf %1545, %1351 : vector<2x128xf32>
    %1547 = arith.addf %1543, %1546 : vector<2x128xf32>
    %c474 = arith.constant 474 : index
    %1548 = memref.load %arg3[%c474] : memref<512xf32, #tpu.memory_space<smem>>
    %1549 = vector.broadcast %1548 : f32 to vector<2x128xf32>
    %1550 = arith.mulf %1549, %1367 : vector<2x128xf32>
    %1551 = arith.addf %1547, %1550 : vector<2x128xf32>
    %c475 = arith.constant 475 : index
    %1552 = memref.load %arg3[%c475] : memref<512xf32, #tpu.memory_space<smem>>
    %1553 = vector.broadcast %1552 : f32 to vector<2x128xf32>
    %1554 = arith.mulf %1553, %1383 : vector<2x128xf32>
    %1555 = arith.addf %1551, %1554 : vector<2x128xf32>
    %c476 = arith.constant 476 : index
    %1556 = memref.load %arg3[%c476] : memref<512xf32, #tpu.memory_space<smem>>
    %1557 = vector.broadcast %1556 : f32 to vector<2x128xf32>
    %1558 = arith.mulf %1557, %1399 : vector<2x128xf32>
    %1559 = arith.addf %1555, %1558 : vector<2x128xf32>
    %c477 = arith.constant 477 : index
    %1560 = memref.load %arg3[%c477] : memref<512xf32, #tpu.memory_space<smem>>
    %1561 = vector.broadcast %1560 : f32 to vector<2x128xf32>
    %1562 = arith.mulf %1561, %1415 : vector<2x128xf32>
    %1563 = arith.addf %1559, %1562 : vector<2x128xf32>
    %c478 = arith.constant 478 : index
    %1564 = memref.load %arg3[%c478] : memref<512xf32, #tpu.memory_space<smem>>
    %1565 = vector.broadcast %1564 : f32 to vector<2x128xf32>
    %1566 = arith.mulf %1565, %1431 : vector<2x128xf32>
    %1567 = arith.addf %1563, %1566 : vector<2x128xf32>
    %c479 = arith.constant 479 : index
    %1568 = memref.load %arg3[%c479] : memref<512xf32, #tpu.memory_space<smem>>
    %1569 = vector.broadcast %1568 : f32 to vector<2x128xf32>
    %1570 = arith.mulf %1569, %1447 : vector<2x128xf32>
    %1571 = arith.addf %1567, %1570 : vector<2x128xf32>
    %1572 = arith.subf %1478, %1 : vector<2x128xf32>
    %1573 = arith.mulf %1572, %1572 : vector<2x128xf32>
    %1574 = arith.subf %1509, %3 : vector<2x128xf32>
    %1575 = arith.mulf %1574, %1574 : vector<2x128xf32>
    %1576 = arith.addf %1573, %1575 : vector<2x128xf32>
    %1577 = arith.subf %1540, %5 : vector<2x128xf32>
    %1578 = arith.mulf %1577, %1577 : vector<2x128xf32>
    %1579 = arith.addf %1576, %1578 : vector<2x128xf32>
    %1580 = arith.subf %1571, %7 : vector<2x128xf32>
    %1581 = arith.mulf %1580, %1580 : vector<2x128xf32>
    %1582 = arith.addf %1579, %1581 : vector<2x128xf32>
    %cst_29 = arith.constant -1.000000e+00 : f32
    %1583 = vector.broadcast %cst_29 : f32 to vector<2x128xf32>
    %1584 = arith.mulf %1582, %1583 : vector<2x128xf32>
    %cst_30 = arith.constant -1.000000e+02 : f32
    %cst_31 = arith.constant 1.000000e+02 : f32
    %1585 = vector.broadcast %cst_30 : f32 to vector<2x128xf32>
    %1586 = arith.maximumf %1585, %1584 : vector<2x128xf32>
    %1587 = vector.broadcast %cst_31 : f32 to vector<2x128xf32>
    %1588 = arith.minimumf %1587, %1586 : vector<2x128xf32>
    %c0_32 = arith.constant 0 : index
    %c2_33 = arith.constant 2 : index
    %c0_34 = arith.constant 0 : index
    %c0_35 = arith.constant 0 : index
    %1589 = vector.load %arg4[%c0_32, %c2_33, %c0_34, %c0_35] : memref<1x4x2x128xf32, #tpu.memory_space<vmem>>, vector<1x1x2x128xf32>
    %1590 = vector.shape_cast %1589 : vector<1x1x2x128xf32> to vector<2x128xf32>
    %1591 = vector.shape_cast %1588 : vector<2x128xf32> to vector<1x1x2x128xf32>
    tpu.vector_store %arg4[%c0_32, %c2_33, %c0_34, %c0_35], %1591 {strides = array<i32>} : memref<1x4x2x128xf32, #tpu.memory_space<vmem>>, vector<1x1x2x128xf32>,
    %c96 = arith.constant 96 : index
    %1592 = memref.load %arg3[%c96] : memref<512xf32, #tpu.memory_space<smem>>
    %1593 = vector.broadcast %1592 : f32 to vector<2x128xf32>
    %1594 = arith.mulf %1593, %1 : vector<2x128xf32>
    %c97 = arith.constant 97 : index
    %1595 = memref.load %arg3[%c97] : memref<512xf32, #tpu.memory_space<smem>>
    %1596 = vector.broadcast %1595 : f32 to vector<2x128xf32>
    %1597 = arith.mulf %1596, %3 : vector<2x128xf32>
    %1598 = arith.addf %1594, %1597 : vector<2x128xf32>
    %c98 = arith.constant 98 : index
    %1599 = memref.load %arg3[%c98] : memref<512xf32, #tpu.memory_space<smem>>
    %1600 = vector.broadcast %1599 : f32 to vector<2x128xf32>
    %1601 = arith.mulf %1600, %5 : vector<2x128xf32>
    %1602 = arith.addf %1598, %1601 : vector<2x128xf32>
    %c99 = arith.constant 99 : index
    %1603 = memref.load %arg3[%c99] : memref<512xf32, #tpu.memory_space<smem>>
    %1604 = vector.broadcast %1603 : f32 to vector<2x128xf32>
    %1605 = arith.mulf %1604, %7 : vector<2x128xf32>
    %1606 = arith.addf %1602, %1605 : vector<2x128xf32>
    %1607 = math.tanh %1606 : vector<2x128xf32>
    %c100 = arith.constant 100 : index
    %1608 = memref.load %arg3[%c100] : memref<512xf32, #tpu.memory_space<smem>>
    %1609 = vector.broadcast %1608 : f32 to vector<2x128xf32>
    %1610 = arith.mulf %1609, %1 : vector<2x128xf32>
    %c101 = arith.constant 101 : index
    %1611 = memref.load %arg3[%c101] : memref<512xf32, #tpu.memory_space<smem>>
    %1612 = vector.broadcast %1611 : f32 to vector<2x128xf32>
    %1613 = arith.mulf %1612, %3 : vector<2x128xf32>
    %1614 = arith.addf %1610, %1613 : vector<2x128xf32>
    %c102 = arith.constant 102 : index
    %1615 = memref.load %arg3[%c102] : memref<512xf32, #tpu.memory_space<smem>>
    %1616 = vector.broadcast %1615 : f32 to vector<2x128xf32>
    %1617 = arith.mulf %1616, %5 : vector<2x128xf32>
    %1618 = arith.addf %1614, %1617 : vector<2x128xf32>
    %c103 = arith.constant 103 : index
    %1619 = memref.load %arg3[%c103] : memref<512xf32, #tpu.memory_space<smem>>
    %1620 = vector.broadcast %1619 : f32 to vector<2x128xf32>
    %1621 = arith.mulf %1620, %7 : vector<2x128xf32>
    %1622 = arith.addf %1618, %1621 : vector<2x128xf32>
    %1623 = math.tanh %1622 : vector<2x128xf32>
    %c104 = arith.constant 104 : index
    %1624 = memref.load %arg3[%c104] : memref<512xf32, #tpu.memory_space<smem>>
    %1625 = vector.broadcast %1624 : f32 to vector<2x128xf32>
    %1626 = arith.mulf %1625, %1 : vector<2x128xf32>
    %c105 = arith.constant 105 : index
    %1627 = memref.load %arg3[%c105] : memref<512xf32, #tpu.memory_space<smem>>
    %1628 = vector.broadcast %1627 : f32 to vector<2x128xf32>
    %1629 = arith.mulf %1628, %3 : vector<2x128xf32>
    %1630 = arith.addf %1626, %1629 : vector<2x128xf32>
    %c106 = arith.constant 106 : index
    %1631 = memref.load %arg3[%c106] : memref<512xf32, #tpu.memory_space<smem>>
    %1632 = vector.broadcast %1631 : f32 to vector<2x128xf32>
    %1633 = arith.mulf %1632, %5 : vector<2x128xf32>
    %1634 = arith.addf %1630, %1633 : vector<2x128xf32>
    %c107 = arith.constant 107 : index
    %1635 = memref.load %arg3[%c107] : memref<512xf32, #tpu.memory_space<smem>>
    %1636 = vector.broadcast %1635 : f32 to vector<2x128xf32>
    %1637 = arith.mulf %1636, %7 : vector<2x128xf32>
    %1638 = arith.addf %1634, %1637 : vector<2x128xf32>
    %1639 = math.tanh %1638 : vector<2x128xf32>
    %c108 = arith.constant 108 : index
    %1640 = memref.load %arg3[%c108] : memref<512xf32, #tpu.memory_space<smem>>
    %1641 = vector.broadcast %1640 : f32 to vector<2x128xf32>
    %1642 = arith.mulf %1641, %1 : vector<2x128xf32>
    %c109 = arith.constant 109 : index
    %1643 = memref.load %arg3[%c109] : memref<512xf32, #tpu.memory_space<smem>>
    %1644 = vector.broadcast %1643 : f32 to vector<2x128xf32>
    %1645 = arith.mulf %1644, %3 : vector<2x128xf32>
    %1646 = arith.addf %1642, %1645 : vector<2x128xf32>
    %c110 = arith.constant 110 : index
    %1647 = memref.load %arg3[%c110] : memref<512xf32, #tpu.memory_space<smem>>
    %1648 = vector.broadcast %1647 : f32 to vector<2x128xf32>
    %1649 = arith.mulf %1648, %5 : vector<2x128xf32>
    %1650 = arith.addf %1646, %1649 : vector<2x128xf32>
    %c111 = arith.constant 111 : index
    %1651 = memref.load %arg3[%c111] : memref<512xf32, #tpu.memory_space<smem>>
    %1652 = vector.broadcast %1651 : f32 to vector<2x128xf32>
    %1653 = arith.mulf %1652, %7 : vector<2x128xf32>
    %1654 = arith.addf %1650, %1653 : vector<2x128xf32>
    %1655 = math.tanh %1654 : vector<2x128xf32>
    %c112 = arith.constant 112 : index
    %1656 = memref.load %arg3[%c112] : memref<512xf32, #tpu.memory_space<smem>>
    %1657 = vector.broadcast %1656 : f32 to vector<2x128xf32>
    %1658 = arith.mulf %1657, %1 : vector<2x128xf32>
    %c113 = arith.constant 113 : index
    %1659 = memref.load %arg3[%c113] : memref<512xf32, #tpu.memory_space<smem>>
    %1660 = vector.broadcast %1659 : f32 to vector<2x128xf32>
    %1661 = arith.mulf %1660, %3 : vector<2x128xf32>
    %1662 = arith.addf %1658, %1661 : vector<2x128xf32>
    %c114 = arith.constant 114 : index
    %1663 = memref.load %arg3[%c114] : memref<512xf32, #tpu.memory_space<smem>>
    %1664 = vector.broadcast %1663 : f32 to vector<2x128xf32>
    %1665 = arith.mulf %1664, %5 : vector<2x128xf32>
    %1666 = arith.addf %1662, %1665 : vector<2x128xf32>
    %c115 = arith.constant 115 : index
    %1667 = memref.load %arg3[%c115] : memref<512xf32, #tpu.memory_space<smem>>
    %1668 = vector.broadcast %1667 : f32 to vector<2x128xf32>
    %1669 = arith.mulf %1668, %7 : vector<2x128xf32>
    %1670 = arith.addf %1666, %1669 : vector<2x128xf32>
    %1671 = math.tanh %1670 : vector<2x128xf32>
    %c116 = arith.constant 116 : index
    %1672 = memref.load %arg3[%c116] : memref<512xf32, #tpu.memory_space<smem>>
    %1673 = vector.broadcast %1672 : f32 to vector<2x128xf32>
    %1674 = arith.mulf %1673, %1 : vector<2x128xf32>
    %c117 = arith.constant 117 : index
    %1675 = memref.load %arg3[%c117] : memref<512xf32, #tpu.memory_space<smem>>
    %1676 = vector.broadcast %1675 : f32 to vector<2x128xf32>
    %1677 = arith.mulf %1676, %3 : vector<2x128xf32>
    %1678 = arith.addf %1674, %1677 : vector<2x128xf32>
    %c118 = arith.constant 118 : index
    %1679 = memref.load %arg3[%c118] : memref<512xf32, #tpu.memory_space<smem>>
    %1680 = vector.broadcast %1679 : f32 to vector<2x128xf32>
    %1681 = arith.mulf %1680, %5 : vector<2x128xf32>
    %1682 = arith.addf %1678, %1681 : vector<2x128xf32>
    %c119 = arith.constant 119 : index
    %1683 = memref.load %arg3[%c119] : memref<512xf32, #tpu.memory_space<smem>>
    %1684 = vector.broadcast %1683 : f32 to vector<2x128xf32>
    %1685 = arith.mulf %1684, %7 : vector<2x128xf32>
    %1686 = arith.addf %1682, %1685 : vector<2x128xf32>
    %1687 = math.tanh %1686 : vector<2x128xf32>
    %c120 = arith.constant 120 : index
    %1688 = memref.load %arg3[%c120] : memref<512xf32, #tpu.memory_space<smem>>
    %1689 = vector.broadcast %1688 : f32 to vector<2x128xf32>
    %1690 = arith.mulf %1689, %1 : vector<2x128xf32>
    %c121 = arith.constant 121 : index
    %1691 = memref.load %arg3[%c121] : memref<512xf32, #tpu.memory_space<smem>>
    %1692 = vector.broadcast %1691 : f32 to vector<2x128xf32>
    %1693 = arith.mulf %1692, %3 : vector<2x128xf32>
    %1694 = arith.addf %1690, %1693 : vector<2x128xf32>
    %c122 = arith.constant 122 : index
    %1695 = memref.load %arg3[%c122] : memref<512xf32, #tpu.memory_space<smem>>
    %1696 = vector.broadcast %1695 : f32 to vector<2x128xf32>
    %1697 = arith.mulf %1696, %5 : vector<2x128xf32>
    %1698 = arith.addf %1694, %1697 : vector<2x128xf32>
    %c123 = arith.constant 123 : index
    %1699 = memref.load %arg3[%c123] : memref<512xf32, #tpu.memory_space<smem>>
    %1700 = vector.broadcast %1699 : f32 to vector<2x128xf32>
    %1701 = arith.mulf %1700, %7 : vector<2x128xf32>
    %1702 = arith.addf %1698, %1701 : vector<2x128xf32>
    %1703 = math.tanh %1702 : vector<2x128xf32>
    %c124 = arith.constant 124 : index
    %1704 = memref.load %arg3[%c124] : memref<512xf32, #tpu.memory_space<smem>>
    %1705 = vector.broadcast %1704 : f32 to vector<2x128xf32>
    %1706 = arith.mulf %1705, %1 : vector<2x128xf32>
    %c125 = arith.constant 125 : index
    %1707 = memref.load %arg3[%c125] : memref<512xf32, #tpu.memory_space<smem>>
    %1708 = vector.broadcast %1707 : f32 to vector<2x128xf32>
    %1709 = arith.mulf %1708, %3 : vector<2x128xf32>
    %1710 = arith.addf %1706, %1709 : vector<2x128xf32>
    %c126 = arith.constant 126 : index
    %1711 = memref.load %arg3[%c126] : memref<512xf32, #tpu.memory_space<smem>>
    %1712 = vector.broadcast %1711 : f32 to vector<2x128xf32>
    %1713 = arith.mulf %1712, %5 : vector<2x128xf32>
    %1714 = arith.addf %1710, %1713 : vector<2x128xf32>
    %c127 = arith.constant 127 : index
    %1715 = memref.load %arg3[%c127] : memref<512xf32, #tpu.memory_space<smem>>
    %1716 = vector.broadcast %1715 : f32 to vector<2x128xf32>
    %1717 = arith.mulf %1716, %7 : vector<2x128xf32>
    %1718 = arith.addf %1714, %1717 : vector<2x128xf32>
    %1719 = math.tanh %1718 : vector<2x128xf32>
    %c224 = arith.constant 224 : index
    %1720 = memref.load %arg3[%c224] : memref<512xf32, #tpu.memory_space<smem>>
    %1721 = vector.broadcast %1720 : f32 to vector<2x128xf32>
    %1722 = arith.mulf %1721, %1607 : vector<2x128xf32>
    %c225 = arith.constant 225 : index
    %1723 = memref.load %arg3[%c225] : memref<512xf32, #tpu.memory_space<smem>>
    %1724 = vector.broadcast %1723 : f32 to vector<2x128xf32>
    %1725 = arith.mulf %1724, %1623 : vector<2x128xf32>
    %1726 = arith.addf %1722, %1725 : vector<2x128xf32>
    %c226 = arith.constant 226 : index
    %1727 = memref.load %arg3[%c226] : memref<512xf32, #tpu.memory_space<smem>>
    %1728 = vector.broadcast %1727 : f32 to vector<2x128xf32>
    %1729 = arith.mulf %1728, %1639 : vector<2x128xf32>
    %1730 = arith.addf %1726, %1729 : vector<2x128xf32>
    %c227 = arith.constant 227 : index
    %1731 = memref.load %arg3[%c227] : memref<512xf32, #tpu.memory_space<smem>>
    %1732 = vector.broadcast %1731 : f32 to vector<2x128xf32>
    %1733 = arith.mulf %1732, %1655 : vector<2x128xf32>
    %1734 = arith.addf %1730, %1733 : vector<2x128xf32>
    %c228 = arith.constant 228 : index
    %1735 = memref.load %arg3[%c228] : memref<512xf32, #tpu.memory_space<smem>>
    %1736 = vector.broadcast %1735 : f32 to vector<2x128xf32>
    %1737 = arith.mulf %1736, %1671 : vector<2x128xf32>
    %1738 = arith.addf %1734, %1737 : vector<2x128xf32>
    %c229 = arith.constant 229 : index
    %1739 = memref.load %arg3[%c229] : memref<512xf32, #tpu.memory_space<smem>>
    %1740 = vector.broadcast %1739 : f32 to vector<2x128xf32>
    %1741 = arith.mulf %1740, %1687 : vector<2x128xf32>
    %1742 = arith.addf %1738, %1741 : vector<2x128xf32>
    %c230 = arith.constant 230 : index
    %1743 = memref.load %arg3[%c230] : memref<512xf32, #tpu.memory_space<smem>>
    %1744 = vector.broadcast %1743 : f32 to vector<2x128xf32>
    %1745 = arith.mulf %1744, %1703 : vector<2x128xf32>
    %1746 = arith.addf %1742, %1745 : vector<2x128xf32>
    %c231 = arith.constant 231 : index
    %1747 = memref.load %arg3[%c231] : memref<512xf32, #tpu.memory_space<smem>>
    %1748 = vector.broadcast %1747 : f32 to vector<2x128xf32>
    %1749 = arith.mulf %1748, %1719 : vector<2x128xf32>
    %1750 = arith.addf %1746, %1749 : vector<2x128xf32>
    %1751 = math.tanh %1750 : vector<2x128xf32>
    %c232 = arith.constant 232 : index
    %1752 = memref.load %arg3[%c232] : memref<512xf32, #tpu.memory_space<smem>>
    %1753 = vector.broadcast %1752 : f32 to vector<2x128xf32>
    %1754 = arith.mulf %1753, %1607 : vector<2x128xf32>
    %c233 = arith.constant 233 : index
    %1755 = memref.load %arg3[%c233] : memref<512xf32, #tpu.memory_space<smem>>
    %1756 = vector.broadcast %1755 : f32 to vector<2x128xf32>
    %1757 = arith.mulf %1756, %1623 : vector<2x128xf32>
    %1758 = arith.addf %1754, %1757 : vector<2x128xf32>
    %c234 = arith.constant 234 : index
    %1759 = memref.load %arg3[%c234] : memref<512xf32, #tpu.memory_space<smem>>
    %1760 = vector.broadcast %1759 : f32 to vector<2x128xf32>
    %1761 = arith.mulf %1760, %1639 : vector<2x128xf32>
    %1762 = arith.addf %1758, %1761 : vector<2x128xf32>
    %c235 = arith.constant 235 : index
    %1763 = memref.load %arg3[%c235] : memref<512xf32, #tpu.memory_space<smem>>
    %1764 = vector.broadcast %1763 : f32 to vector<2x128xf32>
    %1765 = arith.mulf %1764, %1655 : vector<2x128xf32>
    %1766 = arith.addf %1762, %1765 : vector<2x128xf32>
    %c236 = arith.constant 236 : index
    %1767 = memref.load %arg3[%c236] : memref<512xf32, #tpu.memory_space<smem>>
    %1768 = vector.broadcast %1767 : f32 to vector<2x128xf32>
    %1769 = arith.mulf %1768, %1671 : vector<2x128xf32>
    %1770 = arith.addf %1766, %1769 : vector<2x128xf32>
    %c237 = arith.constant 237 : index
    %1771 = memref.load %arg3[%c237] : memref<512xf32, #tpu.memory_space<smem>>
    %1772 = vector.broadcast %1771 : f32 to vector<2x128xf32>
    %1773 = arith.mulf %1772, %1687 : vector<2x128xf32>
    %1774 = arith.addf %1770, %1773 : vector<2x128xf32>
    %c238 = arith.constant 238 : index
    %1775 = memref.load %arg3[%c238] : memref<512xf32, #tpu.memory_space<smem>>
    %1776 = vector.broadcast %1775 : f32 to vector<2x128xf32>
    %1777 = arith.mulf %1776, %1703 : vector<2x128xf32>
    %1778 = arith.addf %1774, %1777 : vector<2x128xf32>
    %c239 = arith.constant 239 : index
    %1779 = memref.load %arg3[%c239] : memref<512xf32, #tpu.memory_space<smem>>
    %1780 = vector.broadcast %1779 : f32 to vector<2x128xf32>
    %1781 = arith.mulf %1780, %1719 : vector<2x128xf32>
    %1782 = arith.addf %1778, %1781 : vector<2x128xf32>
    %1783 = math.tanh %1782 : vector<2x128xf32>
    %c240 = arith.constant 240 : index
    %1784 = memref.load %arg3[%c240] : memref<512xf32, #tpu.memory_space<smem>>
    %1785 = vector.broadcast %1784 : f32 to vector<2x128xf32>
    %1786 = arith.mulf %1785, %1607 : vector<2x128xf32>
    %c241 = arith.constant 241 : index
    %1787 = memref.load %arg3[%c241] : memref<512xf32, #tpu.memory_space<smem>>
    %1788 = vector.broadcast %1787 : f32 to vector<2x128xf32>
    %1789 = arith.mulf %1788, %1623 : vector<2x128xf32>
    %1790 = arith.addf %1786, %1789 : vector<2x128xf32>
    %c242 = arith.constant 242 : index
    %1791 = memref.load %arg3[%c242] : memref<512xf32, #tpu.memory_space<smem>>
    %1792 = vector.broadcast %1791 : f32 to vector<2x128xf32>
    %1793 = arith.mulf %1792, %1639 : vector<2x128xf32>
    %1794 = arith.addf %1790, %1793 : vector<2x128xf32>
    %c243 = arith.constant 243 : index
    %1795 = memref.load %arg3[%c243] : memref<512xf32, #tpu.memory_space<smem>>
    %1796 = vector.broadcast %1795 : f32 to vector<2x128xf32>
    %1797 = arith.mulf %1796, %1655 : vector<2x128xf32>
    %1798 = arith.addf %1794, %1797 : vector<2x128xf32>
    %c244 = arith.constant 244 : index
    %1799 = memref.load %arg3[%c244] : memref<512xf32, #tpu.memory_space<smem>>
    %1800 = vector.broadcast %1799 : f32 to vector<2x128xf32>
    %1801 = arith.mulf %1800, %1671 : vector<2x128xf32>
    %1802 = arith.addf %1798, %1801 : vector<2x128xf32>
    %c245 = arith.constant 245 : index
    %1803 = memref.load %arg3[%c245] : memref<512xf32, #tpu.memory_space<smem>>
    %1804 = vector.broadcast %1803 : f32 to vector<2x128xf32>
    %1805 = arith.mulf %1804, %1687 : vector<2x128xf32>
    %1806 = arith.addf %1802, %1805 : vector<2x128xf32>
    %c246 = arith.constant 246 : index
    %1807 = memref.load %arg3[%c246] : memref<512xf32, #tpu.memory_space<smem>>
    %1808 = vector.broadcast %1807 : f32 to vector<2x128xf32>
    %1809 = arith.mulf %1808, %1703 : vector<2x128xf32>
    %1810 = arith.addf %1806, %1809 : vector<2x128xf32>
    %c247 = arith.constant 247 : index
    %1811 = memref.load %arg3[%c247] : memref<512xf32, #tpu.memory_space<smem>>
    %1812 = vector.broadcast %1811 : f32 to vector<2x128xf32>
    %1813 = arith.mulf %1812, %1719 : vector<2x128xf32>
    %1814 = arith.addf %1810, %1813 : vector<2x128xf32>
    %1815 = math.tanh %1814 : vector<2x128xf32>
    %c248 = arith.constant 248 : index
    %1816 = memref.load %arg3[%c248] : memref<512xf32, #tpu.memory_space<smem>>
    %1817 = vector.broadcast %1816 : f32 to vector<2x128xf32>
    %1818 = arith.mulf %1817, %1607 : vector<2x128xf32>
    %c249 = arith.constant 249 : index
    %1819 = memref.load %arg3[%c249] : memref<512xf32, #tpu.memory_space<smem>>
    %1820 = vector.broadcast %1819 : f32 to vector<2x128xf32>
    %1821 = arith.mulf %1820, %1623 : vector<2x128xf32>
    %1822 = arith.addf %1818, %1821 : vector<2x128xf32>
    %c250 = arith.constant 250 : index
    %1823 = memref.load %arg3[%c250] : memref<512xf32, #tpu.memory_space<smem>>
    %1824 = vector.broadcast %1823 : f32 to vector<2x128xf32>
    %1825 = arith.mulf %1824, %1639 : vector<2x128xf32>
    %1826 = arith.addf %1822, %1825 : vector<2x128xf32>
    %c251 = arith.constant 251 : index
    %1827 = memref.load %arg3[%c251] : memref<512xf32, #tpu.memory_space<smem>>
    %1828 = vector.broadcast %1827 : f32 to vector<2x128xf32>
    %1829 = arith.mulf %1828, %1655 : vector<2x128xf32>
    %1830 = arith.addf %1826, %1829 : vector<2x128xf32>
    %c252 = arith.constant 252 : index
    %1831 = memref.load %arg3[%c252] : memref<512xf32, #tpu.memory_space<smem>>
    %1832 = vector.broadcast %1831 : f32 to vector<2x128xf32>
    %1833 = arith.mulf %1832, %1671 : vector<2x128xf32>
    %1834 = arith.addf %1830, %1833 : vector<2x128xf32>
    %c253 = arith.constant 253 : index
    %1835 = memref.load %arg3[%c253] : memref<512xf32, #tpu.memory_space<smem>>
    %1836 = vector.broadcast %1835 : f32 to vector<2x128xf32>
    %1837 = arith.mulf %1836, %1687 : vector<2x128xf32>
    %1838 = arith.addf %1834, %1837 : vector<2x128xf32>
    %c254 = arith.constant 254 : index
    %1839 = memref.load %arg3[%c254] : memref<512xf32, #tpu.memory_space<smem>>
    %1840 = vector.broadcast %1839 : f32 to vector<2x128xf32>
    %1841 = arith.mulf %1840, %1703 : vector<2x128xf32>
    %1842 = arith.addf %1838, %1841 : vector<2x128xf32>
    %c255 = arith.constant 255 : index
    %1843 = memref.load %arg3[%c255] : memref<512xf32, #tpu.memory_space<smem>>
    %1844 = vector.broadcast %1843 : f32 to vector<2x128xf32>
    %1845 = arith.mulf %1844, %1719 : vector<2x128xf32>
    %1846 = arith.addf %1842, %1845 : vector<2x128xf32>
    %1847 = math.tanh %1846 : vector<2x128xf32>
    %c352 = arith.constant 352 : index
    %1848 = memref.load %arg3[%c352] : memref<512xf32, #tpu.memory_space<smem>>
    %1849 = vector.broadcast %1848 : f32 to vector<2x128xf32>
    %1850 = arith.mulf %1849, %1751 : vector<2x128xf32>
    %c353 = arith.constant 353 : index
    %1851 = memref.load %arg3[%c353] : memref<512xf32, #tpu.memory_space<smem>>
    %1852 = vector.broadcast %1851 : f32 to vector<2x128xf32>
    %1853 = arith.mulf %1852, %1783 : vector<2x128xf32>
    %1854 = arith.addf %1850, %1853 : vector<2x128xf32>
    %c354 = arith.constant 354 : index
    %1855 = memref.load %arg3[%c354] : memref<512xf32, #tpu.memory_space<smem>>
    %1856 = vector.broadcast %1855 : f32 to vector<2x128xf32>
    %1857 = arith.mulf %1856, %1815 : vector<2x128xf32>
    %1858 = arith.addf %1854, %1857 : vector<2x128xf32>
    %c355 = arith.constant 355 : index
    %1859 = memref.load %arg3[%c355] : memref<512xf32, #tpu.memory_space<smem>>
    %1860 = vector.broadcast %1859 : f32 to vector<2x128xf32>
    %1861 = arith.mulf %1860, %1847 : vector<2x128xf32>
    %1862 = arith.addf %1858, %1861 : vector<2x128xf32>
    %1863 = math.tanh %1862 : vector<2x128xf32>
    %c356 = arith.constant 356 : index
    %1864 = memref.load %arg3[%c356] : memref<512xf32, #tpu.memory_space<smem>>
    %1865 = vector.broadcast %1864 : f32 to vector<2x128xf32>
    %1866 = arith.mulf %1865, %1751 : vector<2x128xf32>
    %c357 = arith.constant 357 : index
    %1867 = memref.load %arg3[%c357] : memref<512xf32, #tpu.memory_space<smem>>
    %1868 = vector.broadcast %1867 : f32 to vector<2x128xf32>
    %1869 = arith.mulf %1868, %1783 : vector<2x128xf32>
    %1870 = arith.addf %1866, %1869 : vector<2x128xf32>
    %c358 = arith.constant 358 : index
    %1871 = memref.load %arg3[%c358] : memref<512xf32, #tpu.memory_space<smem>>
    %1872 = vector.broadcast %1871 : f32 to vector<2x128xf32>
    %1873 = arith.mulf %1872, %1815 : vector<2x128xf32>
    %1874 = arith.addf %1870, %1873 : vector<2x128xf32>
    %c359 = arith.constant 359 : index
    %1875 = memref.load %arg3[%c359] : memref<512xf32, #tpu.memory_space<smem>>
    %1876 = vector.broadcast %1875 : f32 to vector<2x128xf32>
    %1877 = arith.mulf %1876, %1847 : vector<2x128xf32>
    %1878 = arith.addf %1874, %1877 : vector<2x128xf32>
    %1879 = math.tanh %1878 : vector<2x128xf32>
    %c360 = arith.constant 360 : index
    %1880 = memref.load %arg3[%c360] : memref<512xf32, #tpu.memory_space<smem>>
    %1881 = vector.broadcast %1880 : f32 to vector<2x128xf32>
    %1882 = arith.mulf %1881, %1751 : vector<2x128xf32>
    %c361 = arith.constant 361 : index
    %1883 = memref.load %arg3[%c361] : memref<512xf32, #tpu.memory_space<smem>>
    %1884 = vector.broadcast %1883 : f32 to vector<2x128xf32>
    %1885 = arith.mulf %1884, %1783 : vector<2x128xf32>
    %1886 = arith.addf %1882, %1885 : vector<2x128xf32>
    %c362 = arith.constant 362 : index
    %1887 = memref.load %arg3[%c362] : memref<512xf32, #tpu.memory_space<smem>>
    %1888 = vector.broadcast %1887 : f32 to vector<2x128xf32>
    %1889 = arith.mulf %1888, %1815 : vector<2x128xf32>
    %1890 = arith.addf %1886, %1889 : vector<2x128xf32>
    %c363 = arith.constant 363 : index
    %1891 = memref.load %arg3[%c363] : memref<512xf32, #tpu.memory_space<smem>>
    %1892 = vector.broadcast %1891 : f32 to vector<2x128xf32>
    %1893 = arith.mulf %1892, %1847 : vector<2x128xf32>
    %1894 = arith.addf %1890, %1893 : vector<2x128xf32>
    %1895 = math.tanh %1894 : vector<2x128xf32>
    %c364 = arith.constant 364 : index
    %1896 = memref.load %arg3[%c364] : memref<512xf32, #tpu.memory_space<smem>>
    %1897 = vector.broadcast %1896 : f32 to vector<2x128xf32>
    %1898 = arith.mulf %1897, %1751 : vector<2x128xf32>
    %c365 = arith.constant 365 : index
    %1899 = memref.load %arg3[%c365] : memref<512xf32, #tpu.memory_space<smem>>
    %1900 = vector.broadcast %1899 : f32 to vector<2x128xf32>
    %1901 = arith.mulf %1900, %1783 : vector<2x128xf32>
    %1902 = arith.addf %1898, %1901 : vector<2x128xf32>
    %c366 = arith.constant 366 : index
    %1903 = memref.load %arg3[%c366] : memref<512xf32, #tpu.memory_space<smem>>
    %1904 = vector.broadcast %1903 : f32 to vector<2x128xf32>
    %1905 = arith.mulf %1904, %1815 : vector<2x128xf32>
    %1906 = arith.addf %1902, %1905 : vector<2x128xf32>
    %c367 = arith.constant 367 : index
    %1907 = memref.load %arg3[%c367] : memref<512xf32, #tpu.memory_space<smem>>
    %1908 = vector.broadcast %1907 : f32 to vector<2x128xf32>
    %1909 = arith.mulf %1908, %1847 : vector<2x128xf32>
    %1910 = arith.addf %1906, %1909 : vector<2x128xf32>
    %1911 = math.tanh %1910 : vector<2x128xf32>
    %c368 = arith.constant 368 : index
    %1912 = memref.load %arg3[%c368] : memref<512xf32, #tpu.memory_space<smem>>
    %1913 = vector.broadcast %1912 : f32 to vector<2x128xf32>
    %1914 = arith.mulf %1913, %1751 : vector<2x128xf32>
    %c369 = arith.constant 369 : index
    %1915 = memref.load %arg3[%c369] : memref<512xf32, #tpu.memory_space<smem>>
    %1916 = vector.broadcast %1915 : f32 to vector<2x128xf32>
    %1917 = arith.mulf %1916, %1783 : vector<2x128xf32>
    %1918 = arith.addf %1914, %1917 : vector<2x128xf32>
    %c370 = arith.constant 370 : index
    %1919 = memref.load %arg3[%c370] : memref<512xf32, #tpu.memory_space<smem>>
    %1920 = vector.broadcast %1919 : f32 to vector<2x128xf32>
    %1921 = arith.mulf %1920, %1815 : vector<2x128xf32>
    %1922 = arith.addf %1918, %1921 : vector<2x128xf32>
    %c371 = arith.constant 371 : index
    %1923 = memref.load %arg3[%c371] : memref<512xf32, #tpu.memory_space<smem>>
    %1924 = vector.broadcast %1923 : f32 to vector<2x128xf32>
    %1925 = arith.mulf %1924, %1847 : vector<2x128xf32>
    %1926 = arith.addf %1922, %1925 : vector<2x128xf32>
    %1927 = math.tanh %1926 : vector<2x128xf32>
    %c372 = arith.constant 372 : index
    %1928 = memref.load %arg3[%c372] : memref<512xf32, #tpu.memory_space<smem>>
    %1929 = vector.broadcast %1928 : f32 to vector<2x128xf32>
    %1930 = arith.mulf %1929, %1751 : vector<2x128xf32>
    %c373 = arith.constant 373 : index
    %1931 = memref.load %arg3[%c373] : memref<512xf32, #tpu.memory_space<smem>>
    %1932 = vector.broadcast %1931 : f32 to vector<2x128xf32>
    %1933 = arith.mulf %1932, %1783 : vector<2x128xf32>
    %1934 = arith.addf %1930, %1933 : vector<2x128xf32>
    %c374 = arith.constant 374 : index
    %1935 = memref.load %arg3[%c374] : memref<512xf32, #tpu.memory_space<smem>>
    %1936 = vector.broadcast %1935 : f32 to vector<2x128xf32>
    %1937 = arith.mulf %1936, %1815 : vector<2x128xf32>
    %1938 = arith.addf %1934, %1937 : vector<2x128xf32>
    %c375 = arith.constant 375 : index
    %1939 = memref.load %arg3[%c375] : memref<512xf32, #tpu.memory_space<smem>>
    %1940 = vector.broadcast %1939 : f32 to vector<2x128xf32>
    %1941 = arith.mulf %1940, %1847 : vector<2x128xf32>
    %1942 = arith.addf %1938, %1941 : vector<2x128xf32>
    %1943 = math.tanh %1942 : vector<2x128xf32>
    %c376 = arith.constant 376 : index
    %1944 = memref.load %arg3[%c376] : memref<512xf32, #tpu.memory_space<smem>>
    %1945 = vector.broadcast %1944 : f32 to vector<2x128xf32>
    %1946 = arith.mulf %1945, %1751 : vector<2x128xf32>
    %c377 = arith.constant 377 : index
    %1947 = memref.load %arg3[%c377] : memref<512xf32, #tpu.memory_space<smem>>
    %1948 = vector.broadcast %1947 : f32 to vector<2x128xf32>
    %1949 = arith.mulf %1948, %1783 : vector<2x128xf32>
    %1950 = arith.addf %1946, %1949 : vector<2x128xf32>
    %c378 = arith.constant 378 : index
    %1951 = memref.load %arg3[%c378] : memref<512xf32, #tpu.memory_space<smem>>
    %1952 = vector.broadcast %1951 : f32 to vector<2x128xf32>
    %1953 = arith.mulf %1952, %1815 : vector<2x128xf32>
    %1954 = arith.addf %1950, %1953 : vector<2x128xf32>
    %c379 = arith.constant 379 : index
    %1955 = memref.load %arg3[%c379] : memref<512xf32, #tpu.memory_space<smem>>
    %1956 = vector.broadcast %1955 : f32 to vector<2x128xf32>
    %1957 = arith.mulf %1956, %1847 : vector<2x128xf32>
    %1958 = arith.addf %1954, %1957 : vector<2x128xf32>
    %1959 = math.tanh %1958 : vector<2x128xf32>
    %c380 = arith.constant 380 : index
    %1960 = memref.load %arg3[%c380] : memref<512xf32, #tpu.memory_space<smem>>
    %1961 = vector.broadcast %1960 : f32 to vector<2x128xf32>
    %1962 = arith.mulf %1961, %1751 : vector<2x128xf32>
    %c381 = arith.constant 381 : index
    %1963 = memref.load %arg3[%c381] : memref<512xf32, #tpu.memory_space<smem>>
    %1964 = vector.broadcast %1963 : f32 to vector<2x128xf32>
    %1965 = arith.mulf %1964, %1783 : vector<2x128xf32>
    %1966 = arith.addf %1962, %1965 : vector<2x128xf32>
    %c382 = arith.constant 382 : index
    %1967 = memref.load %arg3[%c382] : memref<512xf32, #tpu.memory_space<smem>>
    %1968 = vector.broadcast %1967 : f32 to vector<2x128xf32>
    %1969 = arith.mulf %1968, %1815 : vector<2x128xf32>
    %1970 = arith.addf %1966, %1969 : vector<2x128xf32>
    %c383 = arith.constant 383 : index
    %1971 = memref.load %arg3[%c383] : memref<512xf32, #tpu.memory_space<smem>>
    %1972 = vector.broadcast %1971 : f32 to vector<2x128xf32>
    %1973 = arith.mulf %1972, %1847 : vector<2x128xf32>
    %1974 = arith.addf %1970, %1973 : vector<2x128xf32>
    %1975 = math.tanh %1974 : vector<2x128xf32>
    %c480 = arith.constant 480 : index
    %1976 = memref.load %arg3[%c480] : memref<512xf32, #tpu.memory_space<smem>>
    %1977 = vector.broadcast %1976 : f32 to vector<2x128xf32>
    %1978 = arith.mulf %1977, %1863 : vector<2x128xf32>
    %c481 = arith.constant 481 : index
    %1979 = memref.load %arg3[%c481] : memref<512xf32, #tpu.memory_space<smem>>
    %1980 = vector.broadcast %1979 : f32 to vector<2x128xf32>
    %1981 = arith.mulf %1980, %1879 : vector<2x128xf32>
    %1982 = arith.addf %1978, %1981 : vector<2x128xf32>
    %c482 = arith.constant 482 : index
    %1983 = memref.load %arg3[%c482] : memref<512xf32, #tpu.memory_space<smem>>
    %1984 = vector.broadcast %1983 : f32 to vector<2x128xf32>
    %1985 = arith.mulf %1984, %1895 : vector<2x128xf32>
    %1986 = arith.addf %1982, %1985 : vector<2x128xf32>
    %c483 = arith.constant 483 : index
    %1987 = memref.load %arg3[%c483] : memref<512xf32, #tpu.memory_space<smem>>
    %1988 = vector.broadcast %1987 : f32 to vector<2x128xf32>
    %1989 = arith.mulf %1988, %1911 : vector<2x128xf32>
    %1990 = arith.addf %1986, %1989 : vector<2x128xf32>
    %c484 = arith.constant 484 : index
    %1991 = memref.load %arg3[%c484] : memref<512xf32, #tpu.memory_space<smem>>
    %1992 = vector.broadcast %1991 : f32 to vector<2x128xf32>
    %1993 = arith.mulf %1992, %1927 : vector<2x128xf32>
    %1994 = arith.addf %1990, %1993 : vector<2x128xf32>
    %c485 = arith.constant 485 : index
    %1995 = memref.load %arg3[%c485] : memref<512xf32, #tpu.memory_space<smem>>
    %1996 = vector.broadcast %1995 : f32 to vector<2x128xf32>
    %1997 = arith.mulf %1996, %1943 : vector<2x128xf32>
    %1998 = arith.addf %1994, %1997 : vector<2x128xf32>
    %c486 = arith.constant 486 : index
    %1999 = memref.load %arg3[%c486] : memref<512xf32, #tpu.memory_space<smem>>
    %2000 = vector.broadcast %1999 : f32 to vector<2x128xf32>
    %2001 = arith.mulf %2000, %1959 : vector<2x128xf32>
    %2002 = arith.addf %1998, %2001 : vector<2x128xf32>
    %c487 = arith.constant 487 : index
    %2003 = memref.load %arg3[%c487] : memref<512xf32, #tpu.memory_space<smem>>
    %2004 = vector.broadcast %2003 : f32 to vector<2x128xf32>
    %2005 = arith.mulf %2004, %1975 : vector<2x128xf32>
    %2006 = arith.addf %2002, %2005 : vector<2x128xf32>
    %c488 = arith.constant 488 : index
    %2007 = memref.load %arg3[%c488] : memref<512xf32, #tpu.memory_space<smem>>
    %2008 = vector.broadcast %2007 : f32 to vector<2x128xf32>
    %2009 = arith.mulf %2008, %1863 : vector<2x128xf32>
    %c489 = arith.constant 489 : index
    %2010 = memref.load %arg3[%c489] : memref<512xf32, #tpu.memory_space<smem>>
    %2011 = vector.broadcast %2010 : f32 to vector<2x128xf32>
    %2012 = arith.mulf %2011, %1879 : vector<2x128xf32>
    %2013 = arith.addf %2009, %2012 : vector<2x128xf32>
    %c490 = arith.constant 490 : index
    %2014 = memref.load %arg3[%c490] : memref<512xf32, #tpu.memory_space<smem>>
    %2015 = vector.broadcast %2014 : f32 to vector<2x128xf32>
    %2016 = arith.mulf %2015, %1895 : vector<2x128xf32>
    %2017 = arith.addf %2013, %2016 : vector<2x128xf32>
    %c491 = arith.constant 491 : index
    %2018 = memref.load %arg3[%c491] : memref<512xf32, #tpu.memory_space<smem>>
    %2019 = vector.broadcast %2018 : f32 to vector<2x128xf32>
    %2020 = arith.mulf %2019, %1911 : vector<2x128xf32>
    %2021 = arith.addf %2017, %2020 : vector<2x128xf32>
    %c492 = arith.constant 492 : index
    %2022 = memref.load %arg3[%c492] : memref<512xf32, #tpu.memory_space<smem>>
    %2023 = vector.broadcast %2022 : f32 to vector<2x128xf32>
    %2024 = arith.mulf %2023, %1927 : vector<2x128xf32>
    %2025 = arith.addf %2021, %2024 : vector<2x128xf32>
    %c493 = arith.constant 493 : index
    %2026 = memref.load %arg3[%c493] : memref<512xf32, #tpu.memory_space<smem>>
    %2027 = vector.broadcast %2026 : f32 to vector<2x128xf32>
    %2028 = arith.mulf %2027, %1943 : vector<2x128xf32>
    %2029 = arith.addf %2025, %2028 : vector<2x128xf32>
    %c494 = arith.constant 494 : index
    %2030 = memref.load %arg3[%c494] : memref<512xf32, #tpu.memory_space<smem>>
    %2031 = vector.broadcast %2030 : f32 to vector<2x128xf32>
    %2032 = arith.mulf %2031, %1959 : vector<2x128xf32>
    %2033 = arith.addf %2029, %2032 : vector<2x128xf32>
    %c495 = arith.constant 495 : index
    %2034 = memref.load %arg3[%c495] : memref<512xf32, #tpu.memory_space<smem>>
    %2035 = vector.broadcast %2034 : f32 to vector<2x128xf32>
    %2036 = arith.mulf %2035, %1975 : vector<2x128xf32>
    %2037 = arith.addf %2033, %2036 : vector<2x128xf32>
    %c496 = arith.constant 496 : index
    %2038 = memref.load %arg3[%c496] : memref<512xf32, #tpu.memory_space<smem>>
    %2039 = vector.broadcast %2038 : f32 to vector<2x128xf32>
    %2040 = arith.mulf %2039, %1863 : vector<2x128xf32>
    %c497 = arith.constant 497 : index
    %2041 = memref.load %arg3[%c497] : memref<512xf32, #tpu.memory_space<smem>>
    %2042 = vector.broadcast %2041 : f32 to vector<2x128xf32>
    %2043 = arith.mulf %2042, %1879 : vector<2x128xf32>
    %2044 = arith.addf %2040, %2043 : vector<2x128xf32>
    %c498 = arith.constant 498 : index
    %2045 = memref.load %arg3[%c498] : memref<512xf32, #tpu.memory_space<smem>>
    %2046 = vector.broadcast %2045 : f32 to vector<2x128xf32>
    %2047 = arith.mulf %2046, %1895 : vector<2x128xf32>
    %2048 = arith.addf %2044, %2047 : vector<2x128xf32>
    %c499 = arith.constant 499 : index
    %2049 = memref.load %arg3[%c499] : memref<512xf32, #tpu.memory_space<smem>>
    %2050 = vector.broadcast %2049 : f32 to vector<2x128xf32>
    %2051 = arith.mulf %2050, %1911 : vector<2x128xf32>
    %2052 = arith.addf %2048, %2051 : vector<2x128xf32>
    %c500 = arith.constant 500 : index
    %2053 = memref.load %arg3[%c500] : memref<512xf32, #tpu.memory_space<smem>>
    %2054 = vector.broadcast %2053 : f32 to vector<2x128xf32>
    %2055 = arith.mulf %2054, %1927 : vector<2x128xf32>
    %2056 = arith.addf %2052, %2055 : vector<2x128xf32>
    %c501 = arith.constant 501 : index
    %2057 = memref.load %arg3[%c501] : memref<512xf32, #tpu.memory_space<smem>>
    %2058 = vector.broadcast %2057 : f32 to vector<2x128xf32>
    %2059 = arith.mulf %2058, %1943 : vector<2x128xf32>
    %2060 = arith.addf %2056, %2059 : vector<2x128xf32>
    %c502 = arith.constant 502 : index
    %2061 = memref.load %arg3[%c502] : memref<512xf32, #tpu.memory_space<smem>>
    %2062 = vector.broadcast %2061 : f32 to vector<2x128xf32>
    %2063 = arith.mulf %2062, %1959 : vector<2x128xf32>
    %2064 = arith.addf %2060, %2063 : vector<2x128xf32>
    %c503 = arith.constant 503 : index
    %2065 = memref.load %arg3[%c503] : memref<512xf32, #tpu.memory_space<smem>>
    %2066 = vector.broadcast %2065 : f32 to vector<2x128xf32>
    %2067 = arith.mulf %2066, %1975 : vector<2x128xf32>
    %2068 = arith.addf %2064, %2067 : vector<2x128xf32>
    %c504 = arith.constant 504 : index
    %2069 = memref.load %arg3[%c504] : memref<512xf32, #tpu.memory_space<smem>>
    %2070 = vector.broadcast %2069 : f32 to vector<2x128xf32>
    %2071 = arith.mulf %2070, %1863 : vector<2x128xf32>
    %c505 = arith.constant 505 : index
    %2072 = memref.load %arg3[%c505] : memref<512xf32, #tpu.memory_space<smem>>
    %2073 = vector.broadcast %2072 : f32 to vector<2x128xf32>
    %2074 = arith.mulf %2073, %1879 : vector<2x128xf32>
    %2075 = arith.addf %2071, %2074 : vector<2x128xf32>
    %c506 = arith.constant 506 : index
    %2076 = memref.load %arg3[%c506] : memref<512xf32, #tpu.memory_space<smem>>
    %2077 = vector.broadcast %2076 : f32 to vector<2x128xf32>
    %2078 = arith.mulf %2077, %1895 : vector<2x128xf32>
    %2079 = arith.addf %2075, %2078 : vector<2x128xf32>
    %c507 = arith.constant 507 : index
    %2080 = memref.load %arg3[%c507] : memref<512xf32, #tpu.memory_space<smem>>
    %2081 = vector.broadcast %2080 : f32 to vector<2x128xf32>
    %2082 = arith.mulf %2081, %1911 : vector<2x128xf32>
    %2083 = arith.addf %2079, %2082 : vector<2x128xf32>
    %c508 = arith.constant 508 : index
    %2084 = memref.load %arg3[%c508] : memref<512xf32, #tpu.memory_space<smem>>
    %2085 = vector.broadcast %2084 : f32 to vector<2x128xf32>
    %2086 = arith.mulf %2085, %1927 : vector<2x128xf32>
    %2087 = arith.addf %2083, %2086 : vector<2x128xf32>
    %c509 = arith.constant 509 : index
    %2088 = memref.load %arg3[%c509] : memref<512xf32, #tpu.memory_space<smem>>
    %2089 = vector.broadcast %2088 : f32 to vector<2x128xf32>
    %2090 = arith.mulf %2089, %1943 : vector<2x128xf32>
    %2091 = arith.addf %2087, %2090 : vector<2x128xf32>
    %c510 = arith.constant 510 : index
    %2092 = memref.load %arg3[%c510] : memref<512xf32, #tpu.memory_space<smem>>
    %2093 = vector.broadcast %2092 : f32 to vector<2x128xf32>
    %2094 = arith.mulf %2093, %1959 : vector<2x128xf32>
    %2095 = arith.addf %2091, %2094 : vector<2x128xf32>
    %c511 = arith.constant 511 : index
    %2096 = memref.load %arg3[%c511] : memref<512xf32, #tpu.memory_space<smem>>
    %2097 = vector.broadcast %2096 : f32 to vector<2x128xf32>
    %2098 = arith.mulf %2097, %1975 : vector<2x128xf32>
    %2099 = arith.addf %2095, %2098 : vector<2x128xf32>
    %2100 = arith.subf %2006, %1 : vector<2x128xf32>
    %2101 = arith.mulf %2100, %2100 : vector<2x128xf32>
    %2102 = arith.subf %2037, %3 : vector<2x128xf32>
    %2103 = arith.mulf %2102, %2102 : vector<2x128xf32>
    %2104 = arith.addf %2101, %2103 : vector<2x128xf32>
    %2105 = arith.subf %2068, %5 : vector<2x128xf32>
    %2106 = arith.mulf %2105, %2105 : vector<2x128xf32>
    %2107 = arith.addf %2104, %2106 : vector<2x128xf32>
    %2108 = arith.subf %2099, %7 : vector<2x128xf32>
    %2109 = arith.mulf %2108, %2108 : vector<2x128xf32>
    %2110 = arith.addf %2107, %2109 : vector<2x128xf32>
    %cst_36 = arith.constant -1.000000e+00 : f32
    %2111 = vector.broadcast %cst_36 : f32 to vector<2x128xf32>
    %2112 = arith.mulf %2110, %2111 : vector<2x128xf32>
    %cst_37 = arith.constant -1.000000e+02 : f32
    %cst_38 = arith.constant 1.000000e+02 : f32
    %2113 = vector.broadcast %cst_37 : f32 to vector<2x128xf32>
    %2114 = arith.maximumf %2113, %2112 : vector<2x128xf32>
    %2115 = vector.broadcast %cst_38 : f32 to vector<2x128xf32>
    %2116 = arith.minimumf %2115, %2114 : vector<2x128xf32>
    %c0_39 = arith.constant 0 : index
    %c3_40 = arith.constant 3 : index
    %c0_41 = arith.constant 0 : index
    %c0_42 = arith.constant 0 : index
    %2117 = vector.load %arg4[%c0_39, %c3_40, %c0_41, %c0_42] : memref<1x4x2x128xf32, #tpu.memory_space<vmem>>, vector<1x1x2x128xf32>
    %2118 = vector.shape_cast %2117 : vector<1x1x2x128xf32> to vector<2x128xf32>
    %2119 = vector.shape_cast %2116 : vector<2x128xf32> to vector<1x1x2x128xf32>
    tpu.vector_store %arg4[%c0_39, %c3_40, %c0_41, %c0_42], %2119 {strides = array<i32>} : memref<1x4x2x128xf32, #tpu.memory_space<vmem>>, vector<1x1x2x128xf32>,
    return
  }
  func.func @transform_0(%arg0: i32, %arg1: i32) -> (i32, i32, i32, i32) {
    %c0_i32 = arith.constant 0 : i32
    %c0_i32_0 = arith.constant 0 : i32
    %c0_i32_1 = arith.constant 0 : i32
    return %arg0, %c0_i32, %arg1, %c0_i32_0 : i32, i32, i32, i32
  }
  func.func @transform_1(%arg0: i32, %arg1: i32) -> i32 {
    %c0_i32 = arith.constant 0 : i32
    %c0_i32_0 = arith.constant 0 : i32
    return %c0_i32 : i32
  }
  func.func @transform_2(%arg0: i32, %arg1: i32) -> (i32, i32, i32, i32) {
    %c0_i32 = arith.constant 0 : i32
    %c0_i32_0 = arith.constant 0 : i32
    %c0_i32_1 = arith.constant 0 : i32
    return %arg0, %c0_i32, %arg1, %c0_i32_0 : i32, i32, i32, i32
  }
}

</mosaic_0001>

<llo_original>
// kernel: tpu_custom_call.1
$region0: #{tpu_custom_call.1}
  #allocation0 [shape = 'u32[]', space=smem, size = 0x4, offset = 0x4, fixed_abs, tag = 'smem constant byte address 0x4 - core index']
  #allocation1 [shape = 'u32[144,128]{1,0:T(1,128)}', space=vmem, size = 0x12000, scoped, tag = 'internal scratch']
  %s0 = inlined_call_operand.hbm [shape: f32[2,4,2,128], index: 0, kind: input, shape index: {}]
  %s1 = inlined_call_operand.hbm [shape: f32[512], index: 1, kind: input, shape index: {}]
  %s2 = inlined_call_operand.hbm [shape: f32[2,4,2,128], index: 2, kind: output, shape index: {}]
  %s3 = sld [smem:[#allocation0]]
  $region49: #{tpu_custom_call.1} parent=0
    _
  %s5 = ssub.s32 1, %s3
  %s6 = scalar_select 0, %s5, %s3
  $region1: #{tpu_custom_call.1} parent=0
    #allocation2 [shape = 'u8[8192]{0}', space=vmem, size = 0x2000, scoped, tag = 'input window, operand 0']
    #allocation3 [shape = 's32[2]{0}', space=sflag, size = 0x8, scoped, tag = 'scoped memory for tpu_custom_call.1']
    #allocation4 [shape = 's32[2]{0}', space=sflag, size = 0x8, scoped, tag = 'scoped memory for tpu_custom_call.1']
    #allocation5 [shape = 's32[2]{0}', space=sflag, size = 0x8, scoped, tag = 'scoped memory for tpu_custom_call.1']
    #allocation6 [shape = 'u8[2048]{0}', space=smem, size = 0x800, scoped, tag = 'input window, operand 1, single buffered']
    #allocation7 [shape = 'u8[8192]{0}', space=vmem, size = 0x2000, scoped, tag = 'output window, operand 0']
    %7 = vsyncpa [#allocation3], 0
    %s8 = scalar_lea.sflag [#allocation3], 1
    %9 = vsyncpa %s8, 0
    %10 = vsyncpa [#allocation5], 0
    %11 = vsyncpa [#allocation4], 0
    %s12 = scalar_lea.sflag [#allocation4], 1
    %13 = vsyncpa %s12, 0
    loop: start=0, step=1, limit=4
    $region2: #{tpu_custom_call.1} parent=1 // loop_pre_header
      _
    $region3: #{tpu_custom_call.1} parent=1 // loop_header
      %s15 = sphi 0, %s19
      %p16 = scmp.ge.s32.totalorder %s15, 4
      %s22 = sphi 0, %s34
      %s23 = sphi 0, %s30
      %s24 = sphi 0, %s22
      %s25 = sphi 0, %s23
      %s26 = sphi 0, %s24
      %s27 = sphi 0, %s25
      %s39 = sphi 0, %s41
      %s42 = sphi 0, %s39
      %s43 = sphi 0, %s42
      %s59 = sphi 0, %s43
      %s63 = sphi 0, %s63
      %s65 = sphi 0, %s63
      %s66 = sphi 0, %s65
      %s80 = sphi 0, %s66
      %s88 = sphi 0, %s90
      %s91 = sphi 0, %s88
      %s92 = sphi 0, %s91
      %s108 = sphi 0, %s92
    $region4: #{tpu_custom_call.1} parent=1 // loop_header_branch
      %18 = sbr.rel (%p16) target = $region8
    $region5: #{tpu_custom_call.1} parent=1 // loop_body
      %s20 = ssub.s32 %s15, 1
      %s21 = ssub.s32 %s15, 2
      %s28 = sadd.s32 1, %s23
      %p29 = scmp.ge.s32.totalorder %s28, 1
      %s30 = scalar_select %p29, 0, %s28
      %s31 = sadd.s32 1, %s22
      %s32 = scalar_select %p29, %s31, %s22
      %p33 = scmp.ge.s32.totalorder %s32, 2
      %s34 = scalar_select %p33, 0, %s32
      %s35 = ssub.s32 %s22, %s34
      %s36 = ssub.s32 %s23, %s30
      %s37 = sor.u32 %s35, %s36
      %p38 = scmp.eq.s32.totalorder %s37, 0
      %s40 = sadd.s32 %s39, 1
      %s41 = scalar_select %p38, %s39, %s40
      %p44 = pneg %p38
      %p45 = scmp.eq.s32.totalorder %s15, 1
      %p46 = por %p44, %p45
      %p47 = scmp.ne.s32.totalorder %s39, %s42
      %p48 = scmp.eq.s32.totalorder %s15, 0
      %p49 = por %p47, %p48
      %p50 = scmp.ne.s32.totalorder %s39, %s42
      %p51 = scmp.eq.s32.totalorder %s20, 1
      %p52 = por %p50, %p51
      %p53 = scmp.ne.s32.totalorder %s42, %s43
      %p54 = scmp.eq.s32.totalorder %s20, 0
      %p55 = por %p53, %p54
      %p56 = scmp.ne.s32.totalorder %s42, %s43
      %p57 = scmp.eq.s32.totalorder %s21, 1
      %p58 = por %p56, %p57
      %p60 = scmp.ne.s32.totalorder %s43, %s59
      %p61 = scmp.eq.s32.totalorder %s21, 0
      %p62 = por %p60, %p61
      %s64 = sadd.s32 %s63, 1
      %p67 = scmp.eq.s32.totalorder %s15, 1
      %p68 = scmp.ne.s32.totalorder %s63, %s65
      %p69 = scmp.eq.s32.totalorder %s15, 0
      %p70 = por %p68, %p69
      %p71 = scmp.ne.s32.totalorder %s63, %s65
      %p72 = scmp.eq.s32.totalorder %s20, 1
      %p73 = por %p71, %p72
      %p74 = scmp.ne.s32.totalorder %s65, %s66
      %p75 = scmp.eq.s32.totalorder %s20, 0
      %p76 = por %p74, %p75
      %p77 = scmp.ne.s32.totalorder %s65, %s66
      %p78 = scmp.eq.s32.totalorder %s21, 1
      %p79 = por %p77, %p78
      %p81 = scmp.ne.s32.totalorder %s66, %s80
      %p82 = scmp.eq.s32.totalorder %s21, 0
      %p83 = por %p81, %p82
      %s84 = ssub.s32 %s22, %s34
      %s85 = ssub.s32 %s23, %s30
      %s86 = sor.u32 %s84, %s85
      %p87 = scmp.eq.s32.totalorder %s86, 0
      %s89 = sadd.s32 %s88, 1
      %s90 = scalar_select %p87, %s88, %s89
      %p93 = pneg %p87
      %p94 = scmp.eq.s32.totalorder %s15, 1
      %p95 = por %p93, %p94
      %p96 = scmp.ne.s32.totalorder %s88, %s91
      %p97 = scmp.eq.s32.totalorder %s15, 0
      %p98 = por %p96, %p97
      %p99 = scmp.ne.s32.totalorder %s88, %s91
      %p100 = scmp.eq.s32.totalorder %s20, 1
      %p101 = por %p99, %p100
      %p102 = scmp.ne.s32.totalorder %s91, %s92
      %p103 = scmp.eq.s32.totalorder %s20, 0
      %p104 = por %p102, %p103
      %p105 = scmp.ne.s32.totalorder %s91, %s92
      %p106 = scmp.eq.s32.totalorder %s21, 1
      %p107 = por %p105, %p106
      %p109 = scmp.ne.s32.totalorder %s92, %s108
      %p110 = scmp.eq.s32.totalorder %s21, 0
      %p111 = por %p109, %p110
      %p112 = scmp.le.s32.totalorder 1, %s15
      %p113 = scmp.lt.s32.totalorder %s15, 3
      %p114 = pnand %p112, %p113
      %p115 = pneg %p114
      // Predicated region
      $region9: #{tpu_custom_call.1} parent=5 // pred_check
        _
      $region10: #{tpu_custom_call.1} parent=5 // pred_check_branch
        %117 = sbr.rel (%p114) target = $region12
      $region11: #{tpu_custom_call.1} parent=5 // pred_region
        %s118 = ssub.s32 %s15, 1
        // Predicated region
        $region13: #{tpu_custom_call.1} parent=11 // pred_check
          %p119 = pneg %p76
        $region14: #{tpu_custom_call.1} parent=11 // pred_check_branch
          %121 = sbr.rel (%p119) target = $region16
        $region15: #{tpu_custom_call.1} parent=11 // pred_region
          %s123 = ssub.s32 64, 64
          %124 = vsyncadd [#allocation5], %s123
          %127 = dma.hbm_to_smem %s1, 64, [#allocation6], [#allocation5]
        $region16: #{tpu_custom_call.1} parent=11 // pred_fallthru
          _
      $region12: #{tpu_custom_call.1} parent=5 // pred_fallthru
        _
      %p128 = scmp.lt.s32.totalorder %s15, 2
      // Predicated region
      $region17: #{tpu_custom_call.1} parent=5 // pred_check
        %p129 = pneg %p128
      $region18: #{tpu_custom_call.1} parent=5 // pred_check_branch
        %131 = sbr.rel (%p129) target = $region20
      $region19: #{tpu_custom_call.1} parent=5 // pred_region
        // Predicated region
        $region21: #{tpu_custom_call.1} parent=19 // pred_check
          %p132 = pneg %p49
        $region22: #{tpu_custom_call.1} parent=19 // pred_check_branch
          %134 = sbr.rel (%p132) target = $region24
        $region23: #{tpu_custom_call.1} parent=19 // pred_region
          %s135 = sand.u32 %s39, 1
          %s136 = scalar_lea.sflag [#allocation3], %s135
          %s137 = sand.u32 %s39, 1
          %s138 = smul.addr %s137, 8
          %s139 = scalar_lea.vmem [#allocation2], %s138
          %s141 = ssub.s32 128, 128
          %142 = vsyncadd %s136, %s141
          %s143 = smul.addr %s22, 4
          %s144 = sadd.s32 %s23, %s143
          %s145 = smul.addr %s144, 32
          %s146 = scalar_lea.hbm %s0, %s145
          %s147 = sshll.u32 %s139, 4
          %s148 = int_to_ptr.vmem [resolvable:$true] %s147
          %153 = dma.hbm_to_vmem [thread:$0]  %s146, 128, %s148, %s136, 32, 32, 2
        $region24: #{tpu_custom_call.1} parent=19 // pred_fallthru
          _
      $region20: #{tpu_custom_call.1} parent=5 // pred_fallthru
        _
      %p154 = scmp.le.s32.totalorder 1, %s15
      %p155 = scmp.lt.s32.totalorder %s15, 3
      %p156 = pnand %p154, %p155
      %p157 = pneg %p156
      // Predicated region
      $region25: #{tpu_custom_call.1} parent=5 // pred_check
        _
      $region26: #{tpu_custom_call.1} parent=5 // pred_check_branch
        %159 = sbr.rel (%p156) target = $region28
      $region27: #{tpu_custom_call.1} parent=5 // pred_region
        %s160 = ssub.s32 %s15, 1
        %s161 = sand.u32 %s42, 1
        %s162 = scalar_lea.sflag [#allocation3], %s161
        %s163 = sand.u32 %s42, 1
        %s164 = smul.addr %s163, 8
        %s165 = scalar_lea.vmem [#allocation2], %s164
        // Predicated region
        $region29: #{tpu_custom_call.1} parent=27 // pred_check
          %p166 = pneg %p55
        $region30: #{tpu_custom_call.1} parent=27 // pred_check_branch
          %168 = sbr.rel (%p166) target = $region32
        $region31: #{tpu_custom_call.1} parent=27 // pred_region
          %169 = dma.done %s162, 128
        $region32: #{tpu_custom_call.1} parent=27 // pred_fallthru
          _
        // Predicated region
        $region33: #{tpu_custom_call.1} parent=27 // pred_check
          %p170 = pneg %p76
        $region34: #{tpu_custom_call.1} parent=27 // pred_check_branch
          %172 = sbr.rel (%p170) target = $region36
        $region35: #{tpu_custom_call.1} parent=27 // pred_region
          %173 = dma.done [#allocation5], 64
        $region36: #{tpu_custom_call.1} parent=27 // pred_fallthru
          _
        %174 = sfence
        %s175 = sand.u32 %s42, 1
        %s176 = scalar_lea.sflag [#allocation3], %s175
        %s177 = sand.u32 %s42, 1
        %s178 = smul.addr %s177, 8
        %s179 = scalar_lea.vmem [#allocation2], %s178
        %p180 = pneg %p55
        %p181 = pneg %p52
        %p182 = pneg %p76
        %p183 = pneg %p73
        %p184 = pneg %p104
        %p185 = pneg %p101
        %s186 = sand.u32 %s91, 1
        %s187 = scalar_lea.sflag [#allocation4], %s186
        %s188 = sand.u32 %s91, 1
        %s189 = smul.addr %s188, 8
        %s190 = scalar_lea.vmem [#allocation7], %s189
        %v191 = vld [vmem:[%s165] sm:$0x3]
        %s192 = scalar_lea.vmem %s165, 2 [#allocation2]
        %v193 = vld [vmem:[%s192] sm:$0x3]
        %s194 = scalar_lea.vmem %s165, 4 [#allocation2]
        %v195 = vld [vmem:[%s194] sm:$0x3]
        %s196 = scalar_lea.vmem %s165, 6 [#allocation2]
        %v197 = vld [vmem:[%s196] sm:$0x3]
        %s198 = sld [smem:[#allocation6]]
        %v199 = vstv %s198
        %v200 = vmul.f32 %v199, %v191
        %s201 = sld [smem:[#allocation6 + $0x1]]
        %v202 = vstv %s201
        %v203 = vmul.f32 %v202, %v193
        %v204 = vadd.f32 %v200, %v203
        %s205 = sld [smem:[#allocation6 + $0x2]]
        %v206 = vstv %s205
        %v207 = vmul.f32 %v206, %v195
        %v208 = vadd.f32 %v204, %v207
        %s209 = sld [smem:[#allocation6 + $0x3]]
        %v210 = vstv %s209
        %v211 = vmul.f32 %v210, %v197
        %v212 = vadd.f32 %v208, %v211
        %v213 = vtanh.pop %v212
        %s214 = sld [smem:[#allocation6 + $0x4]]
        %v215 = vstv %s214
        %v216 = vmul.f32 %v215, %v191
        %s217 = sld [smem:[#allocation6 + $0x5]]
        %v218 = vstv %s217
        %v219 = vmul.f32 %v218, %v193
        %v220 = vadd.f32 %v216, %v219
        %s221 = sld [smem:[#allocation6 + $0x6]]
        %v222 = vstv %s221
        %v223 = vmul.f32 %v222, %v195
        %v224 = vadd.f32 %v220, %v223
        %s225 = sld [smem:[#allocation6 + $0x7]]
        %v226 = vstv %s225
        %v227 = vmul.f32 %v226, %v197
        %v228 = vadd.f32 %v224, %v227
        %v229 = vtanh.pop %v228
        %s230 = sld [smem:[#allocation6 + $0x8]]
        %v231 = vstv %s230
        %v232 = vmul.f32 %v231, %v191
        %s233 = sld [smem:[#allocation6 + $0x9]]
        %v234 = vstv %s233
        %v235 = vmul.f32 %v234, %v193
        %v236 = vadd.f32 %v232, %v235
        %s237 = sld [smem:[#allocation6 + $0xa]]
        %v238 = vstv %s237
        %v239 = vmul.f32 %v238, %v195
        %v240 = vadd.f32 %v236, %v239
        %s241 = sld [smem:[#allocation6 + $0xb]]
        %v242 = vstv %s241
        %v243 = vmul.f32 %v242, %v197
        %v244 = vadd.f32 %v240, %v243
        %v245 = vtanh.pop %v244
        %s246 = sld [smem:[#allocation6 + $0xc]]
        %v247 = vstv %s246
        %v248 = vmul.f32 %v247, %v191
        %s249 = sld [smem:[#allocation6 + $0xd]]
        %v250 = vstv %s249
        %v251 = vmul.f32 %v250, %v193
        %v252 = vadd.f32 %v248, %v251
        %s253 = sld [smem:[#allocation6 + $0xe]]
        %v254 = vstv %s253
        %v255 = vmul.f32 %v254, %v195
        %v256 = vadd.f32 %v252, %v255
        %s257 = sld [smem:[#allocation6 + $0xf]]
        %v258 = vstv %s257
        %v259 = vmul.f32 %v258, %v197
        %v260 = vadd.f32 %v256, %v259
        %v261 = vtanh.pop %v260
        %s262 = sld [smem:[#allocation6 + $0x10]]
        %v263 = vstv %s262
        %v264 = vmul.f32 %v263, %v191
        %s265 = sld [smem:[#allocation6 + $0x11]]
        %v266 = vstv %s265
        %v267 = vmul.f32 %v266, %v193
        %v268 = vadd.f32 %v264, %v267
        %s269 = sld [smem:[#allocation6 + $0x12]]
        %v270 = vstv %s269
        %v271 = vmul.f32 %v270, %v195
        %v272 = vadd.f32 %v268, %v271
        %s273 = sld [smem:[#allocation6 + $0x13]]
        %v274 = vstv %s273
        %v275 = vmul.f32 %v274, %v197
        %v276 = vadd.f32 %v272, %v275
        %v277 = vtanh.pop %v276
        %s278 = sld [smem:[#allocation6 + $0x14]]
        %v279 = vstv %s278
        %v280 = vmul.f32 %v279, %v191
        %s281 = sld [smem:[#allocation6 + $0x15]]
        %v282 = vstv %s281
        %v283 = vmul.f32 %v282, %v193
        %v284 = vadd.f32 %v280, %v283
        %s285 = sld [smem:[#allocation6 + $0x16]]
        %v286 = vstv %s285
        %v287 = vmul.f32 %v286, %v195
        %v288 = vadd.f32 %v284, %v287
        %s289 = sld [smem:[#allocation6 + $0x17]]
        %v290 = vstv %s289
        %v291 = vmul.f32 %v290, %v197
        %v292 = vadd.f32 %v288, %v291
        %v293 = vtanh.pop %v292
        %s294 = sld [smem:[#allocation6 + $0x18]]
        %v295 = vstv %s294
        %v296 = vmul.f32 %v295, %v191
        %s297 = sld [smem:[#allocation6 + $0x19]]
        %v298 = vstv %s297
        %v299 = vmul.f32 %v298, %v193
        %v300 = vadd.f32 %v296, %v299
        %s301 = sld [smem:[#allocation6 + $0x1a]]
        %v302 = vstv %s301
        %v303 = vmul.f32 %v302, %v195
        %v304 = vadd.f32 %v300, %v303
        %s305 = sld [smem:[#allocation6 + $0x1b]]
        %v306 = vstv %s305
        %v307 = vmul.f32 %v306, %v197
        %v308 = vadd.f32 %v304, %v307
        %v309 = vtanh.pop %v308
        %s310 = sld [smem:[#allocation6 + $0x1c]]
        %v311 = vstv %s310
        %v312 = vmul.f32 %v311, %v191
        %s313 = sld [smem:[#allocation6 + $0x1d]]
        %v314 = vstv %s313
        %v315 = vmul.f32 %v314, %v193
        %v316 = vadd.f32 %v312, %v315
        %s317 = sld [smem:[#allocation6 + $0x1e]]
        %v318 = vstv %s317
        %v319 = vmul.f32 %v318, %v195
        %v320 = vadd.f32 %v316, %v319
        %s321 = sld [smem:[#allocation6 + $0x1f]]
        %v322 = vstv %s321
        %v323 = vmul.f32 %v322, %v197
        %v324 = vadd.f32 %v320, %v323
        %v325 = vtanh.pop %v324
        %s326 = sld [smem:[#allocation6 + $0x80]]
        %v327 = vstv %s326
        %v328 = vmul.f32 %v327, %v213
        %s329 = sld [smem:[#allocation6 + $0x81]]
        %v330 = vstv %s329
        %v331 = vmul.f32 %v330, %v229
        %v332 = vadd.f32 %v328, %v331
        %s333 = sld [smem:[#allocation6 + $0x82]]
        %v334 = vstv %s333
        %v335 = vmul.f32 %v334, %v245
        %v336 = vadd.f32 %v332, %v335
        %s337 = sld [smem:[#allocation6 + $0x83]]
        %v338 = vstv %s337
        %v339 = vmul.f32 %v338, %v261
        %v340 = vadd.f32 %v336, %v339
        %s341 = sld [smem:[#allocation6 + $0x84]]
        %v342 = vstv %s341
        %v343 = vmul.f32 %v342, %v277
        %v344 = vadd.f32 %v340, %v343
        %s345 = sld [smem:[#allocation6 + $0x85]]
        %v346 = vstv %s345
        %v347 = vmul.f32 %v346, %v293
        %v348 = vadd.f32 %v344, %v347
        %s349 = sld [smem:[#allocation6 + $0x86]]
        %v350 = vstv %s349
        %v351 = vmul.f32 %v350, %v309
        %v352 = vadd.f32 %v348, %v351
        %s353 = sld [smem:[#allocation6 + $0x87]]
        %v354 = vstv %s353
        %v355 = vmul.f32 %v354, %v325
        %v356 = vadd.f32 %v352, %v355
        %v357 = vtanh.pop %v356
        %s358 = sld [smem:[#allocation6 + $0x88]]
        %v359 = vstv %s358
        %v360 = vmul.f32 %v359, %v213
        %s361 = sld [smem:[#allocation6 + $0x89]]
        %v362 = vstv %s361
        %v363 = vmul.f32 %v362, %v229
        %v364 = vadd.f32 %v360, %v363
        %s365 = sld [smem:[#allocation6 + $0x8a]]
        %v366 = vstv %s365
        %v367 = vmul.f32 %v366, %v245
        %v368 = vadd.f32 %v364, %v367
        %s369 = sld [smem:[#allocation6 + $0x8b]]
        %v370 = vstv %s369
        %v371 = vmul.f32 %v370, %v261
        %v372 = vadd.f32 %v368, %v371
        %s373 = sld [smem:[#allocation6 + $0x8c]]
        %v374 = vstv %s373
        %v375 = vmul.f32 %v374, %v277
        %v376 = vadd.f32 %v372, %v375
        %s377 = sld [smem:[#allocation6 + $0x8d]]
        %v378 = vstv %s377
        %v379 = vmul.f32 %v378, %v293
        %v380 = vadd.f32 %v376, %v379
        %s381 = sld [smem:[#allocation6 + $0x8e]]
        %v382 = vstv %s381
        %v383 = vmul.f32 %v382, %v309
        %v384 = vadd.f32 %v380, %v383
        %s385 = sld [smem:[#allocation6 + $0x8f]]
        %v386 = vstv %s385
        %v387 = vmul.f32 %v386, %v325
        %v388 = vadd.f32 %v384, %v387
        %v389 = vtanh.pop %v388
        %s390 = sld [smem:[#allocation6 + $0x90]]
        %v391 = vstv %s390
        %v392 = vmul.f32 %v391, %v213
        %s393 = sld [smem:[#allocation6 + $0x91]]
        %v394 = vstv %s393
        %v395 = vmul.f32 %v394, %v229
        %v396 = vadd.f32 %v392, %v395
        %s397 = sld [smem:[#allocation6 + $0x92]]
        %v398 = vstv %s397
        %v399 = vmul.f32 %v398, %v245
        %v400 = vadd.f32 %v396, %v399
        %s401 = sld [smem:[#allocation6 + $0x93]]
        %v402 = vstv %s401
        %v403 = vmul.f32 %v402, %v261
        %v404 = vadd.f32 %v400, %v403
        %s405 = sld [smem:[#allocation6 + $0x94]]
        %v406 = vstv %s405
        %v407 = vmul.f32 %v406, %v277
        %v408 = vadd.f32 %v404, %v407
        %s409 = sld [smem:[#allocation6 + $0x95]]
        %v410 = vstv %s409
        %v411 = vmul.f32 %v410, %v293
        %v412 = vadd.f32 %v408, %v411
        %s413 = sld [smem:[#allocation6 + $0x96]]
        %v414 = vstv %s413
        %v415 = vmul.f32 %v414, %v309
        %v416 = vadd.f32 %v412, %v415
        %s417 = sld [smem:[#allocation6 + $0x97]]
        %v418 = vstv %s417
        %v419 = vmul.f32 %v418, %v325
        %v420 = vadd.f32 %v416, %v419
        %v421 = vtanh.pop %v420
        %s422 = sld [smem:[#allocation6 + $0x98]]
        %v423 = vstv %s422
        %v424 = vmul.f32 %v423, %v213
        %s425 = sld [smem:[#allocation6 + $0x99]]
        %v426 = vstv %s425
        %v427 = vmul.f32 %v426, %v229
        %v428 = vadd.f32 %v424, %v427
        %s429 = sld [smem:[#allocation6 + $0x9a]]
        %v430 = vstv %s429
        %v431 = vmul.f32 %v430, %v245
        %v432 = vadd.f32 %v428, %v431
        %s433 = sld [smem:[#allocation6 + $0x9b]]
        %v434 = vstv %s433
        %v435 = vmul.f32 %v434, %v261
        %v436 = vadd.f32 %v432, %v435
        %s437 = sld [smem:[#allocation6 + $0x9c]]
        %v438 = vstv %s437
        %v439 = vmul.f32 %v438, %v277
        %v440 = vadd.f32 %v436, %v439
        %s441 = sld [smem:[#allocation6 + $0x9d]]
        %v442 = vstv %s441
        %v443 = vmul.f32 %v442, %v293
        %v444 = vadd.f32 %v440, %v443
        %s445 = sld [smem:[#allocation6 + $0x9e]]
        %v446 = vstv %s445
        %v447 = vmul.f32 %v446, %v309
        %v448 = vadd.f32 %v444, %v447
        %s449 = sld [smem:[#allocation6 + $0x9f]]
        %v450 = vstv %s449
        %v451 = vmul.f32 %v450, %v325
        %v452 = vadd.f32 %v448, %v451
        %v453 = vtanh.pop %v452
        %s454 = sld [smem:[#allocation6 + $0x100]]
        %v455 = vstv %s454
        %v456 = vmul.f32 %v455, %v357
        %s457 = sld [smem:[#allocation6 + $0x101]]
        %v458 = vstv %s457
        %v459 = vmul.f32 %v458, %v389
        %v460 = vadd.f32 %v456, %v459
        %s461 = sld [smem:[#allocation6 + $0x102]]
        %v462 = vstv %s461
        %v463 = vmul.f32 %v462, %v421
        %v464 = vadd.f32 %v460, %v463
        %s465 = sld [smem:[#allocation6 + $0x103]]
        %v466 = vstv %s465
        %v467 = vmul.f32 %v466, %v453
        %v468 = vadd.f32 %v464, %v467
        %v469 = vtanh.pop %v468
        %s470 = sld [smem:[#allocation6 + $0x104]]
        %v471 = vstv %s470
        %v472 = vmul.f32 %v471, %v357
        %s473 = sld [smem:[#allocation6 + $0x105]]
        %v474 = vstv %s473
        %v475 = vmul.f32 %v474, %v389
        %v476 = vadd.f32 %v472, %v475
        %s477 = sld [smem:[#allocation6 + $0x106]]
        %v478 = vstv %s477
        %v479 = vmul.f32 %v478, %v421
        %v480 = vadd.f32 %v476, %v479
        %s481 = sld [smem:[#allocation6 + $0x107]]
        %v482 = vstv %s481
        %v483 = vmul.f32 %v482, %v453
        %v484 = vadd.f32 %v480, %v483
        %v485 = vtanh.pop %v484
        %s486 = sld [smem:[#allocation6 + $0x108]]
        %v487 = vstv %s486
        %v488 = vmul.f32 %v487, %v357
        %s489 = sld [smem:[#allocation6 + $0x109]]
        %v490 = vstv %s489
        %v491 = vmul.f32 %v490, %v389
        %v492 = vadd.f32 %v488, %v491
        %s493 = sld [smem:[#allocation6 + $0x10a]]
        %v494 = vstv %s493
        %v495 = vmul.f32 %v494, %v421
        %v496 = vadd.f32 %v492, %v495
        %s497 = sld [smem:[#allocation6 + $0x10b]]
        %v498 = vstv %s497
        %v499 = vmul.f32 %v498, %v453
        %v500 = vadd.f32 %v496, %v499
        %v501 = vtanh.pop %v500
        %s502 = sld [smem:[#allocation6 + $0x10c]]
        %v503 = vstv %s502
        %v504 = vmul.f32 %v503, %v357
        %s505 = sld [smem:[#allocation6 + $0x10d]]
        %v506 = vstv %s505
        %v507 = vmul.f32 %v506, %v389
        %v508 = vadd.f32 %v504, %v507
        %s509 = sld [smem:[#allocation6 + $0x10e]]
        %v510 = vstv %s509
        %v511 = vmul.f32 %v510, %v421
        %v512 = vadd.f32 %v508, %v511
        %s513 = sld [smem:[#allocation6 + $0x10f]]
        %v514 = vstv %s513
        %v515 = vmul.f32 %v514, %v453
        %v516 = vadd.f32 %v512, %v515
        %v517 = vtanh.pop %v516
        %s518 = sld [smem:[#allocation6 + $0x110]]
        %v519 = vstv %s518
        %v520 = vmul.f32 %v519, %v357
        %s521 = sld [smem:[#allocation6 + $0x111]]
        %v522 = vstv %s521
        %v523 = vmul.f32 %v522, %v389
        %v524 = vadd.f32 %v520, %v523
        %s525 = sld [smem:[#allocation6 + $0x112]]
        %v526 = vstv %s525
        %v527 = vmul.f32 %v526, %v421
        %v528 = vadd.f32 %v524, %v527
        %s529 = sld [smem:[#allocation6 + $0x113]]
        %v530 = vstv %s529
        %v531 = vmul.f32 %v530, %v453
        %v532 = vadd.f32 %v528, %v531
        %v533 = vtanh.pop %v532
        %s534 = sld [smem:[#allocation6 + $0x114]]
        %v535 = vstv %s534
        %v536 = vmul.f32 %v535, %v357
        %s537 = sld [smem:[#allocation6 + $0x115]]
        %v538 = vstv %s537
        %v539 = vmul.f32 %v538, %v389
        %v540 = vadd.f32 %v536, %v539
        %s541 = sld [smem:[#allocation6 + $0x116]]
        %v542 = vstv %s541
        %v543 = vmul.f32 %v542, %v421
        %v544 = vadd.f32 %v540, %v543
        %s545 = sld [smem:[#allocation6 + $0x117]]
        %v546 = vstv %s545
        %v547 = vmul.f32 %v546, %v453
        %v548 = vadd.f32 %v544, %v547
        %v549 = vtanh.pop %v548
        %s550 = sld [smem:[#allocation6 + $0x118]]
        %v551 = vstv %s550
        %v552 = vmul.f32 %v551, %v357
        %s553 = sld [smem:[#allocation6 + $0x119]]
        %v554 = vstv %s553
        %v555 = vmul.f32 %v554, %v389
        %v556 = vadd.f32 %v552, %v555
        %s557 = sld [smem:[#allocation6 + $0x11a]]
        %v558 = vstv %s557
        %v559 = vmul.f32 %v558, %v421
        %v560 = vadd.f32 %v556, %v559
        %s561 = sld [smem:[#allocation6 + $0x11b]]
        %v562 = vstv %s561
        %v563 = vmul.f32 %v562, %v453
        %v564 = vadd.f32 %v560, %v563
        %v565 = vtanh.pop %v564
        %s566 = sld [smem:[#allocation6 + $0x11c]]
        %v567 = vstv %s566
        %v568 = vmul.f32 %v567, %v357
        %s569 = sld [smem:[#allocation6 + $0x11d]]
        %v570 = vstv %s569
        %v571 = vmul.f32 %v570, %v389
        %v572 = vadd.f32 %v568, %v571
        %s573 = sld [smem:[#allocation6 + $0x11e]]
        %v574 = vstv %s573
        %v575 = vmul.f32 %v574, %v421
        %v576 = vadd.f32 %v572, %v575
        %s577 = sld [smem:[#allocation6 + $0x11f]]
        %v578 = vstv %s577
        %v579 = vmul.f32 %v578, %v453
        %v580 = vadd.f32 %v576, %v579
        %v581 = vtanh.pop %v580
        %s582 = sld [smem:[#allocation6 + $0x180]]
        %v583 = vstv %s582
        %v584 = vmul.f32 %v583, %v469
        %s585 = sld [smem:[#allocation6 + $0x181]]
        %v586 = vstv %s585
        %v587 = vmul.f32 %v586, %v485
        %v588 = vadd.f32 %v584, %v587
        %s589 = sld [smem:[#allocation6 + $0x182]]
        %v590 = vstv %s589
        %v591 = vmul.f32 %v590, %v501
        %v592 = vadd.f32 %v588, %v591
        %s593 = sld [smem:[#allocation6 + $0x183]]
        %v594 = vstv %s593
        %v595 = vmul.f32 %v594, %v517
        %v596 = vadd.f32 %v592, %v595
        %s597 = sld [smem:[#allocation6 + $0x184]]
        %v598 = vstv %s597
        %v599 = vmul.f32 %v598, %v533
        %v600 = vadd.f32 %v596, %v599
        %s601 = sld [smem:[#allocation6 + $0x185]]
        %v602 = vstv %s601
        %v603 = vmul.f32 %v602, %v549
        %v604 = vadd.f32 %v600, %v603
        %s605 = sld [smem:[#allocation6 + $0x186]]
        %v606 = vstv %s605
        %v607 = vmul.f32 %v606, %v565
        %v608 = vadd.f32 %v604, %v607
        %s609 = sld [smem:[#allocation6 + $0x187]]
        %v610 = vstv %s609
        %v611 = vmul.f32 %v610, %v581
        %v612 = vadd.f32 %v608, %v611
        %s613 = sld [smem:[#allocation6 + $0x188]]
        %v614 = vstv %s613
        %v615 = vmul.f32 %v614, %v469
        %s616 = sld [smem:[#allocation6 + $0x189]]
        %v617 = vstv %s616
        %v618 = vmul.f32 %v617, %v485
        %v619 = vadd.f32 %v615, %v618
        %s620 = sld [smem:[#allocation6 + $0x18a]]
        %v621 = vstv %s620
        %v622 = vmul.f32 %v621, %v501
        %v623 = vadd.f32 %v619, %v622
        %s624 = sld [smem:[#allocation6 + $0x18b]]
        %v625 = vstv %s624
        %v626 = vmul.f32 %v625, %v517
        %v627 = vadd.f32 %v623, %v626
        %s628 = sld [smem:[#allocation6 + $0x18c]]
        %v629 = vstv %s628
        %v630 = vmul.f32 %v629, %v533
        %v631 = vadd.f32 %v627, %v630
        %s632 = sld [smem:[#allocation6 + $0x18d]]
        %v633 = vstv %s632
        %v634 = vmul.f32 %v633, %v549
        %v635 = vadd.f32 %v631, %v634
        %s636 = sld [smem:[#allocation6 + $0x18e]]
        %v637 = vstv %s636
        %v638 = vmul.f32 %v637, %v565
        %v639 = vadd.f32 %v635, %v638
        %s640 = sld [smem:[#allocation6 + $0x18f]]
        %v641 = vstv %s640
        %v642 = vmul.f32 %v641, %v581
        %v643 = vadd.f32 %v639, %v642
        %s644 = sld [smem:[#allocation6 + $0x190]]
        %v645 = vstv %s644
        %v646 = vmul.f32 %v645, %v469
        %s647 = sld [smem:[#allocation6 + $0x191]]
        %v648 = vstv %s647
        %v649 = vmul.f32 %v648, %v485
        %v650 = vadd.f32 %v646, %v649
        %s651 = sld [smem:[#allocation6 + $0x192]]
        %v652 = vstv %s651
        %v653 = vmul.f32 %v652, %v501
        %v654 = vadd.f32 %v650, %v653
        %s655 = sld [smem:[#allocation6 + $0x193]]
        %v656 = vstv %s655
        %v657 = vmul.f32 %v656, %v517
        %v658 = vadd.f32 %v654, %v657
        %s659 = sld [smem:[#allocation6 + $0x194]]
        %v660 = vstv %s659
        %v661 = vmul.f32 %v660, %v533
        %v662 = vadd.f32 %v658, %v661
        %s663 = sld [smem:[#allocation6 + $0x195]]
        %v664 = vstv %s663
        %v665 = vmul.f32 %v664, %v549
        %v666 = vadd.f32 %v662, %v665
        %s667 = sld [smem:[#allocation6 + $0x196]]
        %v668 = vstv %s667
        %v669 = vmul.f32 %v668, %v565
        %v670 = vadd.f32 %v666, %v669
        %s671 = sld [smem:[#allocation6 + $0x197]]
        %v672 = vstv %s671
        %v673 = vmul.f32 %v672, %v581
        %v674 = vadd.f32 %v670, %v673
        %s675 = sld [smem:[#allocation6 + $0x198]]
        %v676 = vstv %s675
        %v677 = vmul.f32 %v676, %v469
        %s678 = sld [smem:[#allocation6 + $0x199]]
        %v679 = vstv %s678
        %v680 = vmul.f32 %v679, %v485
        %v681 = vadd.f32 %v677, %v680
        %s682 = sld [smem:[#allocation6 + $0x19a]]
        %v683 = vstv %s682
        %v684 = vmul.f32 %v683, %v501
        %v685 = vadd.f32 %v681, %v684
        %s686 = sld [smem:[#allocation6 + $0x19b]]
        %v687 = vstv %s686
        %v688 = vmul.f32 %v687, %v517
        %v689 = vadd.f32 %v685, %v688
        %s690 = sld [smem:[#allocation6 + $0x19c]]
        %v691 = vstv %s690
        %v692 = vmul.f32 %v691, %v533
        %v693 = vadd.f32 %v689, %v692
        %s694 = sld [smem:[#allocation6 + $0x19d]]
        %v695 = vstv %s694
        %v696 = vmul.f32 %v695, %v549
        %v697 = vadd.f32 %v693, %v696
        %s698 = sld [smem:[#allocation6 + $0x19e]]
        %v699 = vstv %s698
        %v700 = vmul.f32 %v699, %v565
        %v701 = vadd.f32 %v697, %v700
        %s702 = sld [smem:[#allocation6 + $0x19f]]
        %v703 = vstv %s702
        %v704 = vmul.f32 %v703, %v581
        %v705 = vadd.f32 %v701, %v704
        %v706 = vsub.f32 %v612, %v191
        %v707 = vmul.f32 %v706, %v706
        %v708 = vsub.f32 %v643, %v193
        %v709 = vmul.f32 %v708, %v708
        %v710 = vadd.f32 %v707, %v709
        %v711 = vsub.f32 %v674, %v195
        %v712 = vmul.f32 %v711, %v711
        %v713 = vadd.f32 %v710, %v712
        %v714 = vsub.f32 %v705, %v197
        %v715 = vmul.f32 %v714, %v714
        %v716 = vadd.f32 %v713, %v715
        %v717 = vmul.f32 %v716, -1.0
        %v718 = vmax.f32 %v717, -100.0
        %v719 = vmin.f32 %v718, 100.0
        %720 = vst [vmem:[%s190] sm:$0x3] %v719
        %s721 = sld [smem:[#allocation6 + $0x20]]
        %v722 = vstv %s721
        %v723 = vmul.f32 %v722, %v191
        %s724 = sld [smem:[#allocation6 + $0x21]]
        %v725 = vstv %s724
        %v726 = vmul.f32 %v725, %v193
        %v727 = vadd.f32 %v723, %v726
        %s728 = sld [smem:[#allocation6 + $0x22]]
        %v729 = vstv %s728
        %v730 = vmul.f32 %v729, %v195
        %v731 = vadd.f32 %v727, %v730
        %s732 = sld [smem:[#allocation6 + $0x23]]
        %v733 = vstv %s732
        %v734 = vmul.f32 %v733, %v197
        %v735 = vadd.f32 %v731, %v734
        %v736 = vtanh.pop %v735
        %s737 = sld [smem:[#allocation6 + $0x24]]
        %v738 = vstv %s737
        %v739 = vmul.f32 %v738, %v191
        %s740 = sld [smem:[#allocation6 + $0x25]]
        %v741 = vstv %s740
        %v742 = vmul.f32 %v741, %v193
        %v743 = vadd.f32 %v739, %v742
        %s744 = sld [smem:[#allocation6 + $0x26]]
        %v745 = vstv %s744
        %v746 = vmul.f32 %v745, %v195
        %v747 = vadd.f32 %v743, %v746
        %s748 = sld [smem:[#allocation6 + $0x27]]
        %v749 = vstv %s748
        %v750 = vmul.f32 %v749, %v197
        %v751 = vadd.f32 %v747, %v750
        %v752 = vtanh.pop %v751
        %s753 = sld [smem:[#allocation6 + $0x28]]
        %v754 = vstv %s753
        %v755 = vmul.f32 %v754, %v191
        %s756 = sld [smem:[#allocation6 + $0x29]]
        %v757 = vstv %s756
        %v758 = vmul.f32 %v757, %v193
        %v759 = vadd.f32 %v755, %v758
        %s760 = sld [smem:[#allocation6 + $0x2a]]
        %v761 = vstv %s760
        %v762 = vmul.f32 %v761, %v195
        %v763 = vadd.f32 %v759, %v762
        %s764 = sld [smem:[#allocation6 + $0x2b]]
        %v765 = vstv %s764
        %v766 = vmul.f32 %v765, %v197
        %v767 = vadd.f32 %v763, %v766
        %v768 = vtanh.pop %v767
        %s769 = sld [smem:[#allocation6 + $0x2c]]
        %v770 = vstv %s769
        %v771 = vmul.f32 %v770, %v191
        %s772 = sld [smem:[#allocation6 + $0x2d]]
        %v773 = vstv %s772
        %v774 = vmul.f32 %v773, %v193
        %v775 = vadd.f32 %v771, %v774
        %s776 = sld [smem:[#allocation6 + $0x2e]]
        %v777 = vstv %s776
        %v778 = vmul.f32 %v777, %v195
        %v779 = vadd.f32 %v775, %v778
        %s780 = sld [smem:[#allocation6 + $0x2f]]
        %v781 = vstv %s780
        %v782 = vmul.f32 %v781, %v197
        %v783 = vadd.f32 %v779, %v782
        %v784 = vtanh.pop %v783
        %s785 = sld [smem:[#allocation6 + $0x30]]
        %v786 = vstv %s785
        %v787 = vmul.f32 %v786, %v191
        %s788 = sld [smem:[#allocation6 + $0x31]]
        %v789 = vstv %s788
        %v790 = vmul.f32 %v789, %v193
        %v791 = vadd.f32 %v787, %v790
        %s792 = sld [smem:[#allocation6 + $0x32]]
        %v793 = vstv %s792
        %v794 = vmul.f32 %v793, %v195
        %v795 = vadd.f32 %v791, %v794
        %s796 = sld [smem:[#allocation6 + $0x33]]
        %v797 = vstv %s796
        %v798 = vmul.f32 %v797, %v197
        %v799 = vadd.f32 %v795, %v798
        %v800 = vtanh.pop %v799
        %s801 = sld [smem:[#allocation6 + $0x34]]
        %v802 = vstv %s801
        %v803 = vmul.f32 %v802, %v191
        %s804 = sld [smem:[#allocation6 + $0x35]]
        %v805 = vstv %s804
        %v806 = vmul.f32 %v805, %v193
        %v807 = vadd.f32 %v803, %v806
        %s808 = sld [smem:[#allocation6 + $0x36]]
        %v809 = vstv %s808
        %v810 = vmul.f32 %v809, %v195
        %v811 = vadd.f32 %v807, %v810
        %s812 = sld [smem:[#allocation6 + $0x37]]
        %v813 = vstv %s812
        %v814 = vmul.f32 %v813, %v197
        %v815 = vadd.f32 %v811, %v814
        %v816 = vtanh.pop %v815
        %s817 = sld [smem:[#allocation6 + $0x38]]
        %v818 = vstv %s817
        %v819 = vmul.f32 %v818, %v191
        %s820 = sld [smem:[#allocation6 + $0x39]]
        %v821 = vstv %s820
        %v822 = vmul.f32 %v821, %v193
        %v823 = vadd.f32 %v819, %v822
        %s824 = sld [smem:[#allocation6 + $0x3a]]
        %v825 = vstv %s824
        %v826 = vmul.f32 %v825, %v195
        %v827 = vadd.f32 %v823, %v826
        %s828 = sld [smem:[#allocation6 + $0x3b]]
        %v829 = vstv %s828
        %v830 = vmul.f32 %v829, %v197
        %v831 = vadd.f32 %v827, %v830
        %v832 = vtanh.pop %v831
        %s833 = sld [smem:[#allocation6 + $0x3c]]
        %v834 = vstv %s833
        %v835 = vmul.f32 %v834, %v191
        %s836 = sld [smem:[#allocation6 + $0x3d]]
        %v837 = vstv %s836
        %v838 = vmul.f32 %v837, %v193
        %v839 = vadd.f32 %v835, %v838
        %s840 = sld [smem:[#allocation6 + $0x3e]]
        %v841 = vstv %s840
        %v842 = vmul.f32 %v841, %v195
        %v843 = vadd.f32 %v839, %v842
        %s844 = sld [smem:[#allocation6 + $0x3f]]
        %v845 = vstv %s844
        %v846 = vmul.f32 %v845, %v197
        %v847 = vadd.f32 %v843, %v846
        %v848 = vtanh.pop %v847
        %s849 = sld [smem:[#allocation6 + $0xa0]]
        %v850 = vstv %s849
        %v851 = vmul.f32 %v850, %v736
        %s852 = sld [smem:[#allocation6 + $0xa1]]
        %v853 = vstv %s852
        %v854 = vmul.f32 %v853, %v752
        %v855 = vadd.f32 %v851, %v854
        %s856 = sld [smem:[#allocation6 + $0xa2]]
        %v857 = vstv %s856
        %v858 = vmul.f32 %v857, %v768
        %v859 = vadd.f32 %v855, %v858
        %s860 = sld [smem:[#allocation6 + $0xa3]]
        %v861 = vstv %s860
        %v862 = vmul.f32 %v861, %v784
        %v863 = vadd.f32 %v859, %v862
        %s864 = sld [smem:[#allocation6 + $0xa4]]
        %v865 = vstv %s864
        %v866 = vmul.f32 %v865, %v800
        %v867 = vadd.f32 %v863, %v866
        %s868 = sld [smem:[#allocation6 + $0xa5]]
        %v869 = vstv %s868
        %v870 = vmul.f32 %v869, %v816
        %v871 = vadd.f32 %v867, %v870
        %s872 = sld [smem:[#allocation6 + $0xa6]]
        %v873 = vstv %s872
        %v874 = vmul.f32 %v873, %v832
        %v875 = vadd.f32 %v871, %v874
        %s876 = sld [smem:[#allocation6 + $0xa7]]
        %v877 = vstv %s876
        %v878 = vmul.f32 %v877, %v848
        %v879 = vadd.f32 %v875, %v878
        %v880 = vtanh.pop %v879
        %s881 = sld [smem:[#allocation6 + $0xa8]]
        %v882 = vstv %s881
        %v883 = vmul.f32 %v882, %v736
        %s884 = sld [smem:[#allocation6 + $0xa9]]
        %v885 = vstv %s884
        %v886 = vmul.f32 %v885, %v752
        %v887 = vadd.f32 %v883, %v886
        %s888 = sld [smem:[#allocation6 + $0xaa]]
        %v889 = vstv %s888
        %v890 = vmul.f32 %v889, %v768
        %v891 = vadd.f32 %v887, %v890
        %s892 = sld [smem:[#allocation6 + $0xab]]
        %v893 = vstv %s892
        %v894 = vmul.f32 %v893, %v784
        %v895 = vadd.f32 %v891, %v894
        %s896 = sld [smem:[#allocation6 + $0xac]]
        %v897 = vstv %s896
        %v898 = vmul.f32 %v897, %v800
        %v899 = vadd.f32 %v895, %v898
        %s900 = sld [smem:[#allocation6 + $0xad]]
        %v901 = vstv %s900
        %v902 = vmul.f32 %v901, %v816
        %v903 = vadd.f32 %v899, %v902
        %s904 = sld [smem:[#allocation6 + $0xae]]
        %v905 = vstv %s904
        %v906 = vmul.f32 %v905, %v832
        %v907 = vadd.f32 %v903, %v906
        %s908 = sld [smem:[#allocation6 + $0xaf]]
        %v909 = vstv %s908
        %v910 = vmul.f32 %v909, %v848
        %v911 = vadd.f32 %v907, %v910
        %v912 = vtanh.pop %v911
        %s913 = sld [smem:[#allocation6 + $0xb0]]
        %v914 = vstv %s913
        %v915 = vmul.f32 %v914, %v736
        %s916 = sld [smem:[#allocation6 + $0xb1]]
        %v917 = vstv %s916
        %v918 = vmul.f32 %v917, %v752
        %v919 = vadd.f32 %v915, %v918
        %s920 = sld [smem:[#allocation6 + $0xb2]]
        %v921 = vstv %s920
        %v922 = vmul.f32 %v921, %v768
        %v923 = vadd.f32 %v919, %v922
        %s924 = sld [smem:[#allocation6 + $0xb3]]
        %v925 = vstv %s924
        %v926 = vmul.f32 %v925, %v784
        %v927 = vadd.f32 %v923, %v926
        %s928 = sld [smem:[#allocation6 + $0xb4]]
        %v929 = vstv %s928
        %v930 = vmul.f32 %v929, %v800
        %v931 = vadd.f32 %v927, %v930
        %s932 = sld [smem:[#allocation6 + $0xb5]]
        %v933 = vstv %s932
        %v934 = vmul.f32 %v933, %v816
        %v935 = vadd.f32 %v931, %v934
        %s936 = sld [smem:[#allocation6 + $0xb6]]
        %v937 = vstv %s936
        %v938 = vmul.f32 %v937, %v832
        %v939 = vadd.f32 %v935, %v938
        %s940 = sld [smem:[#allocation6 + $0xb7]]
        %v941 = vstv %s940
        %v942 = vmul.f32 %v941, %v848
        %v943 = vadd.f32 %v939, %v942
        %v944 = vtanh.pop %v943
        %s945 = sld [smem:[#allocation6 + $0xb8]]
        %v946 = vstv %s945
        %v947 = vmul.f32 %v946, %v736
        %s948 = sld [smem:[#allocation6 + $0xb9]]
        %v949 = vstv %s948
        %v950 = vmul.f32 %v949, %v752
        %v951 = vadd.f32 %v947, %v950
        %s952 = sld [smem:[#allocation6 + $0xba]]
        %v953 = vstv %s952
        %v954 = vmul.f32 %v953, %v768
        %v955 = vadd.f32 %v951, %v954
        %s956 = sld [smem:[#allocation6 + $0xbb]]
        %v957 = vstv %s956
        %v958 = vmul.f32 %v957, %v784
        %v959 = vadd.f32 %v955, %v958
        %s960 = sld [smem:[#allocation6 + $0xbc]]
        %v961 = vstv %s960
        %v962 = vmul.f32 %v961, %v800
        %v963 = vadd.f32 %v959, %v962
        %s964 = sld [smem:[#allocation6 + $0xbd]]
        %v965 = vstv %s964
        %v966 = vmul.f32 %v965, %v816
        %v967 = vadd.f32 %v963, %v966
        %s968 = sld [smem:[#allocation6 + $0xbe]]
        %v969 = vstv %s968
        %v970 = vmul.f32 %v969, %v832
        %v971 = vadd.f32 %v967, %v970
        %s972 = sld [smem:[#allocation6 + $0xbf]]
        %v973 = vstv %s972
        %v974 = vmul.f32 %v973, %v848
        %v975 = vadd.f32 %v971, %v974
        %v976 = vtanh.pop %v975
        %s977 = sld [smem:[#allocation6 + $0x120]]
        %v978 = vstv %s977
        %v979 = vmul.f32 %v978, %v880
        %s980 = sld [smem:[#allocation6 + $0x121]]
        %v981 = vstv %s980
        %v982 = vmul.f32 %v981, %v912
        %v983 = vadd.f32 %v979, %v982
        %s984 = sld [smem:[#allocation6 + $0x122]]
        %v985 = vstv %s984
        %v986 = vmul.f32 %v985, %v944
        %v987 = vadd.f32 %v983, %v986
        %s988 = sld [smem:[#allocation6 + $0x123]]
        %v989 = vstv %s988
        %v990 = vmul.f32 %v989, %v976
        %v991 = vadd.f32 %v987, %v990
        %v992 = vtanh.pop %v991
        %s993 = sld [smem:[#allocation6 + $0x124]]
        %v994 = vstv %s993
        %v995 = vmul.f32 %v994, %v880
        %s996 = sld [smem:[#allocation6 + $0x125]]
        %v997 = vstv %s996
        %v998 = vmul.f32 %v997, %v912
        %v999 = vadd.f32 %v995, %v998
        %s1000 = sld [smem:[#allocation6 + $0x126]]
        %v1001 = vstv %s1000
        %v1002 = vmul.f32 %v1001, %v944
        %v1003 = vadd.f32 %v999, %v1002
        %s1004 = sld [smem:[#allocation6 + $0x127]]
        %v1005 = vstv %s1004
        %v1006 = vmul.f32 %v1005, %v976
        %v1007 = vadd.f32 %v1003, %v1006
        %v1008 = vtanh.pop %v1007
        %s1009 = sld [smem:[#allocation6 + $0x128]]
        %v1010 = vstv %s1009
        %v1011 = vmul.f32 %v1010, %v880
        %s1012 = sld [smem:[#allocation6 + $0x129]]
        %v1013 = vstv %s1012
        %v1014 = vmul.f32 %v1013, %v912
        %v1015 = vadd.f32 %v1011, %v1014
        %s1016 = sld [smem:[#allocation6 + $0x12a]]
        %v1017 = vstv %s1016
        %v1018 = vmul.f32 %v1017, %v944
        %v1019 = vadd.f32 %v1015, %v1018
        %s1020 = sld [smem:[#allocation6 + $0x12b]]
        %v1021 = vstv %s1020
        %v1022 = vmul.f32 %v1021, %v976
        %v1023 = vadd.f32 %v1019, %v1022
        %v1024 = vtanh.pop %v1023
        %s1025 = sld [smem:[#allocation6 + $0x12c]]
        %v1026 = vstv %s1025
        %v1027 = vmul.f32 %v1026, %v880
        %s1028 = sld [smem:[#allocation6 + $0x12d]]
        %v1029 = vstv %s1028
        %v1030 = vmul.f32 %v1029, %v912
        %v1031 = vadd.f32 %v1027, %v1030
        %s1032 = sld [smem:[#allocation6 + $0x12e]]
        %v1033 = vstv %s1032
        %v1034 = vmul.f32 %v1033, %v944
        %v1035 = vadd.f32 %v1031, %v1034
        %s1036 = sld [smem:[#allocation6 + $0x12f]]
        %v1037 = vstv %s1036
        %v1038 = vmul.f32 %v1037, %v976
        %v1039 = vadd.f32 %v1035, %v1038
        %v1040 = vtanh.pop %v1039
        %s1041 = sld [smem:[#allocation6 + $0x130]]
        %v1042 = vstv %s1041
        %v1043 = vmul.f32 %v1042, %v880
        %s1044 = sld [smem:[#allocation6 + $0x131]]
        %v1045 = vstv %s1044
        %v1046 = vmul.f32 %v1045, %v912
        %v1047 = vadd.f32 %v1043, %v1046
        %s1048 = sld [smem:[#allocation6 + $0x132]]
        %v1049 = vstv %s1048
        %v1050 = vmul.f32 %v1049, %v944
        %v1051 = vadd.f32 %v1047, %v1050
        %s1052 = sld [smem:[#allocation6 + $0x133]]
        %v1053 = vstv %s1052
        %v1054 = vmul.f32 %v1053, %v976
        %v1055 = vadd.f32 %v1051, %v1054
        %v1056 = vtanh.pop %v1055
        %s1057 = sld [smem:[#allocation6 + $0x134]]
        %v1058 = vstv %s1057
        %v1059 = vmul.f32 %v1058, %v880
        %s1060 = sld [smem:[#allocation6 + $0x135]]
        %v1061 = vstv %s1060
        %v1062 = vmul.f32 %v1061, %v912
        %v1063 = vadd.f32 %v1059, %v1062
        %s1064 = sld [smem:[#allocation6 + $0x136]]
        %v1065 = vstv %s1064
        %v1066 = vmul.f32 %v1065, %v944
        %v1067 = vadd.f32 %v1063, %v1066
        %s1068 = sld [smem:[#allocation6 + $0x137]]
        %v1069 = vstv %s1068
        %v1070 = vmul.f32 %v1069, %v976
        %v1071 = vadd.f32 %v1067, %v1070
        %v1072 = vtanh.pop %v1071
        %s1073 = sld [smem:[#allocation6 + $0x138]]
        %v1074 = vstv %s1073
        %v1075 = vmul.f32 %v1074, %v880
        %s1076 = sld [smem:[#allocation6 + $0x139]]
        %v1077 = vstv %s1076
        %v1078 = vmul.f32 %v1077, %v912
        %v1079 = vadd.f32 %v1075, %v1078
        %s1080 = sld [smem:[#allocation6 + $0x13a]]
        %v1081 = vstv %s1080
        %v1082 = vmul.f32 %v1081, %v944
        %v1083 = vadd.f32 %v1079, %v1082
        %s1084 = sld [smem:[#allocation6 + $0x13b]]
        %v1085 = vstv %s1084
        %v1086 = vmul.f32 %v1085, %v976
        %v1087 = vadd.f32 %v1083, %v1086
        %v1088 = vtanh.pop %v1087
        %s1089 = sld [smem:[#allocation6 + $0x13c]]
        %v1090 = vstv %s1089
        %v1091 = vmul.f32 %v1090, %v880
        %s1092 = sld [smem:[#allocation6 + $0x13d]]
        %v1093 = vstv %s1092
        %v1094 = vmul.f32 %v1093, %v912
        %v1095 = vadd.f32 %v1091, %v1094
        %s1096 = sld [smem:[#allocation6 + $0x13e]]
        %v1097 = vstv %s1096
        %v1098 = vmul.f32 %v1097, %v944
        %v1099 = vadd.f32 %v1095, %v1098
        %s1100 = sld [smem:[#allocation6 + $0x13f]]
        %v1101 = vstv %s1100
        %v1102 = vmul.f32 %v1101, %v976
        %v1103 = vadd.f32 %v1099, %v1102
        %v1104 = vtanh.pop %v1103
        %s1105 = sld [smem:[#allocation6 + $0x1a0]]
        %v1106 = vstv %s1105
        %v1107 = vmul.f32 %v1106, %v992
        %s1108 = sld [smem:[#allocation6 + $0x1a1]]
        %v1109 = vstv %s1108
        %v1110 = vmul.f32 %v1109, %v1008
        %v1111 = vadd.f32 %v1107, %v1110
        %s1112 = sld [smem:[#allocation6 + $0x1a2]]
        %v1113 = vstv %s1112
        %v1114 = vmul.f32 %v1113, %v1024
        %v1115 = vadd.f32 %v1111, %v1114
        %s1116 = sld [smem:[#allocation6 + $0x1a3]]
        %v1117 = vstv %s1116
        %v1118 = vmul.f32 %v1117, %v1040
        %v1119 = vadd.f32 %v1115, %v1118
        %s1120 = sld [smem:[#allocation6 + $0x1a4]]
        %v1121 = vstv %s1120
        %v1122 = vmul.f32 %v1121, %v1056
        %v1123 = vadd.f32 %v1119, %v1122
        %s1124 = sld [smem:[#allocation6 + $0x1a5]]
        %v1125 = vstv %s1124
        %v1126 = vmul.f32 %v1125, %v1072
        %v1127 = vadd.f32 %v1123, %v1126
        %s1128 = sld [smem:[#allocation6 + $0x1a6]]
        %v1129 = vstv %s1128
        %v1130 = vmul.f32 %v1129, %v1088
        %v1131 = vadd.f32 %v1127, %v1130
        %s1132 = sld [smem:[#allocation6 + $0x1a7]]
        %v1133 = vstv %s1132
        %v1134 = vmul.f32 %v1133, %v1104
        %v1135 = vadd.f32 %v1131, %v1134
        %s1136 = sld [smem:[#allocation6 + $0x1a8]]
        %v1137 = vstv %s1136
        %v1138 = vmul.f32 %v1137, %v992
        %s1139 = sld [smem:[#allocation6 + $0x1a9]]
        %v1140 = vstv %s1139
        %v1141 = vmul.f32 %v1140, %v1008
        %v1142 = vadd.f32 %v1138, %v1141
        %s1143 = sld [smem:[#allocation6 + $0x1aa]]
        %v1144 = vstv %s1143
        %v1145 = vmul.f32 %v1144, %v1024
        %v1146 = vadd.f32 %v1142, %v1145
        %s1147 = sld [smem:[#allocation6 + $0x1ab]]
        %v1148 = vstv %s1147
        %v1149 = vmul.f32 %v1148, %v1040
        %v1150 = vadd.f32 %v1146, %v1149
        %s1151 = sld [smem:[#allocation6 + $0x1ac]]
        %v1152 = vstv %s1151
        %v1153 = vmul.f32 %v1152, %v1056
        %v1154 = vadd.f32 %v1150, %v1153
        %s1155 = sld [smem:[#allocation6 + $0x1ad]]
        %v1156 = vstv %s1155
        %v1157 = vmul.f32 %v1156, %v1072
        %v1158 = vadd.f32 %v1154, %v1157
        %s1159 = sld [smem:[#allocation6 + $0x1ae]]
        %v1160 = vstv %s1159
        %v1161 = vmul.f32 %v1160, %v1088
        %v1162 = vadd.f32 %v1158, %v1161
        %s1163 = sld [smem:[#allocation6 + $0x1af]]
        %v1164 = vstv %s1163
        %v1165 = vmul.f32 %v1164, %v1104
        %v1166 = vadd.f32 %v1162, %v1165
        %s1167 = sld [smem:[#allocation6 + $0x1b0]]
        %v1168 = vstv %s1167
        %v1169 = vmul.f32 %v1168, %v992
        %s1170 = sld [smem:[#allocation6 + $0x1b1]]
        %v1171 = vstv %s1170
        %v1172 = vmul.f32 %v1171, %v1008
        %v1173 = vadd.f32 %v1169, %v1172
        %s1174 = sld [smem:[#allocation6 + $0x1b2]]
        %v1175 = vstv %s1174
        %v1176 = vmul.f32 %v1175, %v1024
        %v1177 = vadd.f32 %v1173, %v1176
        %s1178 = sld [smem:[#allocation6 + $0x1b3]]
        %v1179 = vstv %s1178
        %v1180 = vmul.f32 %v1179, %v1040
        %v1181 = vadd.f32 %v1177, %v1180
        %s1182 = sld [smem:[#allocation6 + $0x1b4]]
        %v1183 = vstv %s1182
        %v1184 = vmul.f32 %v1183, %v1056
        %v1185 = vadd.f32 %v1181, %v1184
        %s1186 = sld [smem:[#allocation6 + $0x1b5]]
        %v1187 = vstv %s1186
        %v1188 = vmul.f32 %v1187, %v1072
        %v1189 = vadd.f32 %v1185, %v1188
        %s1190 = sld [smem:[#allocation6 + $0x1b6]]
        %v1191 = vstv %s1190
        %v1192 = vmul.f32 %v1191, %v1088
        %v1193 = vadd.f32 %v1189, %v1192
        %s1194 = sld [smem:[#allocation6 + $0x1b7]]
        %v1195 = vstv %s1194
        %v1196 = vmul.f32 %v1195, %v1104
        %v1197 = vadd.f32 %v1193, %v1196
        %s1198 = sld [smem:[#allocation6 + $0x1b8]]
        %v1199 = vstv %s1198
        %v1200 = vmul.f32 %v1199, %v992
        %s1201 = sld [smem:[#allocation6 + $0x1b9]]
        %v1202 = vstv %s1201
        %v1203 = vmul.f32 %v1202, %v1008
        %v1204 = vadd.f32 %v1200, %v1203
        %s1205 = sld [smem:[#allocation6 + $0x1ba]]
        %v1206 = vstv %s1205
        %v1207 = vmul.f32 %v1206, %v1024
        %v1208 = vadd.f32 %v1204, %v1207
        %s1209 = sld [smem:[#allocation6 + $0x1bb]]
        %v1210 = vstv %s1209
        %v1211 = vmul.f32 %v1210, %v1040
        %v1212 = vadd.f32 %v1208, %v1211
        %s1213 = sld [smem:[#allocation6 + $0x1bc]]
        %v1214 = vstv %s1213
        %v1215 = vmul.f32 %v1214, %v1056
        %v1216 = vadd.f32 %v1212, %v1215
        %s1217 = sld [smem:[#allocation6 + $0x1bd]]
        %v1218 = vstv %s1217
        %v1219 = vmul.f32 %v1218, %v1072
        %v1220 = vadd.f32 %v1216, %v1219
        %s1221 = sld [smem:[#allocation6 + $0x1be]]
        %v1222 = vstv %s1221
        %v1223 = vmul.f32 %v1222, %v1088
        %v1224 = vadd.f32 %v1220, %v1223
        %s1225 = sld [smem:[#allocation6 + $0x1bf]]
        %v1226 = vstv %s1225
        %v1227 = vmul.f32 %v1226, %v1104
        %v1228 = vadd.f32 %v1224, %v1227
        %v1229 = vsub.f32 %v1135, %v191
        %v1230 = vmul.f32 %v1229, %v1229
        %v1231 = vsub.f32 %v1166, %v193
        %v1232 = vmul.f32 %v1231, %v1231
        %v1233 = vadd.f32 %v1230, %v1232
        %v1234 = vsub.f32 %v1197, %v195
        %v1235 = vmul.f32 %v1234, %v1234
        %v1236 = vadd.f32 %v1233, %v1235
        %v1237 = vsub.f32 %v1228, %v197
        %v1238 = vmul.f32 %v1237, %v1237
        %v1239 = vadd.f32 %v1236, %v1238
        %v1240 = vmul.f32 %v1239, -1.0
        %v1241 = vmax.f32 %v1240, -100.0
        %v1242 = vmin.f32 %v1241, 100.0
        %s1243 = scalar_lea.vmem %s190, 2 [#allocation7]
        %1244 = vst [vmem:[%s1243] sm:$0x3] %v1242
        %s1245 = sld [smem:[#allocation6 + $0x40]]
        %v1246 = vstv %s1245
        %v1247 = vmul.f32 %v1246, %v191
        %s1248 = sld [smem:[#allocation6 + $0x41]]
        %v1249 = vstv %s1248
        %v1250 = vmul.f32 %v1249, %v193
        %v1251 = vadd.f32 %v1247, %v1250
        %s1252 = sld [smem:[#allocation6 + $0x42]]
        %v1253 = vstv %s1252
        %v1254 = vmul.f32 %v1253, %v195
        %v1255 = vadd.f32 %v1251, %v1254
        %s1256 = sld [smem:[#allocation6 + $0x43]]
        %v1257 = vstv %s1256
        %v1258 = vmul.f32 %v1257, %v197
        %v1259 = vadd.f32 %v1255, %v1258
        %v1260 = vtanh.pop %v1259
        %s1261 = sld [smem:[#allocation6 + $0x44]]
        %v1262 = vstv %s1261
        %v1263 = vmul.f32 %v1262, %v191
        %s1264 = sld [smem:[#allocation6 + $0x45]]
        %v1265 = vstv %s1264
        %v1266 = vmul.f32 %v1265, %v193
        %v1267 = vadd.f32 %v1263, %v1266
        %s1268 = sld [smem:[#allocation6 + $0x46]]
        %v1269 = vstv %s1268
        %v1270 = vmul.f32 %v1269, %v195
        %v1271 = vadd.f32 %v1267, %v1270
        %s1272 = sld [smem:[#allocation6 + $0x47]]
        %v1273 = vstv %s1272
        %v1274 = vmul.f32 %v1273, %v197
        %v1275 = vadd.f32 %v1271, %v1274
        %v1276 = vtanh.pop %v1275
        %s1277 = sld [smem:[#allocation6 + $0x48]]
        %v1278 = vstv %s1277
        %v1279 = vmul.f32 %v1278, %v191
        %s1280 = sld [smem:[#allocation6 + $0x49]]
        %v1281 = vstv %s1280
        %v1282 = vmul.f32 %v1281, %v193
        %v1283 = vadd.f32 %v1279, %v1282
        %s1284 = sld [smem:[#allocation6 + $0x4a]]
        %v1285 = vstv %s1284
        %v1286 = vmul.f32 %v1285, %v195
        %v1287 = vadd.f32 %v1283, %v1286
        %s1288 = sld [smem:[#allocation6 + $0x4b]]
        %v1289 = vstv %s1288
        %v1290 = vmul.f32 %v1289, %v197
        %v1291 = vadd.f32 %v1287, %v1290
        %v1292 = vtanh.pop %v1291
        %s1293 = sld [smem:[#allocation6 + $0x4c]]
        %v1294 = vstv %s1293
        %v1295 = vmul.f32 %v1294, %v191
        %s1296 = sld [smem:[#allocation6 + $0x4d]]
        %v1297 = vstv %s1296
        %v1298 = vmul.f32 %v1297, %v193
        %v1299 = vadd.f32 %v1295, %v1298
        %s1300 = sld [smem:[#allocation6 + $0x4e]]
        %v1301 = vstv %s1300
        %v1302 = vmul.f32 %v1301, %v195
        %v1303 = vadd.f32 %v1299, %v1302
        %s1304 = sld [smem:[#allocation6 + $0x4f]]
        %v1305 = vstv %s1304
        %v1306 = vmul.f32 %v1305, %v197
        %v1307 = vadd.f32 %v1303, %v1306
        %v1308 = vtanh.pop %v1307
        %s1309 = sld [smem:[#allocation6 + $0x50]]
        %v1310 = vstv %s1309
        %v1311 = vmul.f32 %v1310, %v191
        %s1312 = sld [smem:[#allocation6 + $0x51]]
        %v1313 = vstv %s1312
        %v1314 = vmul.f32 %v1313, %v193
        %v1315 = vadd.f32 %v1311, %v1314
        %s1316 = sld [smem:[#allocation6 + $0x52]]
        %v1317 = vstv %s1316
        %v1318 = vmul.f32 %v1317, %v195
        %v1319 = vadd.f32 %v1315, %v1318
        %s1320 = sld [smem:[#allocation6 + $0x53]]
        %v1321 = vstv %s1320
        %v1322 = vmul.f32 %v1321, %v197
        %v1323 = vadd.f32 %v1319, %v1322
        %v1324 = vtanh.pop %v1323
        %s1325 = sld [smem:[#allocation6 + $0x54]]
        %v1326 = vstv %s1325
        %v1327 = vmul.f32 %v1326, %v191
        %s1328 = sld [smem:[#allocation6 + $0x55]]
        %v1329 = vstv %s1328
        %v1330 = vmul.f32 %v1329, %v193
        %v1331 = vadd.f32 %v1327, %v1330
        %s1332 = sld [smem:[#allocation6 + $0x56]]
        %v1333 = vstv %s1332
        %v1334 = vmul.f32 %v1333, %v195
        %v1335 = vadd.f32 %v1331, %v1334
        %s1336 = sld [smem:[#allocation6 + $0x57]]
        %v1337 = vstv %s1336
        %v1338 = vmul.f32 %v1337, %v197
        %v1339 = vadd.f32 %v1335, %v1338
        %v1340 = vtanh.pop %v1339
        %s1341 = sld [smem:[#allocation6 + $0x58]]
        %v1342 = vstv %s1341
        %v1343 = vmul.f32 %v1342, %v191
        %s1344 = sld [smem:[#allocation6 + $0x59]]
        %v1345 = vstv %s1344
        %v1346 = vmul.f32 %v1345, %v193
        %v1347 = vadd.f32 %v1343, %v1346
        %s1348 = sld [smem:[#allocation6 + $0x5a]]
        %v1349 = vstv %s1348
        %v1350 = vmul.f32 %v1349, %v195
        %v1351 = vadd.f32 %v1347, %v1350
        %s1352 = sld [smem:[#allocation6 + $0x5b]]
        %v1353 = vstv %s1352
        %v1354 = vmul.f32 %v1353, %v197
        %v1355 = vadd.f32 %v1351, %v1354
        %v1356 = vtanh.pop %v1355
        %s1357 = sld [smem:[#allocation6 + $0x5c]]
        %v1358 = vstv %s1357
        %v1359 = vmul.f32 %v1358, %v191
        %s1360 = sld [smem:[#allocation6 + $0x5d]]
        %v1361 = vstv %s1360
        %v1362 = vmul.f32 %v1361, %v193
        %v1363 = vadd.f32 %v1359, %v1362
        %s1364 = sld [smem:[#allocation6 + $0x5e]]
        %v1365 = vstv %s1364
        %v1366 = vmul.f32 %v1365, %v195
        %v1367 = vadd.f32 %v1363, %v1366
        %s1368 = sld [smem:[#allocation6 + $0x5f]]
        %v1369 = vstv %s1368
        %v1370 = vmul.f32 %v1369, %v197
        %v1371 = vadd.f32 %v1367, %v1370
        %v1372 = vtanh.pop %v1371
        %s1373 = sld [smem:[#allocation6 + $0xc0]]
        %v1374 = vstv %s1373
        %v1375 = vmul.f32 %v1374, %v1260
        %s1376 = sld [smem:[#allocation6 + $0xc1]]
        %v1377 = vstv %s1376
        %v1378 = vmul.f32 %v1377, %v1276
        %v1379 = vadd.f32 %v1375, %v1378
        %s1380 = sld [smem:[#allocation6 + $0xc2]]
        %v1381 = vstv %s1380
        %v1382 = vmul.f32 %v1381, %v1292
        %v1383 = vadd.f32 %v1379, %v1382
        %s1384 = sld [smem:[#allocation6 + $0xc3]]
        %v1385 = vstv %s1384
        %v1386 = vmul.f32 %v1385, %v1308
        %v1387 = vadd.f32 %v1383, %v1386
        %s1388 = sld [smem:[#allocation6 + $0xc4]]
        %v1389 = vstv %s1388
        %v1390 = vmul.f32 %v1389, %v1324
        %v1391 = vadd.f32 %v1387, %v1390
        %s1392 = sld [smem:[#allocation6 + $0xc5]]
        %v1393 = vstv %s1392
        %v1394 = vmul.f32 %v1393, %v1340
        %v1395 = vadd.f32 %v1391, %v1394
        %s1396 = sld [smem:[#allocation6 + $0xc6]]
        %v1397 = vstv %s1396
        %v1398 = vmul.f32 %v1397, %v1356
        %v1399 = vadd.f32 %v1395, %v1398
        %s1400 = sld [smem:[#allocation6 + $0xc7]]
        %v1401 = vstv %s1400
        %v1402 = vmul.f32 %v1401, %v1372
        %v1403 = vadd.f32 %v1399, %v1402
        %v1404 = vtanh.pop %v1403
        %s1405 = sld [smem:[#allocation6 + $0xc8]]
        %v1406 = vstv %s1405
        %v1407 = vmul.f32 %v1406, %v1260
        %s1408 = sld [smem:[#allocation6 + $0xc9]]
        %v1409 = vstv %s1408
        %v1410 = vmul.f32 %v1409, %v1276
        %v1411 = vadd.f32 %v1407, %v1410
        %s1412 = sld [smem:[#allocation6 + $0xca]]
        %v1413 = vstv %s1412
        %v1414 = vmul.f32 %v1413, %v1292
        %v1415 = vadd.f32 %v1411, %v1414
        %s1416 = sld [smem:[#allocation6 + $0xcb]]
        %v1417 = vstv %s1416
        %v1418 = vmul.f32 %v1417, %v1308
        %v1419 = vadd.f32 %v1415, %v1418
        %s1420 = sld [smem:[#allocation6 + $0xcc]]
        %v1421 = vstv %s1420
        %v1422 = vmul.f32 %v1421, %v1324
        %v1423 = vadd.f32 %v1419, %v1422
        %s1424 = sld [smem:[#allocation6 + $0xcd]]
        %v1425 = vstv %s1424
        %v1426 = vmul.f32 %v1425, %v1340
        %v1427 = vadd.f32 %v1423, %v1426
        %s1428 = sld [smem:[#allocation6 + $0xce]]
        %v1429 = vstv %s1428
        %v1430 = vmul.f32 %v1429, %v1356
        %v1431 = vadd.f32 %v1427, %v1430
        %s1432 = sld [smem:[#allocation6 + $0xcf]]
        %v1433 = vstv %s1432
        %v1434 = vmul.f32 %v1433, %v1372
        %v1435 = vadd.f32 %v1431, %v1434
        %v1436 = vtanh.pop %v1435
        %s1437 = sld [smem:[#allocation6 + $0xd0]]
        %v1438 = vstv %s1437
        %v1439 = vmul.f32 %v1438, %v1260
        %s1440 = sld [smem:[#allocation6 + $0xd1]]
        %v1441 = vstv %s1440
        %v1442 = vmul.f32 %v1441, %v1276
        %v1443 = vadd.f32 %v1439, %v1442
        %s1444 = sld [smem:[#allocation6 + $0xd2]]
        %v1445 = vstv %s1444
        %v1446 = vmul.f32 %v1445, %v1292
        %v1447 = vadd.f32 %v1443, %v1446
        %s1448 = sld [smem:[#allocation6 + $0xd3]]
        %v1449 = vstv %s1448
        %v1450 = vmul.f32 %v1449, %v1308
        %v1451 = vadd.f32 %v1447, %v1450
        %s1452 = sld [smem:[#allocation6 + $0xd4]]
        %v1453 = vstv %s1452
        %v1454 = vmul.f32 %v1453, %v1324
        %v1455 = vadd.f32 %v1451, %v1454
        %s1456 = sld [smem:[#allocation6 + $0xd5]]
        %v1457 = vstv %s1456
        %v1458 = vmul.f32 %v1457, %v1340
        %v1459 = vadd.f32 %v1455, %v1458
        %s1460 = sld [smem:[#allocation6 + $0xd6]]
        %v1461 = vstv %s1460
        %v1462 = vmul.f32 %v1461, %v1356
        %v1463 = vadd.f32 %v1459, %v1462
        %s1464 = sld [smem:[#allocation6 + $0xd7]]
        %v1465 = vstv %s1464
        %v1466 = vmul.f32 %v1465, %v1372
        %v1467 = vadd.f32 %v1463, %v1466
        %v1468 = vtanh.pop %v1467
        %s1469 = sld [smem:[#allocation6 + $0xd8]]
        %v1470 = vstv %s1469
        %v1471 = vmul.f32 %v1470, %v1260
        %s1472 = sld [smem:[#allocation6 + $0xd9]]
        %v1473 = vstv %s1472
        %v1474 = vmul.f32 %v1473, %v1276
        %v1475 = vadd.f32 %v1471, %v1474
        %s1476 = sld [smem:[#allocation6 + $0xda]]
        %v1477 = vstv %s1476
        %v1478 = vmul.f32 %v1477, %v1292
        %v1479 = vadd.f32 %v1475, %v1478
        %s1480 = sld [smem:[#allocation6 + $0xdb]]
        %v1481 = vstv %s1480
        %v1482 = vmul.f32 %v1481, %v1308
        %v1483 = vadd.f32 %v1479, %v1482
        %s1484 = sld [smem:[#allocation6 + $0xdc]]
        %v1485 = vstv %s1484
        %v1486 = vmul.f32 %v1485, %v1324
        %v1487 = vadd.f32 %v1483, %v1486
        %s1488 = sld [smem:[#allocation6 + $0xdd]]
        %v1489 = vstv %s1488
        %v1490 = vmul.f32 %v1489, %v1340
        %v1491 = vadd.f32 %v1487, %v1490
        %s1492 = sld [smem:[#allocation6 + $0xde]]
        %v1493 = vstv %s1492
        %v1494 = vmul.f32 %v1493, %v1356
        %v1495 = vadd.f32 %v1491, %v1494
        %s1496 = sld [smem:[#allocation6 + $0xdf]]
        %v1497 = vstv %s1496
        %v1498 = vmul.f32 %v1497, %v1372
        %v1499 = vadd.f32 %v1495, %v1498
        %v1500 = vtanh.pop %v1499
        %s1501 = sld [smem:[#allocation6 + $0x140]]
        %v1502 = vstv %s1501
        %v1503 = vmul.f32 %v1502, %v1404
        %s1504 = sld [smem:[#allocation6 + $0x141]]
        %v1505 = vstv %s1504
        %v1506 = vmul.f32 %v1505, %v1436
        %v1507 = vadd.f32 %v1503, %v1506
        %s1508 = sld [smem:[#allocation6 + $0x142]]
        %v1509 = vstv %s1508
        %v1510 = vmul.f32 %v1509, %v1468
        %v1511 = vadd.f32 %v1507, %v1510
        %s1512 = sld [smem:[#allocation6 + $0x143]]
        %v1513 = vstv %s1512
        %v1514 = vmul.f32 %v1513, %v1500
        %v1515 = vadd.f32 %v1511, %v1514
        %v1516 = vtanh.pop %v1515
        %s1517 = sld [smem:[#allocation6 + $0x144]]
        %v1518 = vstv %s1517
        %v1519 = vmul.f32 %v1518, %v1404
        %s1520 = sld [smem:[#allocation6 + $0x145]]
        %v1521 = vstv %s1520
        %v1522 = vmul.f32 %v1521, %v1436
        %v1523 = vadd.f32 %v1519, %v1522
        %s1524 = sld [smem:[#allocation6 + $0x146]]
        %v1525 = vstv %s1524
        %v1526 = vmul.f32 %v1525, %v1468
        %v1527 = vadd.f32 %v1523, %v1526
        %s1528 = sld [smem:[#allocation6 + $0x147]]
        %v1529 = vstv %s1528
        %v1530 = vmul.f32 %v1529, %v1500
        %v1531 = vadd.f32 %v1527, %v1530
        %v1532 = vtanh.pop %v1531
        %s1533 = sld [smem:[#allocation6 + $0x148]]
        %v1534 = vstv %s1533
        %v1535 = vmul.f32 %v1534, %v1404
        %s1536 = sld [smem:[#allocation6 + $0x149]]
        %v1537 = vstv %s1536
        %v1538 = vmul.f32 %v1537, %v1436
        %v1539 = vadd.f32 %v1535, %v1538
        %s1540 = sld [smem:[#allocation6 + $0x14a]]
        %v1541 = vstv %s1540
        %v1542 = vmul.f32 %v1541, %v1468
        %v1543 = vadd.f32 %v1539, %v1542
        %s1544 = sld [smem:[#allocation6 + $0x14b]]
        %v1545 = vstv %s1544
        %v1546 = vmul.f32 %v1545, %v1500
        %v1547 = vadd.f32 %v1543, %v1546
        %v1548 = vtanh.pop %v1547
        %s1549 = sld [smem:[#allocation6 + $0x14c]]
        %v1550 = vstv %s1549
        %v1551 = vmul.f32 %v1550, %v1404
        %s1552 = sld [smem:[#allocation6 + $0x14d]]
        %v1553 = vstv %s1552
        %v1554 = vmul.f32 %v1553, %v1436
        %v1555 = vadd.f32 %v1551, %v1554
        %s1556 = sld [smem:[#allocation6 + $0x14e]]
        %v1557 = vstv %s1556
        %v1558 = vmul.f32 %v1557, %v1468
        %v1559 = vadd.f32 %v1555, %v1558
        %s1560 = sld [smem:[#allocation6 + $0x14f]]
        %v1561 = vstv %s1560
        %v1562 = vmul.f32 %v1561, %v1500
        %v1563 = vadd.f32 %v1559, %v1562
        %v1564 = vtanh.pop %v1563
        %s1565 = sld [smem:[#allocation6 + $0x150]]
        %v1566 = vstv %s1565
        %v1567 = vmul.f32 %v1566, %v1404
        %s1568 = sld [smem:[#allocation6 + $0x151]]
        %v1569 = vstv %s1568
        %v1570 = vmul.f32 %v1569, %v1436
        %v1571 = vadd.f32 %v1567, %v1570
        %s1572 = sld [smem:[#allocation6 + $0x152]]
        %v1573 = vstv %s1572
        %v1574 = vmul.f32 %v1573, %v1468
        %v1575 = vadd.f32 %v1571, %v1574
        %s1576 = sld [smem:[#allocation6 + $0x153]]
        %v1577 = vstv %s1576
        %v1578 = vmul.f32 %v1577, %v1500
        %v1579 = vadd.f32 %v1575, %v1578
        %v1580 = vtanh.pop %v1579
        %s1581 = sld [smem:[#allocation6 + $0x154]]
        %v1582 = vstv %s1581
        %v1583 = vmul.f32 %v1582, %v1404
        %s1584 = sld [smem:[#allocation6 + $0x155]]
        %v1585 = vstv %s1584
        %v1586 = vmul.f32 %v1585, %v1436
        %v1587 = vadd.f32 %v1583, %v1586
        %s1588 = sld [smem:[#allocation6 + $0x156]]
        %v1589 = vstv %s1588
        %v1590 = vmul.f32 %v1589, %v1468
        %v1591 = vadd.f32 %v1587, %v1590
        %s1592 = sld [smem:[#allocation6 + $0x157]]
        %v1593 = vstv %s1592
        %v1594 = vmul.f32 %v1593, %v1500
        %v1595 = vadd.f32 %v1591, %v1594
        %v1596 = vtanh.pop %v1595
        %s1597 = sld [smem:[#allocation6 + $0x158]]
        %v1598 = vstv %s1597
        %v1599 = vmul.f32 %v1598, %v1404
        %s1600 = sld [smem:[#allocation6 + $0x159]]
        %v1601 = vstv %s1600
        %v1602 = vmul.f32 %v1601, %v1436
        %v1603 = vadd.f32 %v1599, %v1602
        %s1604 = sld [smem:[#allocation6 + $0x15a]]
        %v1605 = vstv %s1604
        %v1606 = vmul.f32 %v1605, %v1468
        %v1607 = vadd.f32 %v1603, %v1606
        %s1608 = sld [smem:[#allocation6 + $0x15b]]
        %v1609 = vstv %s1608
        %v1610 = vmul.f32 %v1609, %v1500
        %v1611 = vadd.f32 %v1607, %v1610
        %v1612 = vtanh.pop %v1611
        %s1613 = sld [smem:[#allocation6 + $0x15c]]
        %v1614 = vstv %s1613
        %v1615 = vmul.f32 %v1614, %v1404
        %s1616 = sld [smem:[#allocation6 + $0x15d]]
        %v1617 = vstv %s1616
        %v1618 = vmul.f32 %v1617, %v1436
        %v1619 = vadd.f32 %v1615, %v1618
        %s1620 = sld [smem:[#allocation6 + $0x15e]]
        %v1621 = vstv %s1620
        %v1622 = vmul.f32 %v1621, %v1468
        %v1623 = vadd.f32 %v1619, %v1622
        %s1624 = sld [smem:[#allocation6 + $0x15f]]
        %v1625 = vstv %s1624
        %v1626 = vmul.f32 %v1625, %v1500
        %v1627 = vadd.f32 %v1623, %v1626
        %v1628 = vtanh.pop %v1627
        %s1629 = sld [smem:[#allocation6 + $0x1c0]]
        %v1630 = vstv %s1629
        %v1631 = vmul.f32 %v1630, %v1516
        %s1632 = sld [smem:[#allocation6 + $0x1c1]]
        %v1633 = vstv %s1632
        %v1634 = vmul.f32 %v1633, %v1532
        %v1635 = vadd.f32 %v1631, %v1634
        %s1636 = sld [smem:[#allocation6 + $0x1c2]]
        %v1637 = vstv %s1636
        %v1638 = vmul.f32 %v1637, %v1548
        %v1639 = vadd.f32 %v1635, %v1638
        %s1640 = sld [smem:[#allocation6 + $0x1c3]]
        %v1641 = vstv %s1640
        %v1642 = vmul.f32 %v1641, %v1564
        %v1643 = vadd.f32 %v1639, %v1642
        %s1644 = sld [smem:[#allocation6 + $0x1c4]]
        %v1645 = vstv %s1644
        %v1646 = vmul.f32 %v1645, %v1580
        %v1647 = vadd.f32 %v1643, %v1646
        %s1648 = sld [smem:[#allocation6 + $0x1c5]]
        %v1649 = vstv %s1648
        %v1650 = vmul.f32 %v1649, %v1596
        %v1651 = vadd.f32 %v1647, %v1650
        %s1652 = sld [smem:[#allocation6 + $0x1c6]]
        %v1653 = vstv %s1652
        %v1654 = vmul.f32 %v1653, %v1612
        %v1655 = vadd.f32 %v1651, %v1654
        %s1656 = sld [smem:[#allocation6 + $0x1c7]]
        %v1657 = vstv %s1656
        %v1658 = vmul.f32 %v1657, %v1628
        %v1659 = vadd.f32 %v1655, %v1658
        %s1660 = sld [smem:[#allocation6 + $0x1c8]]
        %v1661 = vstv %s1660
        %v1662 = vmul.f32 %v1661, %v1516
        %s1663 = sld [smem:[#allocation6 + $0x1c9]]
        %v1664 = vstv %s1663
        %v1665 = vmul.f32 %v1664, %v1532
        %v1666 = vadd.f32 %v1662, %v1665
        %s1667 = sld [smem:[#allocation6 + $0x1ca]]
        %v1668 = vstv %s1667
        %v1669 = vmul.f32 %v1668, %v1548
        %v1670 = vadd.f32 %v1666, %v1669
        %s1671 = sld [smem:[#allocation6 + $0x1cb]]
        %v1672 = vstv %s1671
        %v1673 = vmul.f32 %v1672, %v1564
        %v1674 = vadd.f32 %v1670, %v1673
        %s1675 = sld [smem:[#allocation6 + $0x1cc]]
        %v1676 = vstv %s1675
        %v1677 = vmul.f32 %v1676, %v1580
        %v1678 = vadd.f32 %v1674, %v1677
        %s1679 = sld [smem:[#allocation6 + $0x1cd]]
        %v1680 = vstv %s1679
        %v1681 = vmul.f32 %v1680, %v1596
        %v1682 = vadd.f32 %v1678, %v1681
        %s1683 = sld [smem:[#allocation6 + $0x1ce]]
        %v1684 = vstv %s1683
        %v1685 = vmul.f32 %v1684, %v1612
        %v1686 = vadd.f32 %v1682, %v1685
        %s1687 = sld [smem:[#allocation6 + $0x1cf]]
        %v1688 = vstv %s1687
        %v1689 = vmul.f32 %v1688, %v1628
        %v1690 = vadd.f32 %v1686, %v1689
        %s1691 = sld [smem:[#allocation6 + $0x1d0]]
        %v1692 = vstv %s1691
        %v1693 = vmul.f32 %v1692, %v1516
        %s1694 = sld [smem:[#allocation6 + $0x1d1]]
        %v1695 = vstv %s1694
        %v1696 = vmul.f32 %v1695, %v1532
        %v1697 = vadd.f32 %v1693, %v1696
        %s1698 = sld [smem:[#allocation6 + $0x1d2]]
        %v1699 = vstv %s1698
        %v1700 = vmul.f32 %v1699, %v1548
        %v1701 = vadd.f32 %v1697, %v1700
        %s1702 = sld [smem:[#allocation6 + $0x1d3]]
        %v1703 = vstv %s1702
        %v1704 = vmul.f32 %v1703, %v1564
        %v1705 = vadd.f32 %v1701, %v1704
        %s1706 = sld [smem:[#allocation6 + $0x1d4]]
        %v1707 = vstv %s1706
        %v1708 = vmul.f32 %v1707, %v1580
        %v1709 = vadd.f32 %v1705, %v1708
        %s1710 = sld [smem:[#allocation6 + $0x1d5]]
        %v1711 = vstv %s1710
        %v1712 = vmul.f32 %v1711, %v1596
        %v1713 = vadd.f32 %v1709, %v1712
        %s1714 = sld [smem:[#allocation6 + $0x1d6]]
        %v1715 = vstv %s1714
        %v1716 = vmul.f32 %v1715, %v1612
        %v1717 = vadd.f32 %v1713, %v1716
        %s1718 = sld [smem:[#allocation6 + $0x1d7]]
        %v1719 = vstv %s1718
        %v1720 = vmul.f32 %v1719, %v1628
        %v1721 = vadd.f32 %v1717, %v1720
        %s1722 = sld [smem:[#allocation6 + $0x1d8]]
        %v1723 = vstv %s1722
        %v1724 = vmul.f32 %v1723, %v1516
        %s1725 = sld [smem:[#allocation6 + $0x1d9]]
        %v1726 = vstv %s1725
        %v1727 = vmul.f32 %v1726, %v1532
        %v1728 = vadd.f32 %v1724, %v1727
        %s1729 = sld [smem:[#allocation6 + $0x1da]]
        %v1730 = vstv %s1729
        %v1731 = vmul.f32 %v1730, %v1548
        %v1732 = vadd.f32 %v1728, %v1731
        %s1733 = sld [smem:[#allocation6 + $0x1db]]
        %v1734 = vstv %s1733
        %v1735 = vmul.f32 %v1734, %v1564
        %v1736 = vadd.f32 %v1732, %v1735
        %s1737 = sld [smem:[#allocation6 + $0x1dc]]
        %v1738 = vstv %s1737
        %v1739 = vmul.f32 %v1738, %v1580
        %v1740 = vadd.f32 %v1736, %v1739
        %s1741 = sld [smem:[#allocation6 + $0x1dd]]
        %v1742 = vstv %s1741
        %v1743 = vmul.f32 %v1742, %v1596
        %v1744 = vadd.f32 %v1740, %v1743
        %s1745 = sld [smem:[#allocation6 + $0x1de]]
        %v1746 = vstv %s1745
        %v1747 = vmul.f32 %v1746, %v1612
        %v1748 = vadd.f32 %v1744, %v1747
        %s1749 = sld [smem:[#allocation6 + $0x1df]]
        %v1750 = vstv %s1749
        %v1751 = vmul.f32 %v1750, %v1628
        %v1752 = vadd.f32 %v1748, %v1751
        %v1753 = vsub.f32 %v1659, %v191
        %v1754 = vmul.f32 %v1753, %v1753
        %v1755 = vsub.f32 %v1690, %v193
        %v1756 = vmul.f32 %v1755, %v1755
        %v1757 = vadd.f32 %v1754, %v1756
        %v1758 = vsub.f32 %v1721, %v195
        %v1759 = vmul.f32 %v1758, %v1758
        %v1760 = vadd.f32 %v1757, %v1759
        %v1761 = vsub.f32 %v1752, %v197
        %v1762 = vmul.f32 %v1761, %v1761
        %v1763 = vadd.f32 %v1760, %v1762
        %v1764 = vmul.f32 %v1763, -1.0
        %v1765 = vmax.f32 %v1764, -100.0
        %v1766 = vmin.f32 %v1765, 100.0
        %s1767 = scalar_lea.vmem %s190, 4 [#allocation7]
        %1768 = vst [vmem:[%s1767] sm:$0x3] %v1766
        %s1769 = sld [smem:[#allocation6 + $0x60]]
        %v1770 = vstv %s1769
        %v1771 = vmul.f32 %v1770, %v191
        %s1772 = sld [smem:[#allocation6 + $0x61]]
        %v1773 = vstv %s1772
        %v1774 = vmul.f32 %v1773, %v193
        %v1775 = vadd.f32 %v1771, %v1774
        %s1776 = sld [smem:[#allocation6 + $0x62]]
        %v1777 = vstv %s1776
        %v1778 = vmul.f32 %v1777, %v195
        %v1779 = vadd.f32 %v1775, %v1778
        %s1780 = sld [smem:[#allocation6 + $0x63]]
        %v1781 = vstv %s1780
        %v1782 = vmul.f32 %v1781, %v197
        %v1783 = vadd.f32 %v1779, %v1782
        %v1784 = vtanh.pop %v1783
        %s1785 = sld [smem:[#allocation6 + $0x64]]
        %v1786 = vstv %s1785
        %v1787 = vmul.f32 %v1786, %v191
        %s1788 = sld [smem:[#allocation6 + $0x65]]
        %v1789 = vstv %s1788
        %v1790 = vmul.f32 %v1789, %v193
        %v1791 = vadd.f32 %v1787, %v1790
        %s1792 = sld [smem:[#allocation6 + $0x66]]
        %v1793 = vstv %s1792
        %v1794 = vmul.f32 %v1793, %v195
        %v1795 = vadd.f32 %v1791, %v1794
        %s1796 = sld [smem:[#allocation6 + $0x67]]
        %v1797 = vstv %s1796
        %v1798 = vmul.f32 %v1797, %v197
        %v1799 = vadd.f32 %v1795, %v1798
        %v1800 = vtanh.pop %v1799
        %s1801 = sld [smem:[#allocation6 + $0x68]]
        %v1802 = vstv %s1801
        %v1803 = vmul.f32 %v1802, %v191
        %s1804 = sld [smem:[#allocation6 + $0x69]]
        %v1805 = vstv %s1804
        %v1806 = vmul.f32 %v1805, %v193
        %v1807 = vadd.f32 %v1803, %v1806
        %s1808 = sld [smem:[#allocation6 + $0x6a]]
        %v1809 = vstv %s1808
        %v1810 = vmul.f32 %v1809, %v195
        %v1811 = vadd.f32 %v1807, %v1810
        %s1812 = sld [smem:[#allocation6 + $0x6b]]
        %v1813 = vstv %s1812
        %v1814 = vmul.f32 %v1813, %v197
        %v1815 = vadd.f32 %v1811, %v1814
        %v1816 = vtanh.pop %v1815
        %s1817 = sld [smem:[#allocation6 + $0x6c]]
        %v1818 = vstv %s1817
        %v1819 = vmul.f32 %v1818, %v191
        %s1820 = sld [smem:[#allocation6 + $0x6d]]
        %v1821 = vstv %s1820
        %v1822 = vmul.f32 %v1821, %v193
        %v1823 = vadd.f32 %v1819, %v1822
        %s1824 = sld [smem:[#allocation6 + $0x6e]]
        %v1825 = vstv %s1824
        %v1826 = vmul.f32 %v1825, %v195
        %v1827 = vadd.f32 %v1823, %v1826
        %s1828 = sld [smem:[#allocation6 + $0x6f]]
        %v1829 = vstv %s1828
        %v1830 = vmul.f32 %v1829, %v197
        %v1831 = vadd.f32 %v1827, %v1830
        %v1832 = vtanh.pop %v1831
        %s1833 = sld [smem:[#allocation6 + $0x70]]
        %v1834 = vstv %s1833
        %v1835 = vmul.f32 %v1834, %v191
        %s1836 = sld [smem:[#allocation6 + $0x71]]
        %v1837 = vstv %s1836
        %v1838 = vmul.f32 %v1837, %v193
        %v1839 = vadd.f32 %v1835, %v1838
        %s1840 = sld [smem:[#allocation6 + $0x72]]
        %v1841 = vstv %s1840
        %v1842 = vmul.f32 %v1841, %v195
        %v1843 = vadd.f32 %v1839, %v1842
        %s1844 = sld [smem:[#allocation6 + $0x73]]
        %v1845 = vstv %s1844
        %v1846 = vmul.f32 %v1845, %v197
        %v1847 = vadd.f32 %v1843, %v1846
        %v1848 = vtanh.pop %v1847
        %s1849 = sld [smem:[#allocation6 + $0x74]]
        %v1850 = vstv %s1849
        %v1851 = vmul.f32 %v1850, %v191
        %s1852 = sld [smem:[#allocation6 + $0x75]]
        %v1853 = vstv %s1852
        %v1854 = vmul.f32 %v1853, %v193
        %v1855 = vadd.f32 %v1851, %v1854
        %s1856 = sld [smem:[#allocation6 + $0x76]]
        %v1857 = vstv %s1856
        %v1858 = vmul.f32 %v1857, %v195
        %v1859 = vadd.f32 %v1855, %v1858
        %s1860 = sld [smem:[#allocation6 + $0x77]]
        %v1861 = vstv %s1860
        %v1862 = vmul.f32 %v1861, %v197
        %v1863 = vadd.f32 %v1859, %v1862
        %v1864 = vtanh.pop %v1863
        %s1865 = sld [smem:[#allocation6 + $0x78]]
        %v1866 = vstv %s1865
        %v1867 = vmul.f32 %v1866, %v191
        %s1868 = sld [smem:[#allocation6 + $0x79]]
        %v1869 = vstv %s1868
        %v1870 = vmul.f32 %v1869, %v193
        %v1871 = vadd.f32 %v1867, %v1870
        %s1872 = sld [smem:[#allocation6 + $0x7a]]
        %v1873 = vstv %s1872
        %v1874 = vmul.f32 %v1873, %v195
        %v1875 = vadd.f32 %v1871, %v1874
        %s1876 = sld [smem:[#allocation6 + $0x7b]]
        %v1877 = vstv %s1876
        %v1878 = vmul.f32 %v1877, %v197
        %v1879 = vadd.f32 %v1875, %v1878
        %v1880 = vtanh.pop %v1879
        %s1881 = sld [smem:[#allocation6 + $0x7c]]
        %v1882 = vstv %s1881
        %v1883 = vmul.f32 %v1882, %v191
        %s1884 = sld [smem:[#allocation6 + $0x7d]]
        %v1885 = vstv %s1884
        %v1886 = vmul.f32 %v1885, %v193
        %v1887 = vadd.f32 %v1883, %v1886
        %s1888 = sld [smem:[#allocation6 + $0x7e]]
        %v1889 = vstv %s1888
        %v1890 = vmul.f32 %v1889, %v195
        %v1891 = vadd.f32 %v1887, %v1890
        %s1892 = sld [smem:[#allocation6 + $0x7f]]
        %v1893 = vstv %s1892
        %v1894 = vmul.f32 %v1893, %v197
        %v1895 = vadd.f32 %v1891, %v1894
        %v1896 = vtanh.pop %v1895
        %s1897 = sld [smem:[#allocation6 + $0xe0]]
        %v1898 = vstv %s1897
        %v1899 = vmul.f32 %v1898, %v1784
        %s1900 = sld [smem:[#allocation6 + $0xe1]]
        %v1901 = vstv %s1900
        %v1902 = vmul.f32 %v1901, %v1800
        %v1903 = vadd.f32 %v1899, %v1902
        %s1904 = sld [smem:[#allocation6 + $0xe2]]
        %v1905 = vstv %s1904
        %v1906 = vmul.f32 %v1905, %v1816
        %v1907 = vadd.f32 %v1903, %v1906
        %s1908 = sld [smem:[#allocation6 + $0xe3]]
        %v1909 = vstv %s1908
        %v1910 = vmul.f32 %v1909, %v1832
        %v1911 = vadd.f32 %v1907, %v1910
        %s1912 = sld [smem:[#allocation6 + $0xe4]]
        %v1913 = vstv %s1912
        %v1914 = vmul.f32 %v1913, %v1848
        %v1915 = vadd.f32 %v1911, %v1914
        %s1916 = sld [smem:[#allocation6 + $0xe5]]
        %v1917 = vstv %s1916
        %v1918 = vmul.f32 %v1917, %v1864
        %v1919 = vadd.f32 %v1915, %v1918
        %s1920 = sld [smem:[#allocation6 + $0xe6]]
        %v1921 = vstv %s1920
        %v1922 = vmul.f32 %v1921, %v1880
        %v1923 = vadd.f32 %v1919, %v1922
        %s1924 = sld [smem:[#allocation6 + $0xe7]]
        %v1925 = vstv %s1924
        %v1926 = vmul.f32 %v1925, %v1896
        %v1927 = vadd.f32 %v1923, %v1926
        %v1928 = vtanh.pop %v1927
        %s1929 = sld [smem:[#allocation6 + $0xe8]]
        %v1930 = vstv %s1929
        %v1931 = vmul.f32 %v1930, %v1784
        %s1932 = sld [smem:[#allocation6 + $0xe9]]
        %v1933 = vstv %s1932
        %v1934 = vmul.f32 %v1933, %v1800
        %v1935 = vadd.f32 %v1931, %v1934
        %s1936 = sld [smem:[#allocation6 + $0xea]]
        %v1937 = vstv %s1936
        %v1938 = vmul.f32 %v1937, %v1816
        %v1939 = vadd.f32 %v1935, %v1938
        %s1940 = sld [smem:[#allocation6 + $0xeb]]
        %v1941 = vstv %s1940
        %v1942 = vmul.f32 %v1941, %v1832
        %v1943 = vadd.f32 %v1939, %v1942
        %s1944 = sld [smem:[#allocation6 + $0xec]]
        %v1945 = vstv %s1944
        %v1946 = vmul.f32 %v1945, %v1848
        %v1947 = vadd.f32 %v1943, %v1946
        %s1948 = sld [smem:[#allocation6 + $0xed]]
        %v1949 = vstv %s1948
        %v1950 = vmul.f32 %v1949, %v1864
        %v1951 = vadd.f32 %v1947, %v1950
        %s1952 = sld [smem:[#allocation6 + $0xee]]
        %v1953 = vstv %s1952
        %v1954 = vmul.f32 %v1953, %v1880
        %v1955 = vadd.f32 %v1951, %v1954
        %s1956 = sld [smem:[#allocation6 + $0xef]]
        %v1957 = vstv %s1956
        %v1958 = vmul.f32 %v1957, %v1896
        %v1959 = vadd.f32 %v1955, %v1958
        %v1960 = vtanh.pop %v1959
        %s1961 = sld [smem:[#allocation6 + $0xf0]]
        %v1962 = vstv %s1961
        %v1963 = vmul.f32 %v1962, %v1784
        %s1964 = sld [smem:[#allocation6 + $0xf1]]
        %v1965 = vstv %s1964
        %v1966 = vmul.f32 %v1965, %v1800
        %v1967 = vadd.f32 %v1963, %v1966
        %s1968 = sld [smem:[#allocation6 + $0xf2]]
        %v1969 = vstv %s1968
        %v1970 = vmul.f32 %v1969, %v1816
        %v1971 = vadd.f32 %v1967, %v1970
        %s1972 = sld [smem:[#allocation6 + $0xf3]]
        %v1973 = vstv %s1972
        %v1974 = vmul.f32 %v1973, %v1832
        %v1975 = vadd.f32 %v1971, %v1974
        %s1976 = sld [smem:[#allocation6 + $0xf4]]
        %v1977 = vstv %s1976
        %v1978 = vmul.f32 %v1977, %v1848
        %v1979 = vadd.f32 %v1975, %v1978
        %s1980 = sld [smem:[#allocation6 + $0xf5]]
        %v1981 = vstv %s1980
        %v1982 = vmul.f32 %v1981, %v1864
        %v1983 = vadd.f32 %v1979, %v1982
        %s1984 = sld [smem:[#allocation6 + $0xf6]]
        %v1985 = vstv %s1984
        %v1986 = vmul.f32 %v1985, %v1880
        %v1987 = vadd.f32 %v1983, %v1986
        %s1988 = sld [smem:[#allocation6 + $0xf7]]
        %v1989 = vstv %s1988
        %v1990 = vmul.f32 %v1989, %v1896
        %v1991 = vadd.f32 %v1987, %v1990
        %v1992 = vtanh.pop %v1991
        %s1993 = sld [smem:[#allocation6 + $0xf8]]
        %v1994 = vstv %s1993
        %v1995 = vmul.f32 %v1994, %v1784
        %s1996 = sld [smem:[#allocation6 + $0xf9]]
        %v1997 = vstv %s1996
        %v1998 = vmul.f32 %v1997, %v1800
        %v1999 = vadd.f32 %v1995, %v1998
        %s2000 = sld [smem:[#allocation6 + $0xfa]]
        %v2001 = vstv %s2000
        %v2002 = vmul.f32 %v2001, %v1816
        %v2003 = vadd.f32 %v1999, %v2002
        %s2004 = sld [smem:[#allocation6 + $0xfb]]
        %v2005 = vstv %s2004
        %v2006 = vmul.f32 %v2005, %v1832
        %v2007 = vadd.f32 %v2003, %v2006
        %s2008 = sld [smem:[#allocation6 + $0xfc]]
        %v2009 = vstv %s2008
        %v2010 = vmul.f32 %v2009, %v1848
        %v2011 = vadd.f32 %v2007, %v2010
        %s2012 = sld [smem:[#allocation6 + $0xfd]]
        %v2013 = vstv %s2012
        %v2014 = vmul.f32 %v2013, %v1864
        %v2015 = vadd.f32 %v2011, %v2014
        %s2016 = sld [smem:[#allocation6 + $0xfe]]
        %v2017 = vstv %s2016
        %v2018 = vmul.f32 %v2017, %v1880
        %v2019 = vadd.f32 %v2015, %v2018
        %s2020 = sld [smem:[#allocation6 + $0xff]]
        %v2021 = vstv %s2020
        %v2022 = vmul.f32 %v2021, %v1896
        %v2023 = vadd.f32 %v2019, %v2022
        %v2024 = vtanh.pop %v2023
        %s2025 = sld [smem:[#allocation6 + $0x160]]
        %v2026 = vstv %s2025
        %v2027 = vmul.f32 %v2026, %v1928
        %s2028 = sld [smem:[#allocation6 + $0x161]]
        %v2029 = vstv %s2028
        %v2030 = vmul.f32 %v2029, %v1960
        %v2031 = vadd.f32 %v2027, %v2030
        %s2032 = sld [smem:[#allocation6 + $0x162]]
        %v2033 = vstv %s2032
        %v2034 = vmul.f32 %v2033, %v1992
        %v2035 = vadd.f32 %v2031, %v2034
        %s2036 = sld [smem:[#allocation6 + $0x163]]
        %v2037 = vstv %s2036
        %v2038 = vmul.f32 %v2037, %v2024
        %v2039 = vadd.f32 %v2035, %v2038
        %v2040 = vtanh.pop %v2039
        %s2041 = sld [smem:[#allocation6 + $0x164]]
        %v2042 = vstv %s2041
        %v2043 = vmul.f32 %v2042, %v1928
        %s2044 = sld [smem:[#allocation6 + $0x165]]
        %v2045 = vstv %s2044
        %v2046 = vmul.f32 %v2045, %v1960
        %v2047 = vadd.f32 %v2043, %v2046
        %s2048 = sld [smem:[#allocation6 + $0x166]]
        %v2049 = vstv %s2048
        %v2050 = vmul.f32 %v2049, %v1992
        %v2051 = vadd.f32 %v2047, %v2050
        %s2052 = sld [smem:[#allocation6 + $0x167]]
        %v2053 = vstv %s2052
        %v2054 = vmul.f32 %v2053, %v2024
        %v2055 = vadd.f32 %v2051, %v2054
        %v2056 = vtanh.pop %v2055
        %s2057 = sld [smem:[#allocation6 + $0x168]]
        %v2058 = vstv %s2057
        %v2059 = vmul.f32 %v2058, %v1928
        %s2060 = sld [smem:[#allocation6 + $0x169]]
        %v2061 = vstv %s2060
        %v2062 = vmul.f32 %v2061, %v1960
        %v2063 = vadd.f32 %v2059, %v2062
        %s2064 = sld [smem:[#allocation6 + $0x16a]]
        %v2065 = vstv %s2064
        %v2066 = vmul.f32 %v2065, %v1992
        %v2067 = vadd.f32 %v2063, %v2066
        %s2068 = sld [smem:[#allocation6 + $0x16b]]
        %v2069 = vstv %s2068
        %v2070 = vmul.f32 %v2069, %v2024
        %v2071 = vadd.f32 %v2067, %v2070
        %v2072 = vtanh.pop %v2071
        %s2073 = sld [smem:[#allocation6 + $0x16c]]
        %v2074 = vstv %s2073
        %v2075 = vmul.f32 %v2074, %v1928
        %s2076 = sld [smem:[#allocation6 + $0x16d]]
        %v2077 = vstv %s2076
        %v2078 = vmul.f32 %v2077, %v1960
        %v2079 = vadd.f32 %v2075, %v2078
        %s2080 = sld [smem:[#allocation6 + $0x16e]]
        %v2081 = vstv %s2080
        %v2082 = vmul.f32 %v2081, %v1992
        %v2083 = vadd.f32 %v2079, %v2082
        %s2084 = sld [smem:[#allocation6 + $0x16f]]
        %v2085 = vstv %s2084
        %v2086 = vmul.f32 %v2085, %v2024
        %v2087 = vadd.f32 %v2083, %v2086
        %v2088 = vtanh.pop %v2087
        %s2089 = sld [smem:[#allocation6 + $0x170]]
        %v2090 = vstv %s2089
        %v2091 = vmul.f32 %v2090, %v1928
        %s2092 = sld [smem:[#allocation6 + $0x171]]
        %v2093 = vstv %s2092
        %v2094 = vmul.f32 %v2093, %v1960
        %v2095 = vadd.f32 %v2091, %v2094
        %s2096 = sld [smem:[#allocation6 + $0x172]]
        %v2097 = vstv %s2096
        %v2098 = vmul.f32 %v2097, %v1992
        %v2099 = vadd.f32 %v2095, %v2098
        %s2100 = sld [smem:[#allocation6 + $0x173]]
        %v2101 = vstv %s2100
        %v2102 = vmul.f32 %v2101, %v2024
        %v2103 = vadd.f32 %v2099, %v2102
        %v2104 = vtanh.pop %v2103
        %s2105 = sld [smem:[#allocation6 + $0x174]]
        %v2106 = vstv %s2105
        %v2107 = vmul.f32 %v2106, %v1928
        %s2108 = sld [smem:[#allocation6 + $0x175]]
        %v2109 = vstv %s2108
        %v2110 = vmul.f32 %v2109, %v1960
        %v2111 = vadd.f32 %v2107, %v2110
        %s2112 = sld [smem:[#allocation6 + $0x176]]
        %v2113 = vstv %s2112
        %v2114 = vmul.f32 %v2113, %v1992
        %v2115 = vadd.f32 %v2111, %v2114
        %s2116 = sld [smem:[#allocation6 + $0x177]]
        %v2117 = vstv %s2116
        %v2118 = vmul.f32 %v2117, %v2024
        %v2119 = vadd.f32 %v2115, %v2118
        %v2120 = vtanh.pop %v2119
        %s2121 = sld [smem:[#allocation6 + $0x178]]
        %v2122 = vstv %s2121
        %v2123 = vmul.f32 %v2122, %v1928
        %s2124 = sld [smem:[#allocation6 + $0x179]]
        %v2125 = vstv %s2124
        %v2126 = vmul.f32 %v2125, %v1960
        %v2127 = vadd.f32 %v2123, %v2126
        %s2128 = sld [smem:[#allocation6 + $0x17a]]
        %v2129 = vstv %s2128
        %v2130 = vmul.f32 %v2129, %v1992
        %v2131 = vadd.f32 %v2127, %v2130
        %s2132 = sld [smem:[#allocation6 + $0x17b]]
        %v2133 = vstv %s2132
        %v2134 = vmul.f32 %v2133, %v2024
        %v2135 = vadd.f32 %v2131, %v2134
        %v2136 = vtanh.pop %v2135
        %s2137 = sld [smem:[#allocation6 + $0x17c]]
        %v2138 = vstv %s2137
        %v2139 = vmul.f32 %v2138, %v1928
        %s2140 = sld [smem:[#allocation6 + $0x17d]]
        %v2141 = vstv %s2140
        %v2142 = vmul.f32 %v2141, %v1960
        %v2143 = vadd.f32 %v2139, %v2142
        %s2144 = sld [smem:[#allocation6 + $0x17e]]
        %v2145 = vstv %s2144
        %v2146 = vmul.f32 %v2145, %v1992
        %v2147 = vadd.f32 %v2143, %v2146
        %s2148 = sld [smem:[#allocation6 + $0x17f]]
        %v2149 = vstv %s2148
        %v2150 = vmul.f32 %v2149, %v2024
        %v2151 = vadd.f32 %v2147, %v2150
        %v2152 = vtanh.pop %v2151
        %s2153 = sld [smem:[#allocation6 + $0x1e0]]
        %v2154 = vstv %s2153
        %v2155 = vmul.f32 %v2154, %v2040
        %s2156 = sld [smem:[#allocation6 + $0x1e1]]
        %v2157 = vstv %s2156
        %v2158 = vmul.f32 %v2157, %v2056
        %v2159 = vadd.f32 %v2155, %v2158
        %s2160 = sld [smem:[#allocation6 + $0x1e2]]
        %v2161 = vstv %s2160
        %v2162 = vmul.f32 %v2161, %v2072
        %v2163 = vadd.f32 %v2159, %v2162
        %s2164 = sld [smem:[#allocation6 + $0x1e3]]
        %v2165 = vstv %s2164
        %v2166 = vmul.f32 %v2165, %v2088
        %v2167 = vadd.f32 %v2163, %v2166
        %s2168 = sld [smem:[#allocation6 + $0x1e4]]
        %v2169 = vstv %s2168
        %v2170 = vmul.f32 %v2169, %v2104
        %v2171 = vadd.f32 %v2167, %v2170
        %s2172 = sld [smem:[#allocation6 + $0x1e5]]
        %v2173 = vstv %s2172
        %v2174 = vmul.f32 %v2173, %v2120
        %v2175 = vadd.f32 %v2171, %v2174
        %s2176 = sld [smem:[#allocation6 + $0x1e6]]
        %v2177 = vstv %s2176
        %v2178 = vmul.f32 %v2177, %v2136
        %v2179 = vadd.f32 %v2175, %v2178
        %s2180 = sld [smem:[#allocation6 + $0x1e7]]
        %v2181 = vstv %s2180
        %v2182 = vmul.f32 %v2181, %v2152
        %v2183 = vadd.f32 %v2179, %v2182
        %s2184 = sld [smem:[#allocation6 + $0x1e8]]
        %v2185 = vstv %s2184
        %v2186 = vmul.f32 %v2185, %v2040
        %s2187 = sld [smem:[#allocation6 + $0x1e9]]
        %v2188 = vstv %s2187
        %v2189 = vmul.f32 %v2188, %v2056
        %v2190 = vadd.f32 %v2186, %v2189
        %s2191 = sld [smem:[#allocation6 + $0x1ea]]
        %v2192 = vstv %s2191
        %v2193 = vmul.f32 %v2192, %v2072
        %v2194 = vadd.f32 %v2190, %v2193
        %s2195 = sld [smem:[#allocation6 + $0x1eb]]
        %v2196 = vstv %s2195
        %v2197 = vmul.f32 %v2196, %v2088
        %v2198 = vadd.f32 %v2194, %v2197
        %s2199 = sld [smem:[#allocation6 + $0x1ec]]
        %v2200 = vstv %s2199
        %v2201 = vmul.f32 %v2200, %v2104
        %v2202 = vadd.f32 %v2198, %v2201
        %s2203 = sld [smem:[#allocation6 + $0x1ed]]
        %v2204 = vstv %s2203
        %v2205 = vmul.f32 %v2204, %v2120
        %v2206 = vadd.f32 %v2202, %v2205
        %s2207 = sld [smem:[#allocation6 + $0x1ee]]
        %v2208 = vstv %s2207
        %v2209 = vmul.f32 %v2208, %v2136
        %v2210 = vadd.f32 %v2206, %v2209
        %s2211 = sld [smem:[#allocation6 + $0x1ef]]
        %v2212 = vstv %s2211
        %v2213 = vmul.f32 %v2212, %v2152
        %v2214 = vadd.f32 %v2210, %v2213
        %s2215 = sld [smem:[#allocation6 + $0x1f0]]
        %v2216 = vstv %s2215
        %v2217 = vmul.f32 %v2216, %v2040
        %s2218 = sld [smem:[#allocation6 + $0x1f1]]
        %v2219 = vstv %s2218
        %v2220 = vmul.f32 %v2219, %v2056
        %v2221 = vadd.f32 %v2217, %v2220
        %s2222 = sld [smem:[#allocation6 + $0x1f2]]
        %v2223 = vstv %s2222
        %v2224 = vmul.f32 %v2223, %v2072
        %v2225 = vadd.f32 %v2221, %v2224
        %s2226 = sld [smem:[#allocation6 + $0x1f3]]
        %v2227 = vstv %s2226
        %v2228 = vmul.f32 %v2227, %v2088
        %v2229 = vadd.f32 %v2225, %v2228
        %s2230 = sld [smem:[#allocation6 + $0x1f4]]
        %v2231 = vstv %s2230
        %v2232 = vmul.f32 %v2231, %v2104
        %v2233 = vadd.f32 %v2229, %v2232
        %s2234 = sld [smem:[#allocation6 + $0x1f5]]
        %v2235 = vstv %s2234
        %v2236 = vmul.f32 %v2235, %v2120
        %v2237 = vadd.f32 %v2233, %v2236
        %s2238 = sld [smem:[#allocation6 + $0x1f6]]
        %v2239 = vstv %s2238
        %v2240 = vmul.f32 %v2239, %v2136
        %v2241 = vadd.f32 %v2237, %v2240
        %s2242 = sld [smem:[#allocation6 + $0x1f7]]
        %v2243 = vstv %s2242
        %v2244 = vmul.f32 %v2243, %v2152
        %v2245 = vadd.f32 %v2241, %v2244
        %s2246 = sld [smem:[#allocation6 + $0x1f8]]
        %v2247 = vstv %s2246
        %v2248 = vmul.f32 %v2247, %v2040
        %s2249 = sld [smem:[#allocation6 + $0x1f9]]
        %v2250 = vstv %s2249
        %v2251 = vmul.f32 %v2250, %v2056
        %v2252 = vadd.f32 %v2248, %v2251
        %s2253 = sld [smem:[#allocation6 + $0x1fa]]
        %v2254 = vstv %s2253
        %v2255 = vmul.f32 %v2254, %v2072
        %v2256 = vadd.f32 %v2252, %v2255
        %s2257 = sld [smem:[#allocation6 + $0x1fb]]
        %v2258 = vstv %s2257
        %v2259 = vmul.f32 %v2258, %v2088
        %v2260 = vadd.f32 %v2256, %v2259
        %s2261 = sld [smem:[#allocation6 + $0x1fc]]
        %v2262 = vstv %s2261
        %v2263 = vmul.f32 %v2262, %v2104
        %v2264 = vadd.f32 %v2260, %v2263
        %s2265 = sld [smem:[#allocation6 + $0x1fd]]
        %v2266 = vstv %s2265
        %v2267 = vmul.f32 %v2266, %v2120
        %v2268 = vadd.f32 %v2264, %v2267
        %s2269 = sld [smem:[#allocation6 + $0x1fe]]
        %v2270 = vstv %s2269
        %v2271 = vmul.f32 %v2270, %v2136
        %v2272 = vadd.f32 %v2268, %v2271
        %s2273 = sld [smem:[#allocation6 + $0x1ff]]
        %v2274 = vstv %s2273
        %v2275 = vmul.f32 %v2274, %v2152
        %v2276 = vadd.f32 %v2272, %v2275
        %v2277 = vsub.f32 %v2183, %v191
        %v2278 = vmul.f32 %v2277, %v2277
        %v2279 = vsub.f32 %v2214, %v193
        %v2280 = vmul.f32 %v2279, %v2279
        %v2281 = vadd.f32 %v2278, %v2280
        %v2282 = vsub.f32 %v2245, %v195
        %v2283 = vmul.f32 %v2282, %v2282
        %v2284 = vadd.f32 %v2281, %v2283
        %v2285 = vsub.f32 %v2276, %v197
        %v2286 = vmul.f32 %v2285, %v2285
        %v2287 = vadd.f32 %v2284, %v2286
        %v2288 = vmul.f32 %v2287, -1.0
        %v2289 = vmax.f32 %v2288, -100.0
        %v2290 = vmin.f32 %v2289, 100.0
        %s2291 = scalar_lea.vmem %s190, 6 [#allocation7]
        %2292 = vst [vmem:[%s2291] sm:$0x3] %v2290
        %s2293 = sand.u32 %s91, 1
        %s2294 = scalar_lea.sflag [#allocation4], %s2293
        %s2295 = sand.u32 %s91, 1
        %s2296 = smul.addr %s2295, 8
        %s2297 = scalar_lea.vmem [#allocation7], %s2296
        // Predicated region
        $region37: #{tpu_custom_call.1} parent=27 // pred_check
          %p2298 = pneg %p101
        $region38: #{tpu_custom_call.1} parent=27 // pred_check_branch
          %2300 = sbr.rel (%p2298) target = $region40
        $region39: #{tpu_custom_call.1} parent=27 // pred_region
          %s2302 = ssub.s32 128, 128
          %2303 = vsyncadd %s2294, %s2302
          %s2304 = smul.addr %s24, 4
          %s2305 = sadd.s32 %s25, %s2304
          %s2306 = smul.addr %s2305, 32
          %s2307 = scalar_lea.hbm %s2, %s2306
          %s2308 = sshll.u32 %s2297, 4
          %s2309 = int_to_ptr.vmem [resolvable:$true] %s2308
          %2314 = dma.vmem_to_hbm [thread:$0]  %s2309, 128, %s2307, %s2294, 32, 32, 2
        $region40: #{tpu_custom_call.1} parent=27 // pred_fallthru
          _
      $region28: #{tpu_custom_call.1} parent=5 // pred_fallthru
        _
      %p2315 = scmp.le.s32.totalorder 2, %s15
      // Predicated region
      $region41: #{tpu_custom_call.1} parent=5 // pred_check
        %p2316 = pneg %p2315
      $region42: #{tpu_custom_call.1} parent=5 // pred_check_branch
        %2318 = sbr.rel (%p2316) target = $region44
      $region43: #{tpu_custom_call.1} parent=5 // pred_region
        %s2319 = ssub.s32 %s15, 2
        // Predicated region
        $region45: #{tpu_custom_call.1} parent=43 // pred_check
          %p2320 = pneg %p107
        $region46: #{tpu_custom_call.1} parent=43 // pred_check_branch
          %2322 = sbr.rel (%p2320) target = $region48
        $region47: #{tpu_custom_call.1} parent=43 // pred_region
          %s2323 = sand.u32 %s92, 1
          %s2324 = scalar_lea.sflag [#allocation4], %s2323
          %s2325 = sand.u32 %s92, 1
          %s2326 = smul.addr %s2325, 8
          %s2327 = scalar_lea.vmem [#allocation7], %s2326
          %2328 = dma.done %s2324, 128
        $region48: #{tpu_custom_call.1} parent=43 // pred_fallthru
          _
      $region44: #{tpu_custom_call.1} parent=5 // pred_fallthru
        _
    $region6: #{tpu_custom_call.1} parent=1 // loop_footer
      %s19 = sadd.s32 1, %s15
    $region7: #{tpu_custom_call.1} parent=1 // loop_footer_branch
      %14 = sbr.rel target = $region3
    $region8: #{tpu_custom_call.1} parent=1 // loop_exit
      _
    %2329 = vsyncpa [#allocation3], 1
    %s2330 = scalar_lea.sflag [#allocation3], 1
    %2331 = vsyncpa %s2330, 1
    %2332 = vsyncpa [#allocation4], 1
    %s2333 = scalar_lea.sflag [#allocation4], 1
    %2334 = vsyncpa %s2333, 1
    %2335 = vsyncpa [#allocation5], 1
    %s2336 = scalar_lea.sflag [#allocation5], 1
    %2337 = vsyncpa %s2336, 1

</llo_original>
